<compile_context>
chip_gen: v6e
topology: v6e:2x2x1
jax: 0.10.0
libtpu: 0.0.40
codegen_flags: <defaults>
</compile_context>

<pallas_src>
import functools
import math

import jax
import jax.numpy as jnp
from jax.experimental import pallas as pl
from jax.experimental.pallas import tpu as pltpu


# ----------------------------------------------------------------------------
# Helpers
# ----------------------------------------------------------------------------
def _round_up(x, m):
    return ((x + m - 1) // m) * m


def _vmem_capacity_bytes():
    """Physical VMEM of the local TPU, with a conservative fallback."""
    try:
        info = pltpu.get_tpu_info()
        for attr in ("vmem_capacity_bytes", "vmem_bytes", "vmem_size_bytes"):
            val = getattr(info, attr, None)
            if val:
                return int(val)
    except Exception:
        pass
    return 128 * 1024 * 1024


def _pick_row_tile(h):
    slack = max(1, (3 * h + 19) // 20)          # allow ~15% row-padding waste
    for tr in (32, 24, 16, 8):
        if _round_up(h, tr) - h <= slack:
            return tr
    return 8


def _pick_k_tile(cin_pad):
    for tk in (512, 256, 128):
        if cin_pad % tk == 0:
            return tk
    return 128                                   # unreachable (cin_pad % 128 == 0)


# ----------------------------------------------------------------------------
# Pallas kernel: summed multi-branch dilated 3x3 convolution
# ----------------------------------------------------------------------------
def _aspp_sum_kernel(x_ref, w_ref, b_ref, o_ref, acc_ref, *,
                     tap_shifts, groups, tk, cp, row_tile, w_pad, w_in,
                     pad_top, h_out, w_out, w_resident):
    """One (image, K-tile, row-tile) grid step.

    x_ref : (1, row_tile, w_pad, tk)          bf16 halo-free, unshifted rows
    w_ref : (cin_pad | tk, n_taps*cp)         bf16 tap-concatenated weights
    b_ref : (1, cp)                           f32  summed branch biases
    o_ref : (1, h_out, w_out, cp)             bf16 output (same block all k,r)
    acc   : (pad_top+h_out+pad_bot, w_out, cp) f32 accumulator scratch
    """
    k = pl.program_id(1)
    r = pl.program_id(2)

    @pl.when((k == 0) & (r == 0))
    def _init():
        acc_ref[...] = jnp.zeros_like(acc_ref)

    # Unshifted LHS (row_tile*w_pad, tk); w_pad % 8 == 0 keeps the reshape a
    # pure re-tiling (no relayout).
    lhs = x_ref[0].reshape(row_tile * w_pad, tk)
    row0 = r * row_tile

    koff = pl.multiple_of(k * tk, tk) if w_resident else 0

    # One wide matmul per branch (N >= 1024 fills the 256-wide MXU on
    # v6e/v7x); the 3x3 shifts are per-tap ref adds at static column offsets
    # and a dynamic (row-tile) row offset into the padded accumulator.
    for (t0, t1) in groups:
        wg = w_ref[pl.ds(koff, tk), t0 * cp:t1 * cp]
        pg = jnp.dot(lhs, wg, preferred_element_type=jnp.float32)
        pg = pg.reshape(row_tile, w_pad, (t1 - t0) * cp)
        for j in range(t0, t1):
            s, t = tap_shifts[j]
            src_c0 = max(0, -t)
            src_c1 = min(w_in, w_out - t)
            if src_c1 <= src_c0:
                continue                          # tap never hits a valid column
            clen = src_c1 - src_c0
            jj = j - t0
            acc_ref[pl.ds(row0 + (s + pad_top), row_tile),
                    src_c0 + t:src_c0 + t + clen, :] += (
                pg[:, src_c0:src_c1, jj * cp:(jj + 1) * cp])

    @pl.when((k == pl.num_programs(1) - 1) & (r == pl.num_programs(2) - 1))
    def _finalize():
        out = acc_ref[pad_top:pad_top + h_out, 0:w_out, :] + b_ref[...]
        o_ref[0] = out.astype(o_ref.dtype)


# ----------------------------------------------------------------------------
# Wrapper
# ----------------------------------------------------------------------------
def classifier_module_forward(params, x_nchw, dilation_series, padding_series,
                              *, row_tile=None, k_tile=None,
                              force_streamed_weights=False):
    weights, biases = params["weights"], params["biases"]
    nb = len(weights)
    assert nb == len(dilation_series) == len(padding_series) == len(biases)
    n, cin, h, w = x_nchw.shape
    num_classes = weights[0].shape[0]

    dils = [int(d) for d in dilation_series]
    pads = [int(p) for p in padding_series]

    # All branch outputs must share a spatial shape for the sum to be defined
    # (true for the standard padding == dilation usage).
    deltas = {p - d for d, p in zip(dils, pads)}
    assert len(deltas) == 1, "branch outputs must share a spatial shape"
    delta = deltas.pop()
    h_out, w_out = h + 2 * delta, w + 2 * delta
    assert h_out > 0 and w_out > 0

    # ---- tap packing (one-off, wrapper-side) --------------------------------
    # Input pixel (i, j) of branch (dilation d, padding p), tap (ky, kx),
    # contributes to output (i + p - ky*d, j + p - kx*d).  The centre tap
    # (ky == kx == 1) has the same shift (delta, delta) for every branch, so
    # its weights are pre-summed across branches (36 -> 33 tap columns).
    tap_mats, tap_shifts, groups = [], [], []
    for b in range(nb):
        d, p = dils[b], pads[b]
        g0 = len(tap_mats)
        for ky in range(3):
            for kx in range(3):
                centre = (ky == 1 and kx == 1)
                if centre and b > 0:
                    continue
                if centre:
                    mat = sum(jnp.transpose(weights[bb][:, :, 1, 1], (1, 0))
                              for bb in range(nb))
                else:
                    mat = jnp.transpose(weights[b][:, :, ky, kx], (1, 0))
                tap_mats.append(mat)
                tap_shifts.append((p - ky * d, p - kx * d))
        groups.append((g0, len(tap_mats)))
    n_taps = len(tap_mats)

    # ---- tiling --------------------------------------------------------------
    # TODO(synk): pack num_classes (<128) densely along N (e.g. 33*21 -> 768
    # columns) to remove the zero-class MXU columns; needs sub-128 lane-offset
    # extracts for the shift-adds, so kept lane-aligned (cp = 128) for now.
    cp = _round_up(num_classes, 128)
    cin_pad = _round_up(cin, 128)
    tk = k_tile if k_tile is not None else _pick_k_tile(cin_pad)
    assert tk % 128 == 0 and cin_pad % tk == 0
    nk = cin_pad // tk

    tr = row_tile if row_tile is not None else _pick_row_tile(h)
    h_pad = _round_up(h, tr)
    w_pad = _round_up(w, 8)
    nr = h_pad // tr

    s_min = min(s for s, _ in tap_shifts)
    s_max = max(s for s, _ in tap_shifts)
    pad_top = max(0, -s_min)                  # row shift-adds never need clipping
    pad_bot = max(0, h_pad + s_max - h_out)
    acc_rows = pad_top + h_out + pad_bot
    ncat = n_taps * cp

    # ---- operands ------------------------------------------------------------
    # Halo-free NHWC bf16 activations: only tile-rounding zeros, no pmax halo.
    x = jnp.transpose(x_nchw, (0, 2, 3, 1)).astype(jnp.bfloat16)
    x = jnp.pad(x, ((0, 0), (0, h_pad - h), (0, w_pad - w), (0, cin_pad - cin)))

    w_packed = jnp.concatenate(
        [jnp.pad(m, ((0, cin_pad - cin), (0, cp - num_classes)))
         for m in tap_mats], axis=1).astype(jnp.bfloat16)        # (cin_pad, ncat)

    bias = jnp.pad(sum(biases), (0, cp - num_classes))
    bias = bias.reshape(1, cp).astype(jnp.float32)

    # ---- VMEM budgeting ------------------------------------------------------
    vmem_cap = _vmem_capacity_bytes()
    vmem_limit = int(vmem_cap * 0.8)          # leave headroom for Mosaic scratch
    w_bytes = cin_pad * ncat * 2
    w_resident = (not force_streamed_weights) and (
        2 * w_bytes <= vmem_limit * 9 // 20)
    # TODO(synk): pipeline_mode=pl.Buffered(1) on the resident weight spec would
    # drop its (never re-filled) second buffer and admit residency on v7x too.

    if w_resident:
        w_spec = pl.BlockSpec((cin_pad, ncat), lambda i, k, r: (0, 0))
    else:
        w_spec = pl.BlockSpec((tk, ncat), lambda i, k, r: (k, 0))

    kernel = functools.partial(
        _aspp_sum_kernel,
        tap_shifts=tuple(tap_shifts), groups=tuple(groups),
        tk=tk, cp=cp, row_tile=tr, w_pad=w_pad, w_in=w,
        pad_top=pad_top, h_out=h_out, w_out=w_out, w_resident=w_resident)

    # TODO(synk): for batch-1 on v7x (2 TCs), a 'parallel' output-row axis with
    # halo recompute would keep both cores busy; the row axis here must stay
    # 'arbitrary' because it accumulates into the shared VMEM scratch.
    out = pl.pallas_call(
        kernel,
        out_shape=jax.ShapeDtypeStruct((n, h_out, w_out, cp), jnp.bfloat16),
        grid=(n, nk, nr),
        in_specs=[
            pl.BlockSpec((1, tr, w_pad, tk), lambda i, k, r: (i, r, 0, k)),
            w_spec,
            pl.BlockSpec((1, cp), lambda i, k, r: (0, 0)),
        ],
        out_specs=pl.BlockSpec((1, h_out, w_out, cp),
                               lambda i, k, r: (i, 0, 0, 0)),
        scratch_shapes=[pltpu.VMEM((acc_rows, w_out, cp), jnp.float32)],
        compiler_params=pltpu.CompilerParams(
            dimension_semantics=("parallel", "arbitrary", "arbitrary"),
            vmem_limit_bytes=vmem_limit),
    )(x, w_packed, bias)

    out = out[:, :, :, :num_classes].astype(jnp.float32)   # drop lane padding
    return jnp.transpose(out, (0, 3, 1, 2))                 # back to NCHW


# ----------------------------------------------------------------------------
# Parameter init (mirrors the PyTorch module: weight ~ N(0, 0.01), Conv2d
# default bias init)
# ----------------------------------------------------------------------------
def init_params(key, inplanes, num_classes, n_branches):
    keys = jax.random.split(key, 2 * n_branches)
    bound = 1.0 / math.sqrt(inplanes * 3 * 3)
    weights, biases = [], []
    for i in range(n_branches):
        weights.append(0.01 * jax.random.normal(
            keys[2 * i], (num_classes, inplanes, 3, 3), jnp.float32))
        biases.append(jax.random.uniform(
            keys[2 * i + 1], (num_classes,), jnp.float32, -bound, bound))
    return {"weights": weights, "biases": biases}


# ----------------------------------------------------------------------------
# Pure-JAX reference (for correctness check only)
# ----------------------------------------------------------------------------
def _reference(params, x_nchw, dilation_series, padding_series):
    out = None
    for wgt, b, d, p in zip(params["weights"], params["biases"],
                            dilation_series, padding_series):
        y = jax.lax.conv_general_dilated(
            x_nchw, wgt, window_strides=(1, 1),
            padding=[(p, p), (p, p)], rhs_dilation=(d, d),
            dimension_numbers=("NCHW", "OIHW", "NCHW"),
            precision=jax.lax.Precision.HIGHEST)
        y = y + b[None, :, None, None]
        out = y if out is None else out + y
    return out


# ----------------------------------------------------------------------------
if __name__ == "__main__":
    key = jax.random.PRNGKey(0)
    k_param, k_x = jax.random.split(key)

    n, cin, h, w = 2, 256, 16, 16
    num_classes = 21
    dilation_series = [2, 4, 8, 12]
    padding_series = [2, 4, 8, 12]

    params = init_params(k_param, cin, num_classes, len(dilation_series))
    x = jax.random.normal(k_x, (n, cin, h, w), jnp.float32)

    ref = _reference(params, x, dilation_series, padding_series)

    # Exercise the K-tile / row-tile accumulation paths (nk=2, nr=2), the
    # class-padding slice, and both weight-residency strategies.
    for streamed in (False, True):
        fwd = jax.jit(functools.partial(
            classifier_module_forward,
            dilation_series=dilation_series, padding_series=padding_series,
            row_tile=8, k_tile=128, force_streamed_weights=streamed))
        out = fwd(params, x)
        jax.block_until_ready(out)

        assert out.shape == (n, num_classes, h, w), out.shape
        assert bool(jnp.all(jnp.isfinite(out)))
        err = float(jnp.max(jnp.abs(out - ref)))
        assert bool(jnp.allclose(out, ref, atol=5e-2, rtol=5e-2)), (streamed, err)

    print("KERNEL_OK")
</pallas_src>

<mosaic_0001>
module attributes {stable_mosaic.version = 11 : i64} {
  func.func @_aspp_sum_kernel(%arg0: i32, %arg1: i32, %arg2: i32, %arg3: memref<1x8x16x128xbf16, #tpu.memory_space<vmem>>, %arg4: memref<256x4224xbf16, #tpu.memory_space<vmem>>, %arg5: memref<1x128xf32, #tpu.memory_space<vmem>>, %arg6: memref<1x16x16x128xbf16, #tpu.memory_space<vmem>>, %arg7: memref<40x16x128xf32, #tpu.memory_space<vmem>>) attributes {dimension_semantics = [#tpu.dimension_semantics<parallel>, #tpu.dimension_semantics<arbitrary>, #tpu.dimension_semantics<arbitrary>], iteration_bounds = array<i64: 2, 2, 2>, scalar_prefetch = 0 : i64, scratch_operands = 1 : i64, tpu.core_type = #tpu.core_type<tc>, window_params = [{transform_indices = @transform_0, window_bounds = array<i64: 1, 8, 16, 128>}, {pipeline_mode = #tpu.pipeline_mode<synchronous>, transform_indices = @transform_1, window_bounds = array<i64: 256, 4224>}, {pipeline_mode = #tpu.pipeline_mode<synchronous>, transform_indices = @transform_2, window_bounds = array<i64: 1, 128>}, {transform_indices = @transform_3, window_bounds = array<i64: 1, 16, 16, 128>}]} {
    %c0_i32 = arith.constant 0 : i32
    %0 = arith.cmpi eq, %arg1, %c0_i32 : i32
    %c0_i32_0 = arith.constant 0 : i32
    %1 = arith.cmpi eq, %arg2, %c0_i32_0 : i32
    %2 = arith.andi %0, %1 : i1
    %3 = arith.extui %2 : i1 to i32
    %c0_i32_1 = arith.constant 0 : i32
    %4 = arith.cmpi ne, %3, %c0_i32_1 : i32
    scf.if %4 {
      %cst_165 = arith.constant 0.000000e+00 : f32
      %263 = vector.broadcast %cst_165 : f32 to vector<40x16x128xf32>
      %c0_166 = arith.constant 0 : index
      %c0_167 = arith.constant 0 : index
      %c0_168 = arith.constant 0 : index
      %264 = vector.load %arg7[%c0_166, %c0_167, %c0_168] : memref<40x16x128xf32, #tpu.memory_space<vmem>>, vector<40x16x128xf32>
      tpu.vector_store %arg7[%c0_166, %c0_167, %c0_168], %263 {strides = array<i32>} : memref<40x16x128xf32, #tpu.memory_space<vmem>>, vector<40x16x128xf32>,
    } else {
    }
    %c0 = arith.constant 0 : index
    %c0_2 = arith.constant 0 : index
    %c0_3 = arith.constant 0 : index
    %c0_4 = arith.constant 0 : index
    %5 = vector.load %arg3[%c0, %c0_2, %c0_3, %c0_4] : memref<1x8x16x128xbf16, #tpu.memory_space<vmem>>, vector<1x8x16x128xbf16>
    %6 = vector.shape_cast %5 : vector<1x8x16x128xbf16> to vector<8x16x128xbf16>
    %7 = vector.shape_cast %6 : vector<8x16x128xbf16> to vector<128x128xbf16>
    %c8_i32 = arith.constant 8 : i32
    %8 = arith.muli %arg2, %c8_i32 : i32
    %c128_i32 = arith.constant 128 : i32
    %9 = arith.muli %arg1, %c128_i32 : i32
    %10 = tpu.assume_multiple %9, 128 : i32
    %11 = arith.index_cast %10 : i32 to index
    %c0_5 = arith.constant 0 : index
    %12 = vector.load %arg4[%11, %c0_5] : memref<256x4224xbf16, #tpu.memory_space<vmem>>, vector<128x1152xbf16>
    %cst = arith.constant dense<0.000000e+00> : vector<128x1152xf32>
    %13 = tpu.matmul %7, %12, %cst {dimension_numbers = #tpu.dot_dimension_numbers<[1], [0], [0], [1], [0, 0, 1, 1], [], []>} : vector<128x128xbf16>, vector<128x1152xbf16>, vector<128x1152xf32> -> vector<128x1152xf32>
    %14 = vector.shape_cast %13 : vector<128x1152xf32> to vector<8x16x1152xf32>
    %c14_i32 = arith.constant 14 : i32
    %15 = arith.addi %8, %c14_i32 : i32
    %16 = arith.index_cast %15 : i32 to index
    %c2 = arith.constant 2 : index
    %c0_6 = arith.constant 0 : index
    %17 = vector.load %arg7[%16, %c2, %c0_6] : memref<40x16x128xf32, #tpu.memory_space<vmem>>, vector<8x14x128xf32>
    %18 = vector.extract_strided_slice %14 {offsets = [0, 0, 0], sizes = [8, 14, 128], strides = [1, 1, 1]} : vector<8x16x1152xf32> to vector<8x14x128xf32>
    %19 = arith.addf %17, %18 : vector<8x14x128xf32>
    %20 = arith.index_cast %15 : i32 to index
    %c2_7 = arith.constant 2 : index
    %c0_8 = arith.constant 0 : index
    %21 = vector.load %arg7[%20, %c2_7, %c0_8] : memref<40x16x128xf32, #tpu.memory_space<vmem>>, vector<8x14x128xf32>
    tpu.vector_store %arg7[%20, %c2_7, %c0_8], %19 {strides = array<i32>} : memref<40x16x128xf32, #tpu.memory_space<vmem>>, vector<8x14x128xf32>,
    %c14_i32_9 = arith.constant 14 : i32
    %22 = arith.addi %8, %c14_i32_9 : i32
    %23 = arith.index_cast %22 : i32 to index
    %c0_10 = arith.constant 0 : index
    %c0_11 = arith.constant 0 : index
    %24 = vector.load %arg7[%23, %c0_10, %c0_11] : memref<40x16x128xf32, #tpu.memory_space<vmem>>, vector<8x16x128xf32>
    %25 = vector.extract_strided_slice %14 {offsets = [0, 0, 128], sizes = [8, 16, 128], strides = [1, 1, 1]} : vector<8x16x1152xf32> to vector<8x16x128xf32>
    %26 = arith.addf %24, %25 : vector<8x16x128xf32>
    %27 = arith.index_cast %22 : i32 to index
    %c0_12 = arith.constant 0 : index
    %c0_13 = arith.constant 0 : index
    %28 = vector.load %arg7[%27, %c0_12, %c0_13] : memref<40x16x128xf32, #tpu.memory_space<vmem>>, vector<8x16x128xf32>
    tpu.vector_store %arg7[%27, %c0_12, %c0_13], %26 {strides = array<i32>} : memref<40x16x128xf32, #tpu.memory_space<vmem>>, vector<8x16x128xf32>,
    %c14_i32_14 = arith.constant 14 : i32
    %29 = arith.addi %8, %c14_i32_14 : i32
    %30 = arith.index_cast %29 : i32 to index
    %c0_15 = arith.constant 0 : index
    %c0_16 = arith.constant 0 : index
    %31 = vector.load %arg7[%30, %c0_15, %c0_16] : memref<40x16x128xf32, #tpu.memory_space<vmem>>, vector<8x14x128xf32>
    %32 = vector.extract_strided_slice %14 {offsets = [0, 2, 256], sizes = [8, 14, 128], strides = [1, 1, 1]} : vector<8x16x1152xf32> to vector<8x14x128xf32>
    %33 = arith.addf %31, %32 : vector<8x14x128xf32>
    %34 = arith.index_cast %29 : i32 to index
    %c0_17 = arith.constant 0 : index
    %c0_18 = arith.constant 0 : index
    %35 = vector.load %arg7[%34, %c0_17, %c0_18] : memref<40x16x128xf32, #tpu.memory_space<vmem>>, vector<8x14x128xf32>
    tpu.vector_store %arg7[%34, %c0_17, %c0_18], %33 {strides = array<i32>} : memref<40x16x128xf32, #tpu.memory_space<vmem>>, vector<8x14x128xf32>,
    %c12_i32 = arith.constant 12 : i32
    %36 = arith.addi %8, %c12_i32 : i32
    %37 = arith.index_cast %36 : i32 to index
    %c2_19 = arith.constant 2 : index
    %c0_20 = arith.constant 0 : index
    %38 = vector.load %arg7[%37, %c2_19, %c0_20] : memref<40x16x128xf32, #tpu.memory_space<vmem>>, vector<8x14x128xf32>
    %39 = vector.extract_strided_slice %14 {offsets = [0, 0, 384], sizes = [8, 14, 128], strides = [1, 1, 1]} : vector<8x16x1152xf32> to vector<8x14x128xf32>
    %40 = arith.addf %38, %39 : vector<8x14x128xf32>
    %41 = arith.index_cast %36 : i32 to index
    %c2_21 = arith.constant 2 : index
    %c0_22 = arith.constant 0 : index
    %42 = vector.load %arg7[%41, %c2_21, %c0_22] : memref<40x16x128xf32, #tpu.memory_space<vmem>>, vector<8x14x128xf32>
    tpu.vector_store %arg7[%41, %c2_21, %c0_22], %40 {strides = array<i32>} : memref<40x16x128xf32, #tpu.memory_space<vmem>>, vector<8x14x128xf32>,
    %c12_i32_23 = arith.constant 12 : i32
    %43 = arith.addi %8, %c12_i32_23 : i32
    %44 = arith.index_cast %43 : i32 to index
    %c0_24 = arith.constant 0 : index
    %c0_25 = arith.constant 0 : index
    %45 = vector.load %arg7[%44, %c0_24, %c0_25] : memref<40x16x128xf32, #tpu.memory_space<vmem>>, vector<8x16x128xf32>
    %46 = vector.extract_strided_slice %14 {offsets = [0, 0, 512], sizes = [8, 16, 128], strides = [1, 1, 1]} : vector<8x16x1152xf32> to vector<8x16x128xf32>
    %47 = arith.addf %45, %46 : vector<8x16x128xf32>
    %48 = arith.index_cast %43 : i32 to index
    %c0_26 = arith.constant 0 : index
    %c0_27 = arith.constant 0 : index
    %49 = vector.load %arg7[%48, %c0_26, %c0_27] : memref<40x16x128xf32, #tpu.memory_space<vmem>>, vector<8x16x128xf32>
    tpu.vector_store %arg7[%48, %c0_26, %c0_27], %47 {strides = array<i32>} : memref<40x16x128xf32, #tpu.memory_space<vmem>>, vector<8x16x128xf32>,
    %c12_i32_28 = arith.constant 12 : i32
    %50 = arith.addi %8, %c12_i32_28 : i32
    %51 = arith.index_cast %50 : i32 to index
    %c0_29 = arith.constant 0 : index
    %c0_30 = arith.constant 0 : index
    %52 = vector.load %arg7[%51, %c0_29, %c0_30] : memref<40x16x128xf32, #tpu.memory_space<vmem>>, vector<8x14x128xf32>
    %53 = vector.extract_strided_slice %14 {offsets = [0, 2, 640], sizes = [8, 14, 128], strides = [1, 1, 1]} : vector<8x16x1152xf32> to vector<8x14x128xf32>
    %54 = arith.addf %52, %53 : vector<8x14x128xf32>
    %55 = arith.index_cast %50 : i32 to index
    %c0_31 = arith.constant 0 : index
    %c0_32 = arith.constant 0 : index
    %56 = vector.load %arg7[%55, %c0_31, %c0_32] : memref<40x16x128xf32, #tpu.memory_space<vmem>>, vector<8x14x128xf32>
    tpu.vector_store %arg7[%55, %c0_31, %c0_32], %54 {strides = array<i32>} : memref<40x16x128xf32, #tpu.memory_space<vmem>>, vector<8x14x128xf32>,
    %c10_i32 = arith.constant 10 : i32
    %57 = arith.addi %8, %c10_i32 : i32
    %58 = arith.index_cast %57 : i32 to index
    %c2_33 = arith.constant 2 : index
    %c0_34 = arith.constant 0 : index
    %59 = vector.load %arg7[%58, %c2_33, %c0_34] : memref<40x16x128xf32, #tpu.memory_space<vmem>>, vector<8x14x128xf32>
    %60 = vector.extract_strided_slice %14 {offsets = [0, 0, 768], sizes = [8, 14, 128], strides = [1, 1, 1]} : vector<8x16x1152xf32> to vector<8x14x128xf32>
    %61 = arith.addf %59, %60 : vector<8x14x128xf32>
    %62 = arith.index_cast %57 : i32 to index
    %c2_35 = arith.constant 2 : index
    %c0_36 = arith.constant 0 : index
    %63 = vector.load %arg7[%62, %c2_35, %c0_36] : memref<40x16x128xf32, #tpu.memory_space<vmem>>, vector<8x14x128xf32>
    tpu.vector_store %arg7[%62, %c2_35, %c0_36], %61 {strides = array<i32>} : memref<40x16x128xf32, #tpu.memory_space<vmem>>, vector<8x14x128xf32>,
    %c10_i32_37 = arith.constant 10 : i32
    %64 = arith.addi %8, %c10_i32_37 : i32
    %65 = arith.index_cast %64 : i32 to index
    %c0_38 = arith.constant 0 : index
    %c0_39 = arith.constant 0 : index
    %66 = vector.load %arg7[%65, %c0_38, %c0_39] : memref<40x16x128xf32, #tpu.memory_space<vmem>>, vector<8x16x128xf32>
    %67 = vector.extract_strided_slice %14 {offsets = [0, 0, 896], sizes = [8, 16, 128], strides = [1, 1, 1]} : vector<8x16x1152xf32> to vector<8x16x128xf32>
    %68 = arith.addf %66, %67 : vector<8x16x128xf32>
    %69 = arith.index_cast %64 : i32 to index
    %c0_40 = arith.constant 0 : index
    %c0_41 = arith.constant 0 : index
    %70 = vector.load %arg7[%69, %c0_40, %c0_41] : memref<40x16x128xf32, #tpu.memory_space<vmem>>, vector<8x16x128xf32>
    tpu.vector_store %arg7[%69, %c0_40, %c0_41], %68 {strides = array<i32>} : memref<40x16x128xf32, #tpu.memory_space<vmem>>, vector<8x16x128xf32>,
    %c10_i32_42 = arith.constant 10 : i32
    %71 = arith.addi %8, %c10_i32_42 : i32
    %72 = arith.index_cast %71 : i32 to index
    %c0_43 = arith.constant 0 : index
    %c0_44 = arith.constant 0 : index
    %73 = vector.load %arg7[%72, %c0_43, %c0_44] : memref<40x16x128xf32, #tpu.memory_space<vmem>>, vector<8x14x128xf32>
    %74 = vector.extract_strided_slice %14 {offsets = [0, 2, 1024], sizes = [8, 14, 128], strides = [1, 1, 1]} : vector<8x16x1152xf32> to vector<8x14x128xf32>
    %75 = arith.addf %73, %74 : vector<8x14x128xf32>
    %76 = arith.index_cast %71 : i32 to index
    %c0_45 = arith.constant 0 : index
    %c0_46 = arith.constant 0 : index
    %77 = vector.load %arg7[%76, %c0_45, %c0_46] : memref<40x16x128xf32, #tpu.memory_space<vmem>>, vector<8x14x128xf32>
    tpu.vector_store %arg7[%76, %c0_45, %c0_46], %75 {strides = array<i32>} : memref<40x16x128xf32, #tpu.memory_space<vmem>>, vector<8x14x128xf32>,
    %78 = arith.index_cast %10 : i32 to index
    %c1152 = arith.constant 1152 : index
    %79 = vector.load %arg4[%78, %c1152] : memref<256x4224xbf16, #tpu.memory_space<vmem>>, vector<128x1024xbf16>
    %cst_47 = arith.constant dense<0.000000e+00> : vector<128x1024xf32>
    %80 = tpu.matmul %7, %79, %cst_47 {dimension_numbers = #tpu.dot_dimension_numbers<[1], [0], [0], [1], [0, 0, 1, 1], [], []>} : vector<128x128xbf16>, vector<128x1024xbf16>, vector<128x1024xf32> -> vector<128x1024xf32>
    %81 = vector.shape_cast %80 : vector<128x1024xf32> to vector<8x16x1024xf32>
    %c16_i32 = arith.constant 16 : i32
    %82 = arith.addi %8, %c16_i32 : i32
    %83 = arith.index_cast %82 : i32 to index
    %c4 = arith.constant 4 : index
    %c0_48 = arith.constant 0 : index
    %84 = vector.load %arg7[%83, %c4, %c0_48] : memref<40x16x128xf32, #tpu.memory_space<vmem>>, vector<8x12x128xf32>
    %85 = vector.extract_strided_slice %81 {offsets = [0, 0, 0], sizes = [8, 12, 128], strides = [1, 1, 1]} : vector<8x16x1024xf32> to vector<8x12x128xf32>
    %86 = arith.addf %84, %85 : vector<8x12x128xf32>
    %87 = arith.index_cast %82 : i32 to index
    %c4_49 = arith.constant 4 : index
    %c0_50 = arith.constant 0 : index
    %88 = vector.load %arg7[%87, %c4_49, %c0_50] : memref<40x16x128xf32, #tpu.memory_space<vmem>>, vector<8x12x128xf32>
    tpu.vector_store %arg7[%87, %c4_49, %c0_50], %86 {strides = array<i32>} : memref<40x16x128xf32, #tpu.memory_space<vmem>>, vector<8x12x128xf32>,
    %c16_i32_51 = arith.constant 16 : i32
    %89 = arith.addi %8, %c16_i32_51 : i32
    %90 = arith.index_cast %89 : i32 to index
    %c0_52 = arith.constant 0 : index
    %c0_53 = arith.constant 0 : index
    %91 = vector.load %arg7[%90, %c0_52, %c0_53] : memref<40x16x128xf32, #tpu.memory_space<vmem>>, vector<8x16x128xf32>
    %92 = vector.extract_strided_slice %81 {offsets = [0, 0, 128], sizes = [8, 16, 128], strides = [1, 1, 1]} : vector<8x16x1024xf32> to vector<8x16x128xf32>
    %93 = arith.addf %91, %92 : vector<8x16x128xf32>
    %94 = arith.index_cast %89 : i32 to index
    %c0_54 = arith.constant 0 : index
    %c0_55 = arith.constant 0 : index
    %95 = vector.load %arg7[%94, %c0_54, %c0_55] : memref<40x16x128xf32, #tpu.memory_space<vmem>>, vector<8x16x128xf32>
    tpu.vector_store %arg7[%94, %c0_54, %c0_55], %93 {strides = array<i32>} : memref<40x16x128xf32, #tpu.memory_space<vmem>>, vector<8x16x128xf32>,
    %c16_i32_56 = arith.constant 16 : i32
    %96 = arith.addi %8, %c16_i32_56 : i32
    %97 = arith.index_cast %96 : i32 to index
    %c0_57 = arith.constant 0 : index
    %c0_58 = arith.constant 0 : index
    %98 = vector.load %arg7[%97, %c0_57, %c0_58] : memref<40x16x128xf32, #tpu.memory_space<vmem>>, vector<8x12x128xf32>
    %99 = vector.extract_strided_slice %81 {offsets = [0, 4, 256], sizes = [8, 12, 128], strides = [1, 1, 1]} : vector<8x16x1024xf32> to vector<8x12x128xf32>
    %100 = arith.addf %98, %99 : vector<8x12x128xf32>
    %101 = arith.index_cast %96 : i32 to index
    %c0_59 = arith.constant 0 : index
    %c0_60 = arith.constant 0 : index
    %102 = vector.load %arg7[%101, %c0_59, %c0_60] : memref<40x16x128xf32, #tpu.memory_space<vmem>>, vector<8x12x128xf32>
    tpu.vector_store %arg7[%101, %c0_59, %c0_60], %100 {strides = array<i32>} : memref<40x16x128xf32, #tpu.memory_space<vmem>>, vector<8x12x128xf32>,
    %c12_i32_61 = arith.constant 12 : i32
    %103 = arith.addi %8, %c12_i32_61 : i32
    %104 = arith.index_cast %103 : i32 to index
    %c4_62 = arith.constant 4 : index
    %c0_63 = arith.constant 0 : index
    %105 = vector.load %arg7[%104, %c4_62, %c0_63] : memref<40x16x128xf32, #tpu.memory_space<vmem>>, vector<8x12x128xf32>
    %106 = vector.extract_strided_slice %81 {offsets = [0, 0, 384], sizes = [8, 12, 128], strides = [1, 1, 1]} : vector<8x16x1024xf32> to vector<8x12x128xf32>
    %107 = arith.addf %105, %106 : vector<8x12x128xf32>
    %108 = arith.index_cast %103 : i32 to index
    %c4_64 = arith.constant 4 : index
    %c0_65 = arith.constant 0 : index
    %109 = vector.load %arg7[%108, %c4_64, %c0_65] : memref<40x16x128xf32, #tpu.memory_space<vmem>>, vector<8x12x128xf32>
    tpu.vector_store %arg7[%108, %c4_64, %c0_65], %107 {strides = array<i32>} : memref<40x16x128xf32, #tpu.memory_space<vmem>>, vector<8x12x128xf32>,
    %c12_i32_66 = arith.constant 12 : i32
    %110 = arith.addi %8, %c12_i32_66 : i32
    %111 = arith.index_cast %110 : i32 to index
    %c0_67 = arith.constant 0 : index
    %c0_68 = arith.constant 0 : index
    %112 = vector.load %arg7[%111, %c0_67, %c0_68] : memref<40x16x128xf32, #tpu.memory_space<vmem>>, vector<8x12x128xf32>
    %113 = vector.extract_strided_slice %81 {offsets = [0, 4, 512], sizes = [8, 12, 128], strides = [1, 1, 1]} : vector<8x16x1024xf32> to vector<8x12x128xf32>
    %114 = arith.addf %112, %113 : vector<8x12x128xf32>
    %115 = arith.index_cast %110 : i32 to index
    %c0_69 = arith.constant 0 : index
    %c0_70 = arith.constant 0 : index
    %116 = vector.load %arg7[%115, %c0_69, %c0_70] : memref<40x16x128xf32, #tpu.memory_space<vmem>>, vector<8x12x128xf32>
    tpu.vector_store %arg7[%115, %c0_69, %c0_70], %114 {strides = array<i32>} : memref<40x16x128xf32, #tpu.memory_space<vmem>>, vector<8x12x128xf32>,
    %c8_i32_71 = arith.constant 8 : i32
    %117 = arith.addi %8, %c8_i32_71 : i32
    %118 = arith.index_cast %117 : i32 to index
    %c4_72 = arith.constant 4 : index
    %c0_73 = arith.constant 0 : index
    %119 = vector.load %arg7[%118, %c4_72, %c0_73] : memref<40x16x128xf32, #tpu.memory_space<vmem>>, vector<8x12x128xf32>
    %120 = vector.extract_strided_slice %81 {offsets = [0, 0, 640], sizes = [8, 12, 128], strides = [1, 1, 1]} : vector<8x16x1024xf32> to vector<8x12x128xf32>
    %121 = arith.addf %119, %120 : vector<8x12x128xf32>
    %122 = arith.index_cast %117 : i32 to index
    %c4_74 = arith.constant 4 : index
    %c0_75 = arith.constant 0 : index
    %123 = vector.load %arg7[%122, %c4_74, %c0_75] : memref<40x16x128xf32, #tpu.memory_space<vmem>>, vector<8x12x128xf32>
    tpu.vector_store %arg7[%122, %c4_74, %c0_75], %121 {strides = array<i32>} : memref<40x16x128xf32, #tpu.memory_space<vmem>>, vector<8x12x128xf32>,
    %c8_i32_76 = arith.constant 8 : i32
    %124 = arith.addi %8, %c8_i32_76 : i32
    %125 = arith.index_cast %124 : i32 to index
    %c0_77 = arith.constant 0 : index
    %c0_78 = arith.constant 0 : index
    %126 = vector.load %arg7[%125, %c0_77, %c0_78] : memref<40x16x128xf32, #tpu.memory_space<vmem>>, vector<8x16x128xf32>
    %127 = vector.extract_strided_slice %81 {offsets = [0, 0, 768], sizes = [8, 16, 128], strides = [1, 1, 1]} : vector<8x16x1024xf32> to vector<8x16x128xf32>
    %128 = arith.addf %126, %127 : vector<8x16x128xf32>
    %129 = arith.index_cast %124 : i32 to index
    %c0_79 = arith.constant 0 : index
    %c0_80 = arith.constant 0 : index
    %130 = vector.load %arg7[%129, %c0_79, %c0_80] : memref<40x16x128xf32, #tpu.memory_space<vmem>>, vector<8x16x128xf32>
    tpu.vector_store %arg7[%129, %c0_79, %c0_80], %128 {strides = array<i32>} : memref<40x16x128xf32, #tpu.memory_space<vmem>>, vector<8x16x128xf32>,
    %c8_i32_81 = arith.constant 8 : i32
    %131 = arith.addi %8, %c8_i32_81 : i32
    %132 = arith.index_cast %131 : i32 to index
    %c0_82 = arith.constant 0 : index
    %c0_83 = arith.constant 0 : index
    %133 = vector.load %arg7[%132, %c0_82, %c0_83] : memref<40x16x128xf32, #tpu.memory_space<vmem>>, vector<8x12x128xf32>
    %134 = vector.extract_strided_slice %81 {offsets = [0, 4, 896], sizes = [8, 12, 128], strides = [1, 1, 1]} : vector<8x16x1024xf32> to vector<8x12x128xf32>
    %135 = arith.addf %133, %134 : vector<8x12x128xf32>
    %136 = arith.index_cast %131 : i32 to index
    %c0_84 = arith.constant 0 : index
    %c0_85 = arith.constant 0 : index
    %137 = vector.load %arg7[%136, %c0_84, %c0_85] : memref<40x16x128xf32, #tpu.memory_space<vmem>>, vector<8x12x128xf32>
    tpu.vector_store %arg7[%136, %c0_84, %c0_85], %135 {strides = array<i32>} : memref<40x16x128xf32, #tpu.memory_space<vmem>>, vector<8x12x128xf32>,
    %138 = arith.index_cast %10 : i32 to index
    %c2176 = arith.constant 2176 : index
    %139 = vector.load %arg4[%138, %c2176] : memref<256x4224xbf16, #tpu.memory_space<vmem>>, vector<128x1024xbf16>
    %cst_86 = arith.constant dense<0.000000e+00> : vector<128x1024xf32>
    %140 = tpu.matmul %7, %139, %cst_86 {dimension_numbers = #tpu.dot_dimension_numbers<[1], [0], [0], [1], [0, 0, 1, 1], [], []>} : vector<128x128xbf16>, vector<128x1024xbf16>, vector<128x1024xf32> -> vector<128x1024xf32>
    %141 = vector.shape_cast %140 : vector<128x1024xf32> to vector<8x16x1024xf32>
    %c20_i32 = arith.constant 20 : i32
    %142 = arith.addi %8, %c20_i32 : i32
    %143 = arith.index_cast %142 : i32 to index
    %c8 = arith.constant 8 : index
    %c0_87 = arith.constant 0 : index
    %144 = vector.load %arg7[%143, %c8, %c0_87] : memref<40x16x128xf32, #tpu.memory_space<vmem>>, vector<8x8x128xf32>
    %145 = vector.extract_strided_slice %141 {offsets = [0, 0, 0], sizes = [8, 8, 128], strides = [1, 1, 1]} : vector<8x16x1024xf32> to vector<8x8x128xf32>
    %146 = arith.addf %144, %145 : vector<8x8x128xf32>
    %147 = arith.index_cast %142 : i32 to index
    %c8_88 = arith.constant 8 : index
    %c0_89 = arith.constant 0 : index
    %148 = vector.load %arg7[%147, %c8_88, %c0_89] : memref<40x16x128xf32, #tpu.memory_space<vmem>>, vector<8x8x128xf32>
    tpu.vector_store %arg7[%147, %c8_88, %c0_89], %146 {strides = array<i32>} : memref<40x16x128xf32, #tpu.memory_space<vmem>>, vector<8x8x128xf32>,
    %c20_i32_90 = arith.constant 20 : i32
    %149 = arith.addi %8, %c20_i32_90 : i32
    %150 = arith.index_cast %149 : i32 to index
    %c0_91 = arith.constant 0 : index
    %c0_92 = arith.constant 0 : index
    %151 = vector.load %arg7[%150, %c0_91, %c0_92] : memref<40x16x128xf32, #tpu.memory_space<vmem>>, vector<8x16x128xf32>
    %152 = vector.extract_strided_slice %141 {offsets = [0, 0, 128], sizes = [8, 16, 128], strides = [1, 1, 1]} : vector<8x16x1024xf32> to vector<8x16x128xf32>
    %153 = arith.addf %151, %152 : vector<8x16x128xf32>
    %154 = arith.index_cast %149 : i32 to index
    %c0_93 = arith.constant 0 : index
    %c0_94 = arith.constant 0 : index
    %155 = vector.load %arg7[%154, %c0_93, %c0_94] : memref<40x16x128xf32, #tpu.memory_space<vmem>>, vector<8x16x128xf32>
    tpu.vector_store %arg7[%154, %c0_93, %c0_94], %153 {strides = array<i32>} : memref<40x16x128xf32, #tpu.memory_space<vmem>>, vector<8x16x128xf32>,
    %c20_i32_95 = arith.constant 20 : i32
    %156 = arith.addi %8, %c20_i32_95 : i32
    %157 = arith.index_cast %156 : i32 to index
    %c0_96 = arith.constant 0 : index
    %c0_97 = arith.constant 0 : index
    %158 = vector.load %arg7[%157, %c0_96, %c0_97] : memref<40x16x128xf32, #tpu.memory_space<vmem>>, vector<8x8x128xf32>
    %159 = vector.extract_strided_slice %141 {offsets = [0, 8, 256], sizes = [8, 8, 128], strides = [1, 1, 1]} : vector<8x16x1024xf32> to vector<8x8x128xf32>
    %160 = arith.addf %158, %159 : vector<8x8x128xf32>
    %161 = arith.index_cast %156 : i32 to index
    %c0_98 = arith.constant 0 : index
    %c0_99 = arith.constant 0 : index
    %162 = vector.load %arg7[%161, %c0_98, %c0_99] : memref<40x16x128xf32, #tpu.memory_space<vmem>>, vector<8x8x128xf32>
    tpu.vector_store %arg7[%161, %c0_98, %c0_99], %160 {strides = array<i32>} : memref<40x16x128xf32, #tpu.memory_space<vmem>>, vector<8x8x128xf32>,
    %c12_i32_100 = arith.constant 12 : i32
    %163 = arith.addi %8, %c12_i32_100 : i32
    %164 = arith.index_cast %163 : i32 to index
    %c8_101 = arith.constant 8 : index
    %c0_102 = arith.constant 0 : index
    %165 = vector.load %arg7[%164, %c8_101, %c0_102] : memref<40x16x128xf32, #tpu.memory_space<vmem>>, vector<8x8x128xf32>
    %166 = vector.extract_strided_slice %141 {offsets = [0, 0, 384], sizes = [8, 8, 128], strides = [1, 1, 1]} : vector<8x16x1024xf32> to vector<8x8x128xf32>
    %167 = arith.addf %165, %166 : vector<8x8x128xf32>
    %168 = arith.index_cast %163 : i32 to index
    %c8_103 = arith.constant 8 : index
    %c0_104 = arith.constant 0 : index
    %169 = vector.load %arg7[%168, %c8_103, %c0_104] : memref<40x16x128xf32, #tpu.memory_space<vmem>>, vector<8x8x128xf32>
    tpu.vector_store %arg7[%168, %c8_103, %c0_104], %167 {strides = array<i32>} : memref<40x16x128xf32, #tpu.memory_space<vmem>>, vector<8x8x128xf32>,
    %c12_i32_105 = arith.constant 12 : i32
    %170 = arith.addi %8, %c12_i32_105 : i32
    %171 = arith.index_cast %170 : i32 to index
    %c0_106 = arith.constant 0 : index
    %c0_107 = arith.constant 0 : index
    %172 = vector.load %arg7[%171, %c0_106, %c0_107] : memref<40x16x128xf32, #tpu.memory_space<vmem>>, vector<8x8x128xf32>
    %173 = vector.extract_strided_slice %141 {offsets = [0, 8, 512], sizes = [8, 8, 128], strides = [1, 1, 1]} : vector<8x16x1024xf32> to vector<8x8x128xf32>
    %174 = arith.addf %172, %173 : vector<8x8x128xf32>
    %175 = arith.index_cast %170 : i32 to index
    %c0_108 = arith.constant 0 : index
    %c0_109 = arith.constant 0 : index
    %176 = vector.load %arg7[%175, %c0_108, %c0_109] : memref<40x16x128xf32, #tpu.memory_space<vmem>>, vector<8x8x128xf32>
    tpu.vector_store %arg7[%175, %c0_108, %c0_109], %174 {strides = array<i32>} : memref<40x16x128xf32, #tpu.memory_space<vmem>>, vector<8x8x128xf32>,
    %c4_i32 = arith.constant 4 : i32
    %177 = arith.addi %8, %c4_i32 : i32
    %178 = arith.index_cast %177 : i32 to index
    %c8_110 = arith.constant 8 : index
    %c0_111 = arith.constant 0 : index
    %179 = vector.load %arg7[%178, %c8_110, %c0_111] : memref<40x16x128xf32, #tpu.memory_space<vmem>>, vector<8x8x128xf32>
    %180 = vector.extract_strided_slice %141 {offsets = [0, 0, 640], sizes = [8, 8, 128], strides = [1, 1, 1]} : vector<8x16x1024xf32> to vector<8x8x128xf32>
    %181 = arith.addf %179, %180 : vector<8x8x128xf32>
    %182 = arith.index_cast %177 : i32 to index
    %c8_112 = arith.constant 8 : index
    %c0_113 = arith.constant 0 : index
    %183 = vector.load %arg7[%182, %c8_112, %c0_113] : memref<40x16x128xf32, #tpu.memory_space<vmem>>, vector<8x8x128xf32>
    tpu.vector_store %arg7[%182, %c8_112, %c0_113], %181 {strides = array<i32>} : memref<40x16x128xf32, #tpu.memory_space<vmem>>, vector<8x8x128xf32>,
    %c4_i32_114 = arith.constant 4 : i32
    %184 = arith.addi %8, %c4_i32_114 : i32
    %185 = arith.index_cast %184 : i32 to index
    %c0_115 = arith.constant 0 : index
    %c0_116 = arith.constant 0 : index
    %186 = vector.load %arg7[%185, %c0_115, %c0_116] : memref<40x16x128xf32, #tpu.memory_space<vmem>>, vector<8x16x128xf32>
    %187 = vector.extract_strided_slice %141 {offsets = [0, 0, 768], sizes = [8, 16, 128], strides = [1, 1, 1]} : vector<8x16x1024xf32> to vector<8x16x128xf32>
    %188 = arith.addf %186, %187 : vector<8x16x128xf32>
    %189 = arith.index_cast %184 : i32 to index
    %c0_117 = arith.constant 0 : index
    %c0_118 = arith.constant 0 : index
    %190 = vector.load %arg7[%189, %c0_117, %c0_118] : memref<40x16x128xf32, #tpu.memory_space<vmem>>, vector<8x16x128xf32>
    tpu.vector_store %arg7[%189, %c0_117, %c0_118], %188 {strides = array<i32>} : memref<40x16x128xf32, #tpu.memory_space<vmem>>, vector<8x16x128xf32>,
    %c4_i32_119 = arith.constant 4 : i32
    %191 = arith.addi %8, %c4_i32_119 : i32
    %192 = arith.index_cast %191 : i32 to index
    %c0_120 = arith.constant 0 : index
    %c0_121 = arith.constant 0 : index
    %193 = vector.load %arg7[%192, %c0_120, %c0_121] : memref<40x16x128xf32, #tpu.memory_space<vmem>>, vector<8x8x128xf32>
    %194 = vector.extract_strided_slice %141 {offsets = [0, 8, 896], sizes = [8, 8, 128], strides = [1, 1, 1]} : vector<8x16x1024xf32> to vector<8x8x128xf32>
    %195 = arith.addf %193, %194 : vector<8x8x128xf32>
    %196 = arith.index_cast %191 : i32 to index
    %c0_122 = arith.constant 0 : index
    %c0_123 = arith.constant 0 : index
    %197 = vector.load %arg7[%196, %c0_122, %c0_123] : memref<40x16x128xf32, #tpu.memory_space<vmem>>, vector<8x8x128xf32>
    tpu.vector_store %arg7[%196, %c0_122, %c0_123], %195 {strides = array<i32>} : memref<40x16x128xf32, #tpu.memory_space<vmem>>, vector<8x8x128xf32>,
    %198 = arith.index_cast %10 : i32 to index
    %c3200 = arith.constant 3200 : index
    %199 = vector.load %arg4[%198, %c3200] : memref<256x4224xbf16, #tpu.memory_space<vmem>>, vector<128x1024xbf16>
    %cst_124 = arith.constant dense<0.000000e+00> : vector<128x1024xf32>
    %200 = tpu.matmul %7, %199, %cst_124 {dimension_numbers = #tpu.dot_dimension_numbers<[1], [0], [0], [1], [0, 0, 1, 1], [], []>} : vector<128x128xbf16>, vector<128x1024xbf16>, vector<128x1024xf32> -> vector<128x1024xf32>
    %201 = vector.shape_cast %200 : vector<128x1024xf32> to vector<8x16x1024xf32>
    %c24_i32 = arith.constant 24 : i32
    %202 = arith.addi %8, %c24_i32 : i32
    %203 = arith.index_cast %202 : i32 to index
    %c12 = arith.constant 12 : index
    %c0_125 = arith.constant 0 : index
    %204 = vector.load %arg7[%203, %c12, %c0_125] : memref<40x16x128xf32, #tpu.memory_space<vmem>>, vector<8x4x128xf32>
    %205 = vector.extract_strided_slice %201 {offsets = [0, 0, 0], sizes = [8, 4, 128], strides = [1, 1, 1]} : vector<8x16x1024xf32> to vector<8x4x128xf32>
    %206 = arith.addf %204, %205 : vector<8x4x128xf32>
    %207 = arith.index_cast %202 : i32 to index
    %c12_126 = arith.constant 12 : index
    %c0_127 = arith.constant 0 : index
    %208 = vector.load %arg7[%207, %c12_126, %c0_127] : memref<40x16x128xf32, #tpu.memory_space<vmem>>, vector<8x4x128xf32>
    tpu.vector_store %arg7[%207, %c12_126, %c0_127], %206 {strides = array<i32>} : memref<40x16x128xf32, #tpu.memory_space<vmem>>, vector<8x4x128xf32>,
    %c24_i32_128 = arith.constant 24 : i32
    %209 = arith.addi %8, %c24_i32_128 : i32
    %210 = arith.index_cast %209 : i32 to index
    %c0_129 = arith.constant 0 : index
    %c0_130 = arith.constant 0 : index
    %211 = vector.load %arg7[%210, %c0_129, %c0_130] : memref<40x16x128xf32, #tpu.memory_space<vmem>>, vector<8x16x128xf32>
    %212 = vector.extract_strided_slice %201 {offsets = [0, 0, 128], sizes = [8, 16, 128], strides = [1, 1, 1]} : vector<8x16x1024xf32> to vector<8x16x128xf32>
    %213 = arith.addf %211, %212 : vector<8x16x128xf32>
    %214 = arith.index_cast %209 : i32 to index
    %c0_131 = arith.constant 0 : index
    %c0_132 = arith.constant 0 : index
    %215 = vector.load %arg7[%214, %c0_131, %c0_132] : memref<40x16x128xf32, #tpu.memory_space<vmem>>, vector<8x16x128xf32>
    tpu.vector_store %arg7[%214, %c0_131, %c0_132], %213 {strides = array<i32>} : memref<40x16x128xf32, #tpu.memory_space<vmem>>, vector<8x16x128xf32>,
    %c24_i32_133 = arith.constant 24 : i32
    %216 = arith.addi %8, %c24_i32_133 : i32
    %217 = arith.index_cast %216 : i32 to index
    %c0_134 = arith.constant 0 : index
    %c0_135 = arith.constant 0 : index
    %218 = vector.load %arg7[%217, %c0_134, %c0_135] : memref<40x16x128xf32, #tpu.memory_space<vmem>>, vector<8x4x128xf32>
    %219 = vector.extract_strided_slice %201 {offsets = [0, 12, 256], sizes = [8, 4, 128], strides = [1, 1, 1]} : vector<8x16x1024xf32> to vector<8x4x128xf32>
    %220 = arith.addf %218, %219 : vector<8x4x128xf32>
    %221 = arith.index_cast %216 : i32 to index
    %c0_136 = arith.constant 0 : index
    %c0_137 = arith.constant 0 : index
    %222 = vector.load %arg7[%221, %c0_136, %c0_137] : memref<40x16x128xf32, #tpu.memory_space<vmem>>, vector<8x4x128xf32>
    tpu.vector_store %arg7[%221, %c0_136, %c0_137], %220 {strides = array<i32>} : memref<40x16x128xf32, #tpu.memory_space<vmem>>, vector<8x4x128xf32>,
    %c12_i32_138 = arith.constant 12 : i32
    %223 = arith.addi %8, %c12_i32_138 : i32
    %224 = arith.index_cast %223 : i32 to index
    %c12_139 = arith.constant 12 : index
    %c0_140 = arith.constant 0 : index
    %225 = vector.load %arg7[%224, %c12_139, %c0_140] : memref<40x16x128xf32, #tpu.memory_space<vmem>>, vector<8x4x128xf32>
    %226 = vector.extract_strided_slice %201 {offsets = [0, 0, 384], sizes = [8, 4, 128], strides = [1, 1, 1]} : vector<8x16x1024xf32> to vector<8x4x128xf32>
    %227 = arith.addf %225, %226 : vector<8x4x128xf32>
    %228 = arith.index_cast %223 : i32 to index
    %c12_141 = arith.constant 12 : index
    %c0_142 = arith.constant 0 : index
    %229 = vector.load %arg7[%228, %c12_141, %c0_142] : memref<40x16x128xf32, #tpu.memory_space<vmem>>, vector<8x4x128xf32>
    tpu.vector_store %arg7[%228, %c12_141, %c0_142], %227 {strides = array<i32>} : memref<40x16x128xf32, #tpu.memory_space<vmem>>, vector<8x4x128xf32>,
    %c12_i32_143 = arith.constant 12 : i32
    %230 = arith.addi %8, %c12_i32_143 : i32
    %231 = arith.index_cast %230 : i32 to index
    %c0_144 = arith.constant 0 : index
    %c0_145 = arith.constant 0 : index
    %232 = vector.load %arg7[%231, %c0_144, %c0_145] : memref<40x16x128xf32, #tpu.memory_space<vmem>>, vector<8x4x128xf32>
    %233 = vector.extract_strided_slice %201 {offsets = [0, 12, 512], sizes = [8, 4, 128], strides = [1, 1, 1]} : vector<8x16x1024xf32> to vector<8x4x128xf32>
    %234 = arith.addf %232, %233 : vector<8x4x128xf32>
    %235 = arith.index_cast %230 : i32 to index
    %c0_146 = arith.constant 0 : index
    %c0_147 = arith.constant 0 : index
    %236 = vector.load %arg7[%235, %c0_146, %c0_147] : memref<40x16x128xf32, #tpu.memory_space<vmem>>, vector<8x4x128xf32>
    tpu.vector_store %arg7[%235, %c0_146, %c0_147], %234 {strides = array<i32>} : memref<40x16x128xf32, #tpu.memory_space<vmem>>, vector<8x4x128xf32>,
    %c0_i32_148 = arith.constant 0 : i32
    %237 = arith.addi %8, %c0_i32_148 : i32
    %238 = arith.index_cast %237 : i32 to index
    %c12_149 = arith.constant 12 : index
    %c0_150 = arith.constant 0 : index
    %239 = vector.load %arg7[%238, %c12_149, %c0_150] : memref<40x16x128xf32, #tpu.memory_space<vmem>>, vector<8x4x128xf32>
    %240 = vector.extract_strided_slice %201 {offsets = [0, 0, 640], sizes = [8, 4, 128], strides = [1, 1, 1]} : vector<8x16x1024xf32> to vector<8x4x128xf32>
    %241 = arith.addf %239, %240 : vector<8x4x128xf32>
    %242 = arith.index_cast %237 : i32 to index
    %c12_151 = arith.constant 12 : index
    %c0_152 = arith.constant 0 : index
    %243 = vector.load %arg7[%242, %c12_151, %c0_152] : memref<40x16x128xf32, #tpu.memory_space<vmem>>, vector<8x4x128xf32>
    tpu.vector_store %arg7[%242, %c12_151, %c0_152], %241 {strides = array<i32>} : memref<40x16x128xf32, #tpu.memory_space<vmem>>, vector<8x4x128xf32>,
    %c0_i32_153 = arith.constant 0 : i32
    %244 = arith.addi %8, %c0_i32_153 : i32
    %245 = arith.index_cast %244 : i32 to index
    %c0_154 = arith.constant 0 : index
    %c0_155 = arith.constant 0 : index
    %246 = vector.load %arg7[%245, %c0_154, %c0_155] : memref<40x16x128xf32, #tpu.memory_space<vmem>>, vector<8x16x128xf32>
    %247 = vector.extract_strided_slice %201 {offsets = [0, 0, 768], sizes = [8, 16, 128], strides = [1, 1, 1]} : vector<8x16x1024xf32> to vector<8x16x128xf32>
    %248 = arith.addf %246, %247 : vector<8x16x128xf32>
    %249 = arith.index_cast %244 : i32 to index
    %c0_156 = arith.constant 0 : index
    %c0_157 = arith.constant 0 : index
    %250 = vector.load %arg7[%249, %c0_156, %c0_157] : memref<40x16x128xf32, #tpu.memory_space<vmem>>, vector<8x16x128xf32>
    tpu.vector_store %arg7[%249, %c0_156, %c0_157], %248 {strides = array<i32>} : memref<40x16x128xf32, #tpu.memory_space<vmem>>, vector<8x16x128xf32>,
    %c0_i32_158 = arith.constant 0 : i32
    %251 = arith.addi %8, %c0_i32_158 : i32
    %252 = arith.index_cast %251 : i32 to index
    %c0_159 = arith.constant 0 : index
    %c0_160 = arith.constant 0 : index
    %253 = vector.load %arg7[%252, %c0_159, %c0_160] : memref<40x16x128xf32, #tpu.memory_space<vmem>>, vector<8x4x128xf32>
    %254 = vector.extract_strided_slice %201 {offsets = [0, 12, 896], sizes = [8, 4, 128], strides = [1, 1, 1]} : vector<8x16x1024xf32> to vector<8x4x128xf32>
    %255 = arith.addf %253, %254 : vector<8x4x128xf32>
    %256 = arith.index_cast %251 : i32 to index
    %c0_161 = arith.constant 0 : index
    %c0_162 = arith.constant 0 : index
    %257 = vector.load %arg7[%256, %c0_161, %c0_162] : memref<40x16x128xf32, #tpu.memory_space<vmem>>, vector<8x4x128xf32>
    tpu.vector_store %arg7[%256, %c0_161, %c0_162], %255 {strides = array<i32>} : memref<40x16x128xf32, #tpu.memory_space<vmem>>, vector<8x4x128xf32>,
    %c1_i32 = arith.constant 1 : i32
    %258 = arith.cmpi eq, %arg1, %c1_i32 : i32
    %c1_i32_163 = arith.constant 1 : i32
    %259 = arith.cmpi eq, %arg2, %c1_i32_163 : i32
    %260 = arith.andi %258, %259 : i1
    %261 = arith.extui %260 : i1 to i32
    %c0_i32_164 = arith.constant 0 : i32
    %262 = arith.cmpi ne, %261, %c0_i32_164 : i32
    scf.if %262 {
      %c12_165 = arith.constant 12 : index
      %c0_166 = arith.constant 0 : index
      %c0_167 = arith.constant 0 : index
      %263 = vector.load %arg7[%c12_165, %c0_166, %c0_167] : memref<40x16x128xf32, #tpu.memory_space<vmem>>, vector<16x16x128xf32>
      %c0_168 = arith.constant 0 : index
      %c0_169 = arith.constant 0 : index
      %264 = vector.load %arg5[%c0_168, %c0_169] : memref<1x128xf32, #tpu.memory_space<vmem>>, vector<1x128xf32>
      %265 = vector.shape_cast %264 : vector<1x128xf32> to vector<1x1x128xf32>
      %266 = vector.broadcast %265 : vector<1x1x128xf32> to vector<16x16x128xf32>
      %267 = arith.addf %263, %266 : vector<16x16x128xf32>
      %268 = arith.truncf %267 : vector<16x16x128xf32> to vector<16x16x128xbf16>
      %c0_170 = arith.constant 0 : index
      %c0_171 = arith.constant 0 : index
      %c0_172 = arith.constant 0 : index
      %c0_173 = arith.constant 0 : index
      %269 = vector.load %arg6[%c0_170, %c0_171, %c0_172, %c0_173] : memref<1x16x16x128xbf16, #tpu.memory_space<vmem>>, vector<1x16x16x128xbf16>
      %270 = vector.shape_cast %269 : vector<1x16x16x128xbf16> to vector<16x16x128xbf16>
      %271 = vector.shape_cast %268 : vector<16x16x128xbf16> to vector<1x16x16x128xbf16>
      tpu.vector_store %arg6[%c0_170, %c0_171, %c0_172, %c0_173], %271 {strides = array<i32>} : memref<1x16x16x128xbf16, #tpu.memory_space<vmem>>, vector<1x16x16x128xbf16>,
    } else {
    }
    return
  }
  func.func @transform_0(%arg0: i32, %arg1: i32, %arg2: i32) -> (i32, i32, i32, i32) {
    %c0_i32 = arith.constant 0 : i32
    %c0_i32_0 = arith.constant 0 : i32
    return %arg0, %arg2, %c0_i32, %arg1 : i32, i32, i32, i32
  }
  func.func @transform_1(%arg0: i32, %arg1: i32, %arg2: i32) -> (i32, i32) {
    %c0_i32 = arith.constant 0 : i32
    %c0_i32_0 = arith.constant 0 : i32
    %c0_i32_1 = arith.constant 0 : i32
    return %c0_i32, %c0_i32_0 : i32, i32
  }
  func.func @transform_2(%arg0: i32, %arg1: i32, %arg2: i32) -> (i32, i32) {
    %c0_i32 = arith.constant 0 : i32
    %c0_i32_0 = arith.constant 0 : i32
    %c0_i32_1 = arith.constant 0 : i32
    return %c0_i32, %c0_i32_0 : i32, i32
  }
  func.func @transform_3(%arg0: i32, %arg1: i32, %arg2: i32) -> (i32, i32, i32, i32) {
    %c0_i32 = arith.constant 0 : i32
    %c0_i32_0 = arith.constant 0 : i32
    %c0_i32_1 = arith.constant 0 : i32
    %c0_i32_2 = arith.constant 0 : i32
    return %arg0, %c0_i32, %c0_i32_0, %c0_i32_1 : i32, i32, i32, i32
  }
}

</mosaic_0001>

<llo_original>
// kernel: classifier_module_forward.1
$region0: #{classifier_module_forward.1}
  #allocation0 [shape = 'u32[]', space=smem, size = 0x4, offset = 0x4, fixed_abs, tag = 'smem constant byte address 0x4 - core index']
  #allocation1 [shape = 'u32[144,128]{1,0:T(1,128)}', space=vmem, size = 0x12000, scoped, tag = 'internal scratch']
  #allocation2 [shape = 'f32[40,16,128]{2,1,0:T(8,128)}', space=vmem, size = 0x50000, scoped, tag = 'scratch operand']
  %s0 = inlined_call_operand.vmem [shape: bf16[2,16,16,256], index: 0, kind: input, shape index: {}]
  %s1 = inlined_call_operand.vmem [shape: bf16[256,4224], index: 1, kind: input, shape index: {}]
  %s2 = inlined_call_operand.vmem [shape: f32[1,128], index: 2, kind: input, shape index: {}]
  %s3 = inlined_call_operand.vmem [shape: bf16[2,16,16,128], index: 3, kind: output, shape index: {}]
  %s4 = sld [smem:[#allocation0]]
  $region94: #{classifier_module_forward.1} parent=0
    _
  %s6 = ssub.s32 1, %s4
  %s7 = scalar_select 0, %s6, %s4
  $region1: #{classifier_module_forward.1} parent=0
    #allocation3 [shape = 'u8[65536]{0}', space=vmem, size = 0x10000, scoped, tag = 'input window, operand 0']
    loop: start=0, step=1, limit=10
    $region2: #{classifier_module_forward.1} parent=1 // loop_pre_header
      _
    $region3: #{classifier_module_forward.1} parent=1 // loop_header
      %s9 = sphi 0, %s13
      %p10 = scmp.ge.s32.totalorder %s9, 10
      %s16 = sphi 0, %s35
      %s17 = sphi 0, %s31
      %s18 = sphi 0, %s27
      %s19 = sphi 0, %s16
      %s20 = sphi 0, %s17
      %s21 = sphi 0, %s18
      %s22 = sphi 0, %s19
      %s23 = sphi 0, %s20
      %s24 = sphi 0, %s21
      %s42 = sphi 0, %s44
      %s45 = sphi 0, %s42
      %s46 = sphi 0, %s45
      %s62 = sphi 0, %s46
      %s66 = sphi 0, %s66
      %s68 = sphi 0, %s66
      %s69 = sphi 0, %s68
      %s83 = sphi 0, %s69
      %s87 = sphi 0, %s87
      %s89 = sphi 0, %s87
      %s90 = sphi 0, %s89
      %s104 = sphi 0, %s90
      %s110 = sphi 0, %s112
      %s113 = sphi 0, %s110
      %s114 = sphi 0, %s113
      %s130 = sphi 0, %s114
    $region4: #{classifier_module_forward.1} parent=1 // loop_header_branch
      %12 = sbr.rel (%p10) target = $region8
    $region5: #{classifier_module_forward.1} parent=1 // loop_body
      %s14 = ssub.s32 %s9, 1
      %s15 = ssub.s32 %s9, 2
      %s25 = sadd.s32 1, %s18
      %p26 = scmp.ge.s32.totalorder %s25, 2
      %s27 = scalar_select %p26, 0, %s25
      %s28 = sadd.s32 1, %s17
      %s29 = scalar_select %p26, %s28, %s17
      %p30 = scmp.ge.s32.totalorder %s29, 2
      %s31 = scalar_select %p30, 0, %s29
      %s32 = sadd.s32 1, %s16
      %s33 = scalar_select %p30, %s32, %s16
      %p34 = scmp.ge.s32.totalorder %s33, 2
      %s35 = scalar_select %p34, 0, %s33
      %s36 = ssub.s32 %s16, %s35
      %s37 = ssub.s32 %s18, %s27
      %s38 = sor.u32 %s36, %s37
      %s39 = ssub.s32 %s17, %s31
      %s40 = sor.u32 %s38, %s39
      %p41 = scmp.eq.s32.totalorder %s40, 0
      %s43 = sadd.s32 %s42, 1
      %s44 = scalar_select %p41, %s42, %s43
      %p47 = pneg %p41
      %p48 = scmp.eq.s32.totalorder %s9, 7
      %p49 = por %p47, %p48
      %p50 = scmp.ne.s32.totalorder %s42, %s45
      %p51 = scmp.eq.s32.totalorder %s9, 0
      %p52 = por %p50, %p51
      %p53 = scmp.ne.s32.totalorder %s42, %s45
      %p54 = scmp.eq.s32.totalorder %s14, 7
      %p55 = por %p53, %p54
      %p56 = scmp.ne.s32.totalorder %s45, %s46
      %p57 = scmp.eq.s32.totalorder %s14, 0
      %p58 = por %p56, %p57
      %p59 = scmp.ne.s32.totalorder %s45, %s46
      %p60 = scmp.eq.s32.totalorder %s15, 7
      %p61 = por %p59, %p60
      %p63 = scmp.ne.s32.totalorder %s46, %s62
      %p64 = scmp.eq.s32.totalorder %s15, 0
      %p65 = por %p63, %p64
      %s67 = sadd.s32 %s66, 1
      %p70 = scmp.eq.s32.totalorder %s9, 7
      %p71 = scmp.ne.s32.totalorder %s66, %s68
      %p72 = scmp.eq.s32.totalorder %s9, 0
      %p73 = por %p71, %p72
      %p74 = scmp.ne.s32.totalorder %s66, %s68
      %p75 = scmp.eq.s32.totalorder %s14, 7
      %p76 = por %p74, %p75
      %p77 = scmp.ne.s32.totalorder %s68, %s69
      %p78 = scmp.eq.s32.totalorder %s14, 0
      %p79 = por %p77, %p78
      %p80 = scmp.ne.s32.totalorder %s68, %s69
      %p81 = scmp.eq.s32.totalorder %s15, 7
      %p82 = por %p80, %p81
      %p84 = scmp.ne.s32.totalorder %s69, %s83
      %p85 = scmp.eq.s32.totalorder %s15, 0
      %p86 = por %p84, %p85
      %s88 = sadd.s32 %s87, 1
      %p91 = scmp.eq.s32.totalorder %s9, 7
      %p92 = scmp.ne.s32.totalorder %s87, %s89
      %p93 = scmp.eq.s32.totalorder %s9, 0
      %p94 = por %p92, %p93
      %p95 = scmp.ne.s32.totalorder %s87, %s89
      %p96 = scmp.eq.s32.totalorder %s14, 7
      %p97 = por %p95, %p96
      %p98 = scmp.ne.s32.totalorder %s89, %s90
      %p99 = scmp.eq.s32.totalorder %s14, 0
      %p100 = por %p98, %p99
      %p101 = scmp.ne.s32.totalorder %s89, %s90
      %p102 = scmp.eq.s32.totalorder %s15, 7
      %p103 = por %p101, %p102
      %p105 = scmp.ne.s32.totalorder %s90, %s104
      %p106 = scmp.eq.s32.totalorder %s15, 0
      %p107 = por %p105, %p106
      %s108 = ssub.s32 %s16, %s35
      %p109 = scmp.eq.s32.totalorder %s108, 0
      %s111 = sadd.s32 %s110, 1
      %s112 = scalar_select %p109, %s110, %s111
      %p115 = pneg %p109
      %p116 = scmp.eq.s32.totalorder %s9, 7
      %p117 = por %p115, %p116
      %p118 = scmp.ne.s32.totalorder %s110, %s113
      %p119 = scmp.eq.s32.totalorder %s9, 0
      %p120 = por %p118, %p119
      %p121 = scmp.ne.s32.totalorder %s110, %s113
      %p122 = scmp.eq.s32.totalorder %s14, 7
      %p123 = por %p121, %p122
      %p124 = scmp.ne.s32.totalorder %s113, %s114
      %p125 = scmp.eq.s32.totalorder %s14, 0
      %p126 = por %p124, %p125
      %p127 = scmp.ne.s32.totalorder %s113, %s114
      %p128 = scmp.eq.s32.totalorder %s15, 7
      %p129 = por %p127, %p128
      %p131 = scmp.ne.s32.totalorder %s114, %s130
      %p132 = scmp.eq.s32.totalorder %s15, 0
      %p133 = por %p131, %p132
      %p134 = scmp.le.s32.totalorder 1, %s9
      %p135 = scmp.lt.s32.totalorder %s9, 9
      %p136 = pnand %p134, %p135
      %p137 = pneg %p136
      // Predicated region
      $region9: #{classifier_module_forward.1} parent=5 // pred_check
        _
      $region10: #{classifier_module_forward.1} parent=5 // pred_check_branch
        %139 = sbr.rel (%p136) target = $region12
      $region11: #{classifier_module_forward.1} parent=5 // pred_region
        %s140 = ssub.s32 %s9, 1
        // Predicated region
        $region13: #{classifier_module_forward.1} parent=11 // pred_check
          %p141 = pneg %p79
        $region14: #{classifier_module_forward.1} parent=11 // pred_check_branch
          %143 = sbr.rel (%p141) target = $region16
        $region15: #{classifier_module_forward.1} parent=11 // pred_region
          _
        $region16: #{classifier_module_forward.1} parent=11 // pred_fallthru
          _
        // Predicated region
        $region17: #{classifier_module_forward.1} parent=11 // pred_check
          %p144 = pneg %p100
        $region18: #{classifier_module_forward.1} parent=11 // pred_check_branch
          %146 = sbr.rel (%p144) target = $region20
        $region19: #{classifier_module_forward.1} parent=11 // pred_region
          _
        $region20: #{classifier_module_forward.1} parent=11 // pred_fallthru
          _
      $region12: #{classifier_module_forward.1} parent=5 // pred_fallthru
        _
      %p147 = scmp.lt.s32.totalorder %s9, 8
      // Predicated region
      $region21: #{classifier_module_forward.1} parent=5 // pred_check
        %p148 = pneg %p147
      $region22: #{classifier_module_forward.1} parent=5 // pred_check_branch
        %150 = sbr.rel (%p148) target = $region24
      $region23: #{classifier_module_forward.1} parent=5 // pred_region
        // Predicated region
        $region25: #{classifier_module_forward.1} parent=23 // pred_check
          %p151 = pneg %p52
        $region26: #{classifier_module_forward.1} parent=23 // pred_check_branch
          %153 = sbr.rel (%p151) target = $region28
        $region27: #{classifier_module_forward.1} parent=23 // pred_region
          %s154 = sand.u32 %s42, 1
          %s155 = sand.u32 %s42, 1
          %s156 = smul.addr %s155, 64
          %s157 = scalar_lea.vmem [#allocation3], %s156
          %s158 = smul.u32 8, %s18
          %s159 = smul.addr %s158, 4
          %s160 = sadd.s32 %s17, %s159
          %s161 = smul.addr %s16, 64
          %s162 = sadd.s32 %s160, %s161
          %s163 = smul.addr %s162, 4
          %s164 = scalar_lea.vmem %s0, %s163
          // Predicated region
          $region29: #{classifier_module_forward.1} parent=27 // pred_check
            _
          $region30: #{classifier_module_forward.1} parent=27 // pred_check_branch
            %166 = sbr.rel (0) target = $region32
          $region31: #{classifier_module_forward.1} parent=27 // pred_region
            // Predicated region
            $region33: #{classifier_module_forward.1} parent=31 // pred_check
              _
            $region34: #{classifier_module_forward.1} parent=31 // pred_check_branch
              %168 = sbr.rel target = $region36
            $region35: #{classifier_module_forward.1} parent=31 // pred_region
              // Predicated region
              $region48: #{classifier_module_forward.1} parent=35 // pred_check
                _
              $region49: #{classifier_module_forward.1} parent=35 // pred_check_branch
                %214 = sbr.rel (0) target = $region51
              $region50: #{classifier_module_forward.1} parent=35 // pred_region
                loop: start=0, step=1, limit=1
                $region52: #{classifier_module_forward.1} parent=50 // loop_pre_header
                  _
                $region53: #{classifier_module_forward.1} parent=50 // loop_header
                  %s216 = sphi 0, %s220
                  %p217 = scmp.ge.s32.totalorder %s216, 1
                  %s221 = sphi %s164, %s164
                  %s222 = sphi %s157, %s157
                $region54: #{classifier_module_forward.1} parent=50 // loop_header_branch
                  %219 = sbr.rel (%p217) target = $region58
                $region55: #{classifier_module_forward.1} parent=50 // loop_body
                  _
                $region56: #{classifier_module_forward.1} parent=50 // loop_footer
                  %s220 = sadd.s32 1, %s216
                $region57: #{classifier_module_forward.1} parent=50 // loop_footer_branch
                  %215 = sbr.rel target = $region53
                $region58: #{classifier_module_forward.1} parent=50 // loop_exit
                  _
                %s224 = ssub.s32 16, 1
                loop: start=0, step=1, limit=1
                $region59: #{classifier_module_forward.1} parent=50 // loop_pre_header
                  _
                $region60: #{classifier_module_forward.1} parent=50 // loop_header
                  %s226 = sphi 0, %s230
                  %p227 = scmp.ge.s32.totalorder %s226, 1
                  %s231 = sphi %s164, %s164
                  %s232 = sphi %s157, %s157
                $region61: #{classifier_module_forward.1} parent=50 // loop_header_branch
                  %229 = sbr.rel (%p227) target = $region65
                $region62: #{classifier_module_forward.1} parent=50 // loop_body
                  %v233 = vld [vmem:[%s231] sm:%s224]
                  %234 = vst [vmem:[%s232] sm:%s224] %v233
                  %v235 = vld [vmem:[%s231 + $0x8] sm:%s224]
                  %236 = vst [vmem:[%s232 + $0x4] sm:%s224] %v235
                  %v237 = vld [vmem:[%s231 + $0x10] sm:%s224]
                  %238 = vst [vmem:[%s232 + $0x8] sm:%s224] %v237
                  %v239 = vld [vmem:[%s231 + $0x18] sm:%s224]
                  %240 = vst [vmem:[%s232 + $0xc] sm:%s224] %v239
                  %v241 = vld [vmem:[%s231 + $0x20] sm:%s224]
                  %242 = vst [vmem:[%s232 + $0x10] sm:%s224] %v241
                  %v243 = vld [vmem:[%s231 + $0x28] sm:%s224]
                  %244 = vst [vmem:[%s232 + $0x14] sm:%s224] %v243
                  %v245 = vld [vmem:[%s231 + $0x30] sm:%s224]
                  %246 = vst [vmem:[%s232 + $0x18] sm:%s224] %v245
                  %v247 = vld [vmem:[%s231 + $0x38] sm:%s224]
                  %248 = vst [vmem:[%s232 + $0x1c] sm:%s224] %v247
                  %v249 = vld [vmem:[%s231 + $0x40] sm:%s224]
                  %250 = vst [vmem:[%s232 + $0x20] sm:%s224] %v249
                  %v251 = vld [vmem:[%s231 + $0x48] sm:%s224]
                  %252 = vst [vmem:[%s232 + $0x24] sm:%s224] %v251
                  %v253 = vld [vmem:[%s231 + $0x50] sm:%s224]
                  %254 = vst [vmem:[%s232 + $0x28] sm:%s224] %v253
                  %v255 = vld [vmem:[%s231 + $0x58] sm:%s224]
                  %256 = vst [vmem:[%s232 + $0x2c] sm:%s224] %v255
                  %v257 = vld [vmem:[%s231 + $0x60] sm:%s224]
                  %258 = vst [vmem:[%s232 + $0x30] sm:%s224] %v257
                  %v259 = vld [vmem:[%s231 + $0x68] sm:%s224]
                  %260 = vst [vmem:[%s232 + $0x34] sm:%s224] %v259
                  %v261 = vld [vmem:[%s231 + $0x70] sm:%s224]
                  %262 = vst [vmem:[%s232 + $0x38] sm:%s224] %v261
                  %v263 = vld [vmem:[%s231 + $0x78] sm:%s224]
                  %264 = vst [vmem:[%s232 + $0x3c] sm:%s224] %v263
                $region63: #{classifier_module_forward.1} parent=50 // loop_footer
                  %s230 = sadd.s32 1, %s226
                $region64: #{classifier_module_forward.1} parent=50 // loop_footer_branch
                  %225 = sbr.rel target = $region60
                $region65: #{classifier_module_forward.1} parent=50 // loop_exit
                  _
              $region51: #{classifier_module_forward.1} parent=35 // pred_fallthru
                _
            $region36: #{classifier_module_forward.1} parent=31 // pred_fallthru
              _
            // Predicated region
            $region37: #{classifier_module_forward.1} parent=31 // pred_check
              _
            $region38: #{classifier_module_forward.1} parent=31 // pred_check_branch
              %170 = sbr.rel (0) target = $region40
            $region39: #{classifier_module_forward.1} parent=31 // pred_region
              %s172 = ssub.s32 16, 1
              loop: start=0, step=1, limit=1
              $region41: #{classifier_module_forward.1} parent=39 // loop_pre_header
                _
              $region42: #{classifier_module_forward.1} parent=39 // loop_header
                %s174 = sphi 0, %s178
                %p175 = scmp.ge.s32.totalorder %s174, 1
                %s179 = sphi %s164, %s164
                %s180 = sphi %s157, %s157
              $region43: #{classifier_module_forward.1} parent=39 // loop_header_branch
                %177 = sbr.rel (%p175) target = $region47
              $region44: #{classifier_module_forward.1} parent=39 // loop_body
                %v181 = vld [vmem:[%s179] sm:%s172]
                %182 = vst [vmem:[%s180] sm:%s172] %v181
                %v183 = vld [vmem:[%s179 + $0x8] sm:%s172]
                %184 = vst [vmem:[%s180 + $0x4] sm:%s172] %v183
                %v185 = vld [vmem:[%s179 + $0x10] sm:%s172]
                %186 = vst [vmem:[%s180 + $0x8] sm:%s172] %v185
                %v187 = vld [vmem:[%s179 + $0x18] sm:%s172]
                %188 = vst [vmem:[%s180 + $0xc] sm:%s172] %v187
                %v189 = vld [vmem:[%s179 + $0x20] sm:%s172]
                %190 = vst [vmem:[%s180 + $0x10] sm:%s172] %v189
                %v191 = vld [vmem:[%s179 + $0x28] sm:%s172]
                %192 = vst [vmem:[%s180 + $0x14] sm:%s172] %v191
                %v193 = vld [vmem:[%s179 + $0x30] sm:%s172]
                %194 = vst [vmem:[%s180 + $0x18] sm:%s172] %v193
                %v195 = vld [vmem:[%s179 + $0x38] sm:%s172]
                %196 = vst [vmem:[%s180 + $0x1c] sm:%s172] %v195
                %v197 = vld [vmem:[%s179 + $0x40] sm:%s172]
                %198 = vst [vmem:[%s180 + $0x20] sm:%s172] %v197
                %v199 = vld [vmem:[%s179 + $0x48] sm:%s172]
                %200 = vst [vmem:[%s180 + $0x24] sm:%s172] %v199
                %v201 = vld [vmem:[%s179 + $0x50] sm:%s172]
                %202 = vst [vmem:[%s180 + $0x28] sm:%s172] %v201
                %v203 = vld [vmem:[%s179 + $0x58] sm:%s172]
                %204 = vst [vmem:[%s180 + $0x2c] sm:%s172] %v203
                %v205 = vld [vmem:[%s179 + $0x60] sm:%s172]
                %206 = vst [vmem:[%s180 + $0x30] sm:%s172] %v205
                %v207 = vld [vmem:[%s179 + $0x68] sm:%s172]
                %208 = vst [vmem:[%s180 + $0x34] sm:%s172] %v207
                %v209 = vld [vmem:[%s179 + $0x70] sm:%s172]
                %210 = vst [vmem:[%s180 + $0x38] sm:%s172] %v209
                %v211 = vld [vmem:[%s179 + $0x78] sm:%s172]
                %212 = vst [vmem:[%s180 + $0x3c] sm:%s172] %v211
              $region45: #{classifier_module_forward.1} parent=39 // loop_footer
                %s178 = sadd.s32 1, %s174
              $region46: #{classifier_module_forward.1} parent=39 // loop_footer_branch
                %173 = sbr.rel target = $region42
              $region47: #{classifier_module_forward.1} parent=39 // loop_exit
                _
            $region40: #{classifier_module_forward.1} parent=31 // pred_fallthru
              _
          $region32: #{classifier_module_forward.1} parent=27 // pred_fallthru
            _
          %265 = vnop
        $region28: #{classifier_module_forward.1} parent=23 // pred_fallthru
          _
      $region24: #{classifier_module_forward.1} parent=5 // pred_fallthru
        _
      %p266 = scmp.le.s32.totalorder 1, %s9
      %p267 = scmp.lt.s32.totalorder %s9, 9
      %p268 = pnand %p266, %p267
      %p269 = pneg %p268
      // Predicated region
      $region66: #{classifier_module_forward.1} parent=5 // pred_check
        _
      $region67: #{classifier_module_forward.1} parent=5 // pred_check_branch
        %271 = sbr.rel (%p268) target = $region69
      $region68: #{classifier_module_forward.1} parent=5 // pred_region
        %s272 = ssub.s32 %s9, 1
        %s273 = sand.u32 %s45, 1
        %s274 = sand.u32 %s45, 1
        %s275 = smul.addr %s274, 64
        %s276 = scalar_lea.vmem [#allocation3], %s275
        // Predicated region
        $region70: #{classifier_module_forward.1} parent=68 // pred_check
          %p277 = pneg %p58
        $region71: #{classifier_module_forward.1} parent=68 // pred_check_branch
          %279 = sbr.rel (%p277) target = $region73
        $region72: #{classifier_module_forward.1} parent=68 // pred_region
          _
        $region73: #{classifier_module_forward.1} parent=68 // pred_fallthru
          _
        %s280 = sand.u32 %s45, 1
        %s281 = sand.u32 %s45, 1
        %s282 = smul.addr %s281, 64
        %s283 = scalar_lea.vmem [#allocation3], %s282
        %p284 = pneg %p58
        %p285 = pneg %p55
        %p286 = pneg %p79
        %p287 = pneg %p76
        %p288 = pneg %p100
        %p289 = pneg %p97
        %p290 = pneg %p126
        %p291 = pneg %p123
        %p292 = scmp.lt.s32.totalorder %s19, 1
        %s293 = scalar_select %p292, %s19, 1
        %s294 = smul.addr %s293, 32
        %s295 = smul.addr %s294, 4
        %s296 = scalar_lea.vmem %s3, %s295
        %s297 = smul.u32 8, %s21
        %p298 = scmp.lt.s32.totalorder %s19, 1
        %s299 = scalar_select %p298, %s19, 1
        %s300 = smul.addr %s299, 32
        %s301 = smul.addr %s300, 4
        %s302 = scalar_lea.vmem %s3, %s301
        %p304 = scmp.eq.s32.totalorder %s20, 0
        %p305 = scmp.eq.s32.totalorder %s21, 0
        %p306 = pnand %p304, %p305
        %p307 = pneg %p306
        // Predicated region
        $region74: #{classifier_module_forward.1} parent=68 // pred_check
          _
        $region75: #{classifier_module_forward.1} parent=68 // pred_check_branch
          %309 = sbr.rel (%p306) target = $region77
        $region76: #{classifier_module_forward.1} parent=68 // pred_region
          %310 = vst [vmem:[#allocation2] sm:$0xff] 0.0
          %311 = vst [vmem:[#allocation2 + $0x8] sm:$0xff] 0.0
          %312 = vst [vmem:[#allocation2 + $0x10] sm:$0xff] 0.0
          %313 = vst [vmem:[#allocation2 + $0x18] sm:$0xff] 0.0
          %314 = vst [vmem:[#allocation2 + $0x20] sm:$0xff] 0.0
          %315 = vst [vmem:[#allocation2 + $0x28] sm:$0xff] 0.0
          %316 = vst [vmem:[#allocation2 + $0x30] sm:$0xff] 0.0
          %317 = vst [vmem:[#allocation2 + $0x38] sm:$0xff] 0.0
          %318 = vst [vmem:[#allocation2 + $0x40] sm:$0xff] 0.0
          %319 = vst [vmem:[#allocation2 + $0x48] sm:$0xff] 0.0
          %320 = vst [vmem:[#allocation2 + $0x50] sm:$0xff] 0.0
          %321 = vst [vmem:[#allocation2 + $0x58] sm:$0xff] 0.0
          %322 = vst [vmem:[#allocation2 + $0x60] sm:$0xff] 0.0
          %323 = vst [vmem:[#allocation2 + $0x68] sm:$0xff] 0.0
          %324 = vst [vmem:[#allocation2 + $0x70] sm:$0xff] 0.0
          %325 = vst [vmem:[#allocation2 + $0x78] sm:$0xff] 0.0
          %326 = vst [vmem:[#allocation2 + $0x80] sm:$0xff] 0.0
          %327 = vst [vmem:[#allocation2 + $0x88] sm:$0xff] 0.0
          %328 = vst [vmem:[#allocation2 + $0x90] sm:$0xff] 0.0
          %329 = vst [vmem:[#allocation2 + $0x98] sm:$0xff] 0.0
          %330 = vst [vmem:[#allocation2 + $0xa0] sm:$0xff] 0.0
          %331 = vst [vmem:[#allocation2 + $0xa8] sm:$0xff] 0.0
          %332 = vst [vmem:[#allocation2 + $0xb0] sm:$0xff] 0.0
          %333 = vst [vmem:[#allocation2 + $0xb8] sm:$0xff] 0.0
          %334 = vst [vmem:[#allocation2 + $0xc0] sm:$0xff] 0.0
          %335 = vst [vmem:[#allocation2 + $0xc8] sm:$0xff] 0.0
          %336 = vst [vmem:[#allocation2 + $0xd0] sm:$0xff] 0.0
          %337 = vst [vmem:[#allocation2 + $0xd8] sm:$0xff] 0.0
          %338 = vst [vmem:[#allocation2 + $0xe0] sm:$0xff] 0.0
          %339 = vst [vmem:[#allocation2 + $0xe8] sm:$0xff] 0.0
          %340 = vst [vmem:[#allocation2 + $0xf0] sm:$0xff] 0.0
          %341 = vst [vmem:[#allocation2 + $0xf8] sm:$0xff] 0.0
          %342 = vst [vmem:[#allocation2 + $0x100] sm:$0xff] 0.0
          %343 = vst [vmem:[#allocation2 + $0x108] sm:$0xff] 0.0
          %344 = vst [vmem:[#allocation2 + $0x110] sm:$0xff] 0.0
          %345 = vst [vmem:[#allocation2 + $0x118] sm:$0xff] 0.0
          %346 = vst [vmem:[#allocation2 + $0x120] sm:$0xff] 0.0
          %347 = vst [vmem:[#allocation2 + $0x128] sm:$0xff] 0.0
          %348 = vst [vmem:[#allocation2 + $0x130] sm:$0xff] 0.0
          %349 = vst [vmem:[#allocation2 + $0x138] sm:$0xff] 0.0
          %350 = vst [vmem:[#allocation2 + $0x140] sm:$0xff] 0.0
          %351 = vst [vmem:[#allocation2 + $0x148] sm:$0xff] 0.0
          %352 = vst [vmem:[#allocation2 + $0x150] sm:$0xff] 0.0
          %353 = vst [vmem:[#allocation2 + $0x158] sm:$0xff] 0.0
          %354 = vst [vmem:[#allocation2 + $0x160] sm:$0xff] 0.0
          %355 = vst [vmem:[#allocation2 + $0x168] sm:$0xff] 0.0
          %356 = vst [vmem:[#allocation2 + $0x170] sm:$0xff] 0.0
          %357 = vst [vmem:[#allocation2 + $0x178] sm:$0xff] 0.0
          %358 = vst [vmem:[#allocation2 + $0x180] sm:$0xff] 0.0
          %359 = vst [vmem:[#allocation2 + $0x188] sm:$0xff] 0.0
          %360 = vst [vmem:[#allocation2 + $0x190] sm:$0xff] 0.0
          %361 = vst [vmem:[#allocation2 + $0x198] sm:$0xff] 0.0
          %362 = vst [vmem:[#allocation2 + $0x1a0] sm:$0xff] 0.0
          %363 = vst [vmem:[#allocation2 + $0x1a8] sm:$0xff] 0.0
          %364 = vst [vmem:[#allocation2 + $0x1b0] sm:$0xff] 0.0
          %365 = vst [vmem:[#allocation2 + $0x1b8] sm:$0xff] 0.0
          %366 = vst [vmem:[#allocation2 + $0x1c0] sm:$0xff] 0.0
          %367 = vst [vmem:[#allocation2 + $0x1c8] sm:$0xff] 0.0
          %368 = vst [vmem:[#allocation2 + $0x1d0] sm:$0xff] 0.0
          %369 = vst [vmem:[#allocation2 + $0x1d8] sm:$0xff] 0.0
          %370 = vst [vmem:[#allocation2 + $0x1e0] sm:$0xff] 0.0
          %371 = vst [vmem:[#allocation2 + $0x1e8] sm:$0xff] 0.0
          %372 = vst [vmem:[#allocation2 + $0x1f0] sm:$0xff] 0.0
          %373 = vst [vmem:[#allocation2 + $0x1f8] sm:$0xff] 0.0
          %374 = vst [vmem:[#allocation2 + $0x200] sm:$0xff] 0.0
          %375 = vst [vmem:[#allocation2 + $0x208] sm:$0xff] 0.0
          %376 = vst [vmem:[#allocation2 + $0x210] sm:$0xff] 0.0
          %377 = vst [vmem:[#allocation2 + $0x218] sm:$0xff] 0.0
          %378 = vst [vmem:[#allocation2 + $0x220] sm:$0xff] 0.0
          %379 = vst [vmem:[#allocation2 + $0x228] sm:$0xff] 0.0
          %380 = vst [vmem:[#allocation2 + $0x230] sm:$0xff] 0.0
          %381 = vst [vmem:[#allocation2 + $0x238] sm:$0xff] 0.0
          %382 = vst [vmem:[#allocation2 + $0x240] sm:$0xff] 0.0
          %383 = vst [vmem:[#allocation2 + $0x248] sm:$0xff] 0.0
          %384 = vst [vmem:[#allocation2 + $0x250] sm:$0xff] 0.0
          %385 = vst [vmem:[#allocation2 + $0x258] sm:$0xff] 0.0
          %386 = vst [vmem:[#allocation2 + $0x260] sm:$0xff] 0.0
          %387 = vst [vmem:[#allocation2 + $0x268] sm:$0xff] 0.0
          %388 = vst [vmem:[#allocation2 + $0x270] sm:$0xff] 0.0
          %389 = vst [vmem:[#allocation2 + $0x278] sm:$0xff] 0.0
        $region77: #{classifier_module_forward.1} parent=68 // pred_fallthru
          _
        %v390 = vld [vmem:[%s276] sm:$0xf]
        %v391 = vld [vmem:[%s276 + $0x4] sm:$0xf]
        %v392 = vld [vmem:[%s276 + $0x8] sm:$0xf]
        %v393 = vld [vmem:[%s276 + $0xc] sm:$0xf]
        %v394 = vld [vmem:[%s276 + $0x10] sm:$0xf]
        %v395 = vld [vmem:[%s276 + $0x14] sm:$0xf]
        %v396 = vld [vmem:[%s276 + $0x18] sm:$0xf]
        %v397 = vld [vmem:[%s276 + $0x1c] sm:$0xf]
        %v398 = vld [vmem:[%s276 + $0x20] sm:$0xf]
        %v399 = vld [vmem:[%s276 + $0x24] sm:$0xf]
        %v400 = vld [vmem:[%s276 + $0x28] sm:$0xf]
        %v401 = vld [vmem:[%s276 + $0x2c] sm:$0xf]
        %v402 = vld [vmem:[%s276 + $0x30] sm:$0xf]
        %v403 = vld [vmem:[%s276 + $0x34] sm:$0xf]
        %v404 = vld [vmem:[%s276 + $0x38] sm:$0xf]
        %v405 = vld [vmem:[%s276 + $0x3c] sm:$0xf]
        %s406 = smul.u32 %s21, 8
        %s407 = smul.u32 %s20, 128
        %s408 = sshra.s32 %s407, 3
        %s409 = sand.u32 %s407, 7
        %s410 = smul.u32 %s408, 33
        %s411 = smul.addr %s410, 4
        %s412 = scalar_lea.vmem %s1, %s411
        %v413 = vld [vmem:[%s412] sm:$0xff]
        %v414 = vld [vmem:[%s412 + $0x8] sm:$0xff]
        %v415 = vld [vmem:[%s412 + $0x10] sm:$0xff]
        %v416 = vld [vmem:[%s412 + $0x18] sm:$0xff]
        %v417 = vld [vmem:[%s412 + $0x20] sm:$0xf]
        %v418 = vld [vmem:[%s412 + $0x84] sm:$0xff]
        %v419 = vld [vmem:[%s412 + $0x8c] sm:$0xff]
        %v420 = vld [vmem:[%s412 + $0x94] sm:$0xff]
        %v421 = vld [vmem:[%s412 + $0x9c] sm:$0xff]
        %v422 = vld [vmem:[%s412 + $0xa4] sm:$0xf]
        %v423 = vld [vmem:[%s412 + $0x108] sm:$0xff]
        %v424 = vld [vmem:[%s412 + $0x110] sm:$0xff]
        %v425 = vld [vmem:[%s412 + $0x118] sm:$0xff]
        %v426 = vld [vmem:[%s412 + $0x120] sm:$0xff]
        %v427 = vld [vmem:[%s412 + $0x128] sm:$0xf]
        %v428 = vld [vmem:[%s412 + $0x18c] sm:$0xff]
        %v429 = vld [vmem:[%s412 + $0x194] sm:$0xff]
        %v430 = vld [vmem:[%s412 + $0x19c] sm:$0xff]
        %v431 = vld [vmem:[%s412 + $0x1a4] sm:$0xff]
        %v432 = vld [vmem:[%s412 + $0x1ac] sm:$0xf]
        %v433 = vld [vmem:[%s412 + $0x210] sm:$0xff]
        %v434 = vld [vmem:[%s412 + $0x218] sm:$0xff]
        %v435 = vld [vmem:[%s412 + $0x220] sm:$0xff]
        %v436 = vld [vmem:[%s412 + $0x228] sm:$0xff]
        %v437 = vld [vmem:[%s412 + $0x230] sm:$0xf]
        %v438 = vld [vmem:[%s412 + $0x294] sm:$0xff]
        %v439 = vld [vmem:[%s412 + $0x29c] sm:$0xff]
        %v440 = vld [vmem:[%s412 + $0x2a4] sm:$0xff]
        %v441 = vld [vmem:[%s412 + $0x2ac] sm:$0xff]
        %v442 = vld [vmem:[%s412 + $0x2b4] sm:$0xf]
        %v443 = vld [vmem:[%s412 + $0x318] sm:$0xff]
        %v444 = vld [vmem:[%s412 + $0x320] sm:$0xff]
        %v445 = vld [vmem:[%s412 + $0x328] sm:$0xff]
        %v446 = vld [vmem:[%s412 + $0x330] sm:$0xff]
        %v447 = vld [vmem:[%s412 + $0x338] sm:$0xf]
        %v448 = vld [vmem:[%s412 + $0x39c] sm:$0xff]
        %v449 = vld [vmem:[%s412 + $0x3a4] sm:$0xff]
        %v450 = vld [vmem:[%s412 + $0x3ac] sm:$0xff]
        %v451 = vld [vmem:[%s412 + $0x3b4] sm:$0xff]
        %v452 = vld [vmem:[%s412 + $0x3bc] sm:$0xf]
        %v453 = vld [vmem:[%s412 + $0x420] sm:$0xff]
        %v454 = vld [vmem:[%s412 + $0x428] sm:$0xff]
        %v455 = vld [vmem:[%s412 + $0x430] sm:$0xff]
        %v456 = vld [vmem:[%s412 + $0x438] sm:$0xff]
        %v457 = vld [vmem:[%s412 + $0x440] sm:$0xf]
        %v458 = vld [vmem:[%s412 + $0x4a4] sm:$0xff]
        %v459 = vld [vmem:[%s412 + $0x4ac] sm:$0xff]
        %v460 = vld [vmem:[%s412 + $0x4b4] sm:$0xff]
        %v461 = vld [vmem:[%s412 + $0x4bc] sm:$0xff]
        %v462 = vld [vmem:[%s412 + $0x4c4] sm:$0xf]
        %v463 = vld [vmem:[%s412 + $0x528] sm:$0xff]
        %v464 = vld [vmem:[%s412 + $0x530] sm:$0xff]
        %v465 = vld [vmem:[%s412 + $0x538] sm:$0xff]
        %v466 = vld [vmem:[%s412 + $0x540] sm:$0xff]
        %v467 = vld [vmem:[%s412 + $0x548] sm:$0xf]
        %v468 = vld [vmem:[%s412 + $0x5ac] sm:$0xff]
        %v469 = vld [vmem:[%s412 + $0x5b4] sm:$0xff]
        %v470 = vld [vmem:[%s412 + $0x5bc] sm:$0xff]
        %v471 = vld [vmem:[%s412 + $0x5c4] sm:$0xff]
        %v472 = vld [vmem:[%s412 + $0x5cc] sm:$0xf]
        %v473 = vld [vmem:[%s412 + $0x630] sm:$0xff]
        %v474 = vld [vmem:[%s412 + $0x638] sm:$0xff]
        %v475 = vld [vmem:[%s412 + $0x640] sm:$0xff]
        %v476 = vld [vmem:[%s412 + $0x648] sm:$0xff]
        %v477 = vld [vmem:[%s412 + $0x650] sm:$0xf]
        %v478 = vld [vmem:[%s412 + $0x6b4] sm:$0xff]
        %v479 = vld [vmem:[%s412 + $0x6bc] sm:$0xff]
        %v480 = vld [vmem:[%s412 + $0x6c4] sm:$0xff]
        %v481 = vld [vmem:[%s412 + $0x6cc] sm:$0xff]
        %v482 = vld [vmem:[%s412 + $0x6d4] sm:$0xf]
        %v483 = vld [vmem:[%s412 + $0x738] sm:$0xff]
        %v484 = vld [vmem:[%s412 + $0x740] sm:$0xff]
        %v485 = vld [vmem:[%s412 + $0x748] sm:$0xff]
        %v486 = vld [vmem:[%s412 + $0x750] sm:$0xff]
        %v487 = vld [vmem:[%s412 + $0x758] sm:$0xf]
        %v488 = vld [vmem:[%s412 + $0x7bc] sm:$0xff]
        %v489 = vld [vmem:[%s412 + $0x7c4] sm:$0xff]
        %v490 = vld [vmem:[%s412 + $0x7cc] sm:$0xff]
        %v491 = vld [vmem:[%s412 + $0x7d4] sm:$0xff]
        %v492 = vld [vmem:[%s412 + $0x7dc] sm:$0xf]
        %v509 = vunpack.c.l.b16 %v390
        %v510 = vunpack.c.l.b16 %v391
        %v511 = vunpack.c.l.b16 %v392
        %v512 = vunpack.c.l.b16 %v393
        %v513 = vunpack.c.l.b16 %v394
        %v514 = vunpack.c.l.b16 %v395
        %v515 = vunpack.c.l.b16 %v396
        %v516 = vunpack.c.l.b16 %v397
        %v517 = vunpack.c.l.b16 %v398
        %v518 = vunpack.c.l.b16 %v399
        %v519 = vunpack.c.l.b16 %v400
        %v520 = vunpack.c.l.b16 %v401
        %v521 = vunpack.c.l.b16 %v402
        %v522 = vunpack.c.l.b16 %v403
        %v523 = vunpack.c.l.b16 %v404
        %v524 = vunpack.c.l.b16 %v405
        %v525 = vpack.c.b16 %v510, %v509
        %v526 = vpack.c.b16 %v512, %v511
        %v527 = vpack.c.b16 %v514, %v513
        %v528 = vpack.c.b16 %v516, %v515
        %v529 = vpack.c.b16 %v518, %v517
        %v530 = vpack.c.b16 %v520, %v519
        %v531 = vpack.c.b16 %v522, %v521
        %v532 = vpack.c.b16 %v524, %v523
        %v621 = vunpack.c.l.b16 %v413
        %v622 = vunpack.c.h.b16 %v413
        %v623 = vunpack.c.l.b16 %v414
        %v624 = vunpack.c.h.b16 %v414
        %v625 = vunpack.c.l.b16 %v415
        %v626 = vunpack.c.h.b16 %v415
        %v627 = vunpack.c.l.b16 %v416
        %v628 = vunpack.c.h.b16 %v416
        %v629 = vunpack.c.l.b16 %v417
        %v630 = vunpack.c.l.b16 %v418
        %v631 = vunpack.c.h.b16 %v418
        %v632 = vunpack.c.l.b16 %v419
        %v633 = vunpack.c.h.b16 %v419
        %v634 = vunpack.c.l.b16 %v420
        %v635 = vunpack.c.h.b16 %v420
        %v636 = vunpack.c.l.b16 %v421
        %v637 = vunpack.c.h.b16 %v421
        %v638 = vunpack.c.l.b16 %v422
        %v639 = vunpack.c.l.b16 %v423
        %v640 = vunpack.c.h.b16 %v423
        %v641 = vunpack.c.l.b16 %v424
        %v642 = vunpack.c.h.b16 %v424
        %v643 = vunpack.c.l.b16 %v425
        %v644 = vunpack.c.h.b16 %v425
        %v645 = vunpack.c.l.b16 %v426
        %v646 = vunpack.c.h.b16 %v426
        %v647 = vunpack.c.l.b16 %v427
        %v648 = vunpack.c.l.b16 %v428
        %v649 = vunpack.c.h.b16 %v428
        %v650 = vunpack.c.l.b16 %v429
        %v651 = vunpack.c.h.b16 %v429
        %v652 = vunpack.c.l.b16 %v430
        %v653 = vunpack.c.h.b16 %v430
        %v654 = vunpack.c.l.b16 %v431
        %v655 = vunpack.c.h.b16 %v431
        %v656 = vunpack.c.l.b16 %v432
        %v657 = vunpack.c.l.b16 %v433
        %v658 = vunpack.c.h.b16 %v433
        %v659 = vunpack.c.l.b16 %v434
        %v660 = vunpack.c.h.b16 %v434
        %v661 = vunpack.c.l.b16 %v435
        %v662 = vunpack.c.h.b16 %v435
        %v663 = vunpack.c.l.b16 %v436
        %v664 = vunpack.c.h.b16 %v436
        %v665 = vunpack.c.l.b16 %v437
        %v666 = vunpack.c.l.b16 %v438
        %v667 = vunpack.c.h.b16 %v438
        %v668 = vunpack.c.l.b16 %v439
        %v669 = vunpack.c.h.b16 %v439
        %v670 = vunpack.c.l.b16 %v440
        %v671 = vunpack.c.h.b16 %v440
        %v672 = vunpack.c.l.b16 %v441
        %v673 = vunpack.c.h.b16 %v441
        %v674 = vunpack.c.l.b16 %v442
        %v675 = vunpack.c.l.b16 %v443
        %v676 = vunpack.c.h.b16 %v443
        %v677 = vunpack.c.l.b16 %v444
        %v678 = vunpack.c.h.b16 %v444
        %v679 = vunpack.c.l.b16 %v445
        %v680 = vunpack.c.h.b16 %v445
        %v681 = vunpack.c.l.b16 %v446
        %v682 = vunpack.c.h.b16 %v446
        %v683 = vunpack.c.l.b16 %v447
        %v684 = vunpack.c.l.b16 %v448
        %v685 = vunpack.c.h.b16 %v448
        %v686 = vunpack.c.l.b16 %v449
        %v687 = vunpack.c.h.b16 %v449
        %v688 = vunpack.c.l.b16 %v450
        %v689 = vunpack.c.h.b16 %v450
        %v690 = vunpack.c.l.b16 %v451
        %v691 = vunpack.c.h.b16 %v451
        %v692 = vunpack.c.l.b16 %v452
        %v693 = vunpack.c.l.b16 %v453
        %v694 = vunpack.c.h.b16 %v453
        %v695 = vunpack.c.l.b16 %v454
        %v696 = vunpack.c.h.b16 %v454
        %v697 = vunpack.c.l.b16 %v455
        %v698 = vunpack.c.h.b16 %v455
        %v699 = vunpack.c.l.b16 %v456
        %v700 = vunpack.c.h.b16 %v456
        %v701 = vunpack.c.l.b16 %v457
        %v702 = vunpack.c.l.b16 %v458
        %v703 = vunpack.c.h.b16 %v458
        %v704 = vunpack.c.l.b16 %v459
        %v705 = vunpack.c.h.b16 %v459
        %v706 = vunpack.c.l.b16 %v460
        %v707 = vunpack.c.h.b16 %v460
        %v708 = vunpack.c.l.b16 %v461
        %v709 = vunpack.c.h.b16 %v461
        %v710 = vunpack.c.l.b16 %v462
        %v711 = vunpack.c.l.b16 %v463
        %v712 = vunpack.c.h.b16 %v463
        %v713 = vunpack.c.l.b16 %v464
        %v714 = vunpack.c.h.b16 %v464
        %v715 = vunpack.c.l.b16 %v465
        %v716 = vunpack.c.h.b16 %v465
        %v717 = vunpack.c.l.b16 %v466
        %v718 = vunpack.c.h.b16 %v466
        %v719 = vunpack.c.l.b16 %v467
        %v720 = vunpack.c.l.b16 %v468
        %v721 = vunpack.c.h.b16 %v468
        %v722 = vunpack.c.l.b16 %v469
        %v723 = vunpack.c.h.b16 %v469
        %v724 = vunpack.c.l.b16 %v470
        %v725 = vunpack.c.h.b16 %v470
        %v726 = vunpack.c.l.b16 %v471
        %v727 = vunpack.c.h.b16 %v471
        %v728 = vunpack.c.l.b16 %v472
        %v729 = vunpack.c.l.b16 %v473
        %v730 = vunpack.c.h.b16 %v473
        %v731 = vunpack.c.l.b16 %v474
        %v732 = vunpack.c.h.b16 %v474
        %v733 = vunpack.c.l.b16 %v475
        %v734 = vunpack.c.h.b16 %v475
        %v735 = vunpack.c.l.b16 %v476
        %v736 = vunpack.c.h.b16 %v476
        %v737 = vunpack.c.l.b16 %v477
        %v738 = vunpack.c.l.b16 %v478
        %v739 = vunpack.c.h.b16 %v478
        %v740 = vunpack.c.l.b16 %v479
        %v741 = vunpack.c.h.b16 %v479
        %v742 = vunpack.c.l.b16 %v480
        %v743 = vunpack.c.h.b16 %v480
        %v744 = vunpack.c.l.b16 %v481
        %v745 = vunpack.c.h.b16 %v481
        %v746 = vunpack.c.l.b16 %v482
        %v747 = vunpack.c.l.b16 %v483
        %v748 = vunpack.c.h.b16 %v483
        %v749 = vunpack.c.l.b16 %v484
        %v750 = vunpack.c.h.b16 %v484
        %v751 = vunpack.c.l.b16 %v485
        %v752 = vunpack.c.h.b16 %v485
        %v753 = vunpack.c.l.b16 %v486
        %v754 = vunpack.c.h.b16 %v486
        %v755 = vunpack.c.l.b16 %v487
        %v756 = vunpack.c.l.b16 %v488
        %v757 = vunpack.c.h.b16 %v488
        %v758 = vunpack.c.l.b16 %v489
        %v759 = vunpack.c.h.b16 %v489
        %v760 = vunpack.c.l.b16 %v490
        %v761 = vunpack.c.h.b16 %v490
        %v762 = vunpack.c.l.b16 %v491
        %v763 = vunpack.c.h.b16 %v491
        %v764 = vunpack.c.l.b16 %v492
        %v765 = vpack.c.b16 %v630, %v621
        %v766 = vpack.c.b16 %v631, %v622
        %v767 = vpack.c.b16 %v632, %v623
        %v768 = vpack.c.b16 %v633, %v624
        %v769 = vpack.c.b16 %v634, %v625
        %v770 = vpack.c.b16 %v635, %v626
        %v771 = vpack.c.b16 %v636, %v627
        %v772 = vpack.c.b16 %v637, %v628
        %v773 = vpack.c.b16 %v638, %v629
        %v774 = vpack.c.b16 %v648, %v639
        %v775 = vpack.c.b16 %v649, %v640
        %v776 = vpack.c.b16 %v650, %v641
        %v777 = vpack.c.b16 %v651, %v642
        %v778 = vpack.c.b16 %v652, %v643
        %v779 = vpack.c.b16 %v653, %v644
        %v780 = vpack.c.b16 %v654, %v645
        %v781 = vpack.c.b16 %v655, %v646
        %v782 = vpack.c.b16 %v656, %v647
        %v783 = vpack.c.b16 %v666, %v657
        %v784 = vpack.c.b16 %v667, %v658
        %v785 = vpack.c.b16 %v668, %v659
        %v786 = vpack.c.b16 %v669, %v660
        %v787 = vpack.c.b16 %v670, %v661
        %v788 = vpack.c.b16 %v671, %v662
        %v789 = vpack.c.b16 %v672, %v663
        %v790 = vpack.c.b16 %v673, %v664
        %v791 = vpack.c.b16 %v674, %v665
        %v792 = vpack.c.b16 %v684, %v675
        %v793 = vpack.c.b16 %v685, %v676
        %v794 = vpack.c.b16 %v686, %v677
        %v795 = vpack.c.b16 %v687, %v678
        %v796 = vpack.c.b16 %v688, %v679
        %v797 = vpack.c.b16 %v689, %v680
        %v798 = vpack.c.b16 %v690, %v681
        %v799 = vpack.c.b16 %v691, %v682
        %v800 = vpack.c.b16 %v692, %v683
        %v801 = vpack.c.b16 %v702, %v693
        %v802 = vpack.c.b16 %v703, %v694
        %v803 = vpack.c.b16 %v704, %v695
        %v804 = vpack.c.b16 %v705, %v696
        %v805 = vpack.c.b16 %v706, %v697
        %v806 = vpack.c.b16 %v707, %v698
        %v807 = vpack.c.b16 %v708, %v699
        %v808 = vpack.c.b16 %v709, %v700
        %v809 = vpack.c.b16 %v710, %v701
        %v810 = vpack.c.b16 %v720, %v711
        %v811 = vpack.c.b16 %v721, %v712
        %v812 = vpack.c.b16 %v722, %v713
        %v813 = vpack.c.b16 %v723, %v714
        %v814 = vpack.c.b16 %v724, %v715
        %v815 = vpack.c.b16 %v725, %v716
        %v816 = vpack.c.b16 %v726, %v717
        %v817 = vpack.c.b16 %v727, %v718
        %v818 = vpack.c.b16 %v728, %v719
        %v819 = vpack.c.b16 %v738, %v729
        %v820 = vpack.c.b16 %v739, %v730
        %v821 = vpack.c.b16 %v740, %v731
        %v822 = vpack.c.b16 %v741, %v732
        %v823 = vpack.c.b16 %v742, %v733
        %v824 = vpack.c.b16 %v743, %v734
        %v825 = vpack.c.b16 %v744, %v735
        %v826 = vpack.c.b16 %v745, %v736
        %v827 = vpack.c.b16 %v746, %v737
        %v828 = vpack.c.b16 %v756, %v747
        %v829 = vpack.c.b16 %v757, %v748
        %v830 = vpack.c.b16 %v758, %v749
        %v831 = vpack.c.b16 %v759, %v750
        %v832 = vpack.c.b16 %v760, %v751
        %v833 = vpack.c.b16 %v761, %v752
        %v834 = vpack.c.b16 %v762, %v753
        %v835 = vpack.c.b16 %v763, %v754
        %v836 = vpack.c.b16 %v764, %v755
        %909 = vmatprep.subr.bf16.mxu0 %v829
        %910 = vmatpush1.bf16.msra.mxu0 %v828
        %911 = vmatprep.subr.bf16.mxu0 %v820
        %912 = vmatpush1.bf16.msra.mxu0 %v819
        %913 = vmatprep.subr.bf16.mxu0 %v811
        %914 = vmatpush1.bf16.msra.mxu0 %v810
        %915 = vmatprep.subr.bf16.mxu0 %v802
        %916 = vmatpush1.bf16.msra.mxu0 %v801
        %917 = vmatprep.subr.bf16.mxu0 %v793
        %918 = vmatpush1.bf16.msra.mxu0 %v792
        %919 = vmatprep.subr.bf16.mxu0 %v784
        %920 = vmatpush1.bf16.msra.mxu0 %v783
        %921 = vmatprep.subr.bf16.mxu0 %v775
        %922 = vmatpush1.bf16.msra.mxu0 %v774
        %923 = vmatprep.subr.bf16.mxu0 %v766
        %924 = vmatpush1.bf16.msra.mxu0 %v765
        %925 = vmatprep.subr.bf16.mxu0 0
        %926 = vmatpush2.bf16.msra.mxu0 0
        %927 = vmatprep.subr.bf16.mxu0 0
        %928 = vmatpush2.bf16.msra.mxu0 0
        %929 = vmatprep.subr.bf16.mxu0 0
        %930 = vmatpush2.bf16.msra.mxu0 0
        %931 = vmatprep.subr.bf16.mxu0 0
        %932 = vmatpush2.bf16.msra.mxu0 0
        %933 = vmatprep.subr.bf16.mxu0 0
        %934 = vmatpush2.bf16.msra.mxu0 0
        %935 = vmatprep.subr.bf16.mxu0 0
        %936 = vmatpush2.bf16.msra.mxu0 0
        %937 = vmatprep.subr.bf16.mxu0 0
        %938 = vmatpush2.bf16.msra.mxu0 0
        %939 = vmatprep.subr.bf16.mxu0 0
        %940 = vmatpush2.bf16.msra.mxu0 0
        %941 = vmatprep.mubr.bf16.mxu0 0
        %942 = vmatmul.mubr.bf16.gmra.mxu0 %v525
        %v943 = vpop.f32.mrf.mxu0
        %v944 = vadd.f32 0.0, %v943
        %v945 = vpop.f32.mrf.mxu0
        %v946 = vadd.f32 0.0, %v945
        %v947 = vpop.f32.mrf.mxu0
        %v948 = vadd.f32 0.0, %v947
        %v949 = vpop.f32.mrf.mxu0
        %v950 = vadd.f32 0.0, %v949
        %951 = vmatprep.mubr.bf16.mxu0 0
        %952 = vmatmul.mubr.bf16.gmra.mxu0 %v526
        %v953 = vpop.f32.mrf.mxu0
        %v954 = vadd.f32 0.0, %v953
        %v955 = vpop.f32.mrf.mxu0
        %v956 = vadd.f32 0.0, %v955
        %v957 = vpop.f32.mrf.mxu0
        %v958 = vadd.f32 0.0, %v957
        %v959 = vpop.f32.mrf.mxu0
        %v960 = vadd.f32 0.0, %v959
        %961 = vmatprep.mubr.bf16.mxu0 0
        %962 = vmatmul.mubr.bf16.gmra.mxu0 %v527
        %v963 = vpop.f32.mrf.mxu0
        %v964 = vadd.f32 0.0, %v963
        %v965 = vpop.f32.mrf.mxu0
        %v966 = vadd.f32 0.0, %v965
        %v967 = vpop.f32.mrf.mxu0
        %v968 = vadd.f32 0.0, %v967
        %v969 = vpop.f32.mrf.mxu0
        %v970 = vadd.f32 0.0, %v969
        %971 = vmatprep.mubr.bf16.mxu0 0
        %972 = vmatmul.mubr.bf16.gmra.mxu0 %v528
        %v973 = vpop.f32.mrf.mxu0
        %v974 = vadd.f32 0.0, %v973
        %v975 = vpop.f32.mrf.mxu0
        %v976 = vadd.f32 0.0, %v975
        %v977 = vpop.f32.mrf.mxu0
        %v978 = vadd.f32 0.0, %v977
        %v979 = vpop.f32.mrf.mxu0
        %v980 = vadd.f32 0.0, %v979
        %981 = vmatprep.mubr.bf16.mxu0 0
        %982 = vmatmul.mubr.bf16.gmra.mxu0 %v529
        %v983 = vpop.f32.mrf.mxu0
        %v984 = vadd.f32 0.0, %v983
        %v985 = vpop.f32.mrf.mxu0
        %v986 = vadd.f32 0.0, %v985
        %v987 = vpop.f32.mrf.mxu0
        %v988 = vadd.f32 0.0, %v987
        %v989 = vpop.f32.mrf.mxu0
        %v990 = vadd.f32 0.0, %v989
        %991 = vmatprep.mubr.bf16.mxu0 0
        %992 = vmatmul.mubr.bf16.gmra.mxu0 %v530
        %v993 = vpop.f32.mrf.mxu0
        %v994 = vadd.f32 0.0, %v993
        %v995 = vpop.f32.mrf.mxu0
        %v996 = vadd.f32 0.0, %v995
        %v997 = vpop.f32.mrf.mxu0
        %v998 = vadd.f32 0.0, %v997
        %v999 = vpop.f32.mrf.mxu0
        %v1000 = vadd.f32 0.0, %v999
        %1001 = vmatprep.mubr.bf16.mxu0 0
        %1002 = vmatmul.mubr.bf16.gmra.mxu0 %v531
        %v1003 = vpop.f32.mrf.mxu0
        %v1004 = vadd.f32 0.0, %v1003
        %v1005 = vpop.f32.mrf.mxu0
        %v1006 = vadd.f32 0.0, %v1005
        %v1007 = vpop.f32.mrf.mxu0
        %v1008 = vadd.f32 0.0, %v1007
        %v1009 = vpop.f32.mrf.mxu0
        %v1010 = vadd.f32 0.0, %v1009
        %1011 = vmatprep.mubr.bf16.mxu0 0
        %1012 = vmatmul.mubr.bf16.gmra.mxu0 %v532
        %v1013 = vpop.f32.mrf.mxu0
        %v1014 = vadd.f32 0.0, %v1013
        %v1015 = vpop.f32.mrf.mxu0
        %v1016 = vadd.f32 0.0, %v1015
        %v1017 = vpop.f32.mrf.mxu0
        %v1018 = vadd.f32 0.0, %v1017
        %v1019 = vpop.f32.mrf.mxu0
        %v1020 = vadd.f32 0.0, %v1019
        %1021 = vdwg.mxu0
        %1022 = vmatprep.subr.bf16.mxu0 %v831
        %1023 = vmatpush1.bf16.msra.mxu0 %v830
        %1024 = vmatprep.subr.bf16.mxu0 %v822
        %1025 = vmatpush1.bf16.msra.mxu0 %v821
        %1026 = vmatprep.subr.bf16.mxu0 %v813
        %1027 = vmatpush1.bf16.msra.mxu0 %v812
        %1028 = vmatprep.subr.bf16.mxu0 %v804
        %1029 = vmatpush1.bf16.msra.mxu0 %v803
        %1030 = vmatprep.subr.bf16.mxu0 %v795
        %1031 = vmatpush1.bf16.msra.mxu0 %v794
        %1032 = vmatprep.subr.bf16.mxu0 %v786
        %1033 = vmatpush1.bf16.msra.mxu0 %v785
        %1034 = vmatprep.subr.bf16.mxu0 %v777
        %1035 = vmatpush1.bf16.msra.mxu0 %v776
        %1036 = vmatprep.subr.bf16.mxu0 %v768
        %1037 = vmatpush1.bf16.msra.mxu0 %v767
        %1038 = vmatprep.subr.bf16.mxu0 0
        %1039 = vmatpush2.bf16.msra.mxu0 0
        %1040 = vmatprep.subr.bf16.mxu0 0
        %1041 = vmatpush2.bf16.msra.mxu0 0
        %1042 = vmatprep.subr.bf16.mxu0 0
        %1043 = vmatpush2.bf16.msra.mxu0 0
        %1044 = vmatprep.subr.bf16.mxu0 0
        %1045 = vmatpush2.bf16.msra.mxu0 0
        %1046 = vmatprep.subr.bf16.mxu0 0
        %1047 = vmatpush2.bf16.msra.mxu0 0
        %1048 = vmatprep.subr.bf16.mxu0 0
        %1049 = vmatpush2.bf16.msra.mxu0 0
        %1050 = vmatprep.subr.bf16.mxu0 0
        %1051 = vmatpush2.bf16.msra.mxu0 0
        %1052 = vmatprep.subr.bf16.mxu0 0
        %1053 = vmatpush2.bf16.msra.mxu0 0
        %1054 = vmatprep.mubr.bf16.mxu0 0
        %1055 = vmatmul.mubr.bf16.gmra.mxu0 %v525
        %v1056 = vpop.f32.mrf.mxu0
        %v1057 = vadd.f32 0.0, %v1056
        %v1058 = vpop.f32.mrf.mxu0
        %v1059 = vadd.f32 0.0, %v1058
        %v1060 = vpop.f32.mrf.mxu0
        %v1061 = vadd.f32 0.0, %v1060
        %v1062 = vpop.f32.mrf.mxu0
        %v1063 = vadd.f32 0.0, %v1062
        %1064 = vmatprep.mubr.bf16.mxu0 0
        %1065 = vmatmul.mubr.bf16.gmra.mxu0 %v526
        %v1066 = vpop.f32.mrf.mxu0
        %v1067 = vadd.f32 0.0, %v1066
        %v1068 = vpop.f32.mrf.mxu0
        %v1069 = vadd.f32 0.0, %v1068
        %v1070 = vpop.f32.mrf.mxu0
        %v1071 = vadd.f32 0.0, %v1070
        %v1072 = vpop.f32.mrf.mxu0
        %v1073 = vadd.f32 0.0, %v1072
        %1074 = vmatprep.mubr.bf16.mxu0 0
        %1075 = vmatmul.mubr.bf16.gmra.mxu0 %v527
        %v1076 = vpop.f32.mrf.mxu0
        %v1077 = vadd.f32 0.0, %v1076
        %v1078 = vpop.f32.mrf.mxu0
        %v1079 = vadd.f32 0.0, %v1078
        %v1080 = vpop.f32.mrf.mxu0
        %v1081 = vadd.f32 0.0, %v1080
        %v1082 = vpop.f32.mrf.mxu0
        %v1083 = vadd.f32 0.0, %v1082
        %1084 = vmatprep.mubr.bf16.mxu0 0
        %1085 = vmatmul.mubr.bf16.gmra.mxu0 %v528
        %v1086 = vpop.f32.mrf.mxu0
        %v1087 = vadd.f32 0.0, %v1086
        %v1088 = vpop.f32.mrf.mxu0
        %v1089 = vadd.f32 0.0, %v1088
        %v1090 = vpop.f32.mrf.mxu0
        %v1091 = vadd.f32 0.0, %v1090
        %v1092 = vpop.f32.mrf.mxu0
        %v1093 = vadd.f32 0.0, %v1092
        %1094 = vmatprep.mubr.bf16.mxu0 0
        %1095 = vmatmul.mubr.bf16.gmra.mxu0 %v529
        %v1096 = vpop.f32.mrf.mxu0
        %v1097 = vadd.f32 0.0, %v1096
        %v1098 = vpop.f32.mrf.mxu0
        %v1099 = vadd.f32 0.0, %v1098
        %v1100 = vpop.f32.mrf.mxu0
        %v1101 = vadd.f32 0.0, %v1100
        %v1102 = vpop.f32.mrf.mxu0
        %v1103 = vadd.f32 0.0, %v1102
        %1104 = vmatprep.mubr.bf16.mxu0 0
        %1105 = vmatmul.mubr.bf16.gmra.mxu0 %v530
        %v1106 = vpop.f32.mrf.mxu0
        %v1107 = vadd.f32 0.0, %v1106
        %v1108 = vpop.f32.mrf.mxu0
        %v1109 = vadd.f32 0.0, %v1108
        %v1110 = vpop.f32.mrf.mxu0
        %v1111 = vadd.f32 0.0, %v1110
        %v1112 = vpop.f32.mrf.mxu0
        %v1113 = vadd.f32 0.0, %v1112
        %1114 = vmatprep.mubr.bf16.mxu0 0
        %1115 = vmatmul.mubr.bf16.gmra.mxu0 %v531
        %v1116 = vpop.f32.mrf.mxu0
        %v1117 = vadd.f32 0.0, %v1116
        %v1118 = vpop.f32.mrf.mxu0
        %v1119 = vadd.f32 0.0, %v1118
        %v1120 = vpop.f32.mrf.mxu0
        %v1121 = vadd.f32 0.0, %v1120
        %v1122 = vpop.f32.mrf.mxu0
        %v1123 = vadd.f32 0.0, %v1122
        %1124 = vmatprep.mubr.bf16.mxu0 0
        %1125 = vmatmul.mubr.bf16.gmra.mxu0 %v532
        %v1126 = vpop.f32.mrf.mxu0
        %v1127 = vadd.f32 0.0, %v1126
        %v1128 = vpop.f32.mrf.mxu0
        %v1129 = vadd.f32 0.0, %v1128
        %v1130 = vpop.f32.mrf.mxu0
        %v1131 = vadd.f32 0.0, %v1130
        %v1132 = vpop.f32.mrf.mxu0
        %v1133 = vadd.f32 0.0, %v1132
        %1134 = vdwg.mxu0
        %1135 = vmatprep.subr.bf16.mxu0 %v833
        %1136 = vmatpush1.bf16.msra.mxu0 %v832
        %1137 = vmatprep.subr.bf16.mxu0 %v824
        %1138 = vmatpush1.bf16.msra.mxu0 %v823
        %1139 = vmatprep.subr.bf16.mxu0 %v815
        %1140 = vmatpush1.bf16.msra.mxu0 %v814
        %1141 = vmatprep.subr.bf16.mxu0 %v806
        %1142 = vmatpush1.bf16.msra.mxu0 %v805
        %1143 = vmatprep.subr.bf16.mxu0 %v797
        %1144 = vmatpush1.bf16.msra.mxu0 %v796
        %1145 = vmatprep.subr.bf16.mxu0 %v788
        %1146 = vmatpush1.bf16.msra.mxu0 %v787
        %1147 = vmatprep.subr.bf16.mxu0 %v779
        %1148 = vmatpush1.bf16.msra.mxu0 %v778
        %1149 = vmatprep.subr.bf16.mxu0 %v770
        %1150 = vmatpush1.bf16.msra.mxu0 %v769
        %1151 = vmatprep.subr.bf16.mxu0 0
        %1152 = vmatpush2.bf16.msra.mxu0 0
        %1153 = vmatprep.subr.bf16.mxu0 0
        %1154 = vmatpush2.bf16.msra.mxu0 0
        %1155 = vmatprep.subr.bf16.mxu0 0
        %1156 = vmatpush2.bf16.msra.mxu0 0
        %1157 = vmatprep.subr.bf16.mxu0 0
        %1158 = vmatpush2.bf16.msra.mxu0 0
        %1159 = vmatprep.subr.bf16.mxu0 0
        %1160 = vmatpush2.bf16.msra.mxu0 0
        %1161 = vmatprep.subr.bf16.mxu0 0
        %1162 = vmatpush2.bf16.msra.mxu0 0
        %1163 = vmatprep.subr.bf16.mxu0 0
        %1164 = vmatpush2.bf16.msra.mxu0 0
        %1165 = vmatprep.subr.bf16.mxu0 0
        %1166 = vmatpush2.bf16.msra.mxu0 0
        %1167 = vmatprep.mubr.bf16.mxu0 0
        %1168 = vmatmul.mubr.bf16.gmra.mxu0 %v525
        %v1169 = vpop.f32.mrf.mxu0
        %v1170 = vadd.f32 0.0, %v1169
        %v1171 = vpop.f32.mrf.mxu0
        %v1172 = vadd.f32 0.0, %v1171
        %v1173 = vpop.f32.mrf.mxu0
        %v1174 = vadd.f32 0.0, %v1173
        %v1175 = vpop.f32.mrf.mxu0
        %v1176 = vadd.f32 0.0, %v1175
        %1177 = vmatprep.mubr.bf16.mxu0 0
        %1178 = vmatmul.mubr.bf16.gmra.mxu0 %v526
        %v1179 = vpop.f32.mrf.mxu0
        %v1180 = vadd.f32 0.0, %v1179
        %v1181 = vpop.f32.mrf.mxu0
        %v1182 = vadd.f32 0.0, %v1181
        %v1183 = vpop.f32.mrf.mxu0
        %v1184 = vadd.f32 0.0, %v1183
        %v1185 = vpop.f32.mrf.mxu0
        %v1186 = vadd.f32 0.0, %v1185
        %1187 = vmatprep.mubr.bf16.mxu0 0
        %1188 = vmatmul.mubr.bf16.gmra.mxu0 %v527
        %v1189 = vpop.f32.mrf.mxu0
        %v1190 = vadd.f32 0.0, %v1189
        %v1191 = vpop.f32.mrf.mxu0
        %v1192 = vadd.f32 0.0, %v1191
        %v1193 = vpop.f32.mrf.mxu0
        %v1194 = vadd.f32 0.0, %v1193
        %v1195 = vpop.f32.mrf.mxu0
        %v1196 = vadd.f32 0.0, %v1195
        %1197 = vmatprep.mubr.bf16.mxu0 0
        %1198 = vmatmul.mubr.bf16.gmra.mxu0 %v528
        %v1199 = vpop.f32.mrf.mxu0
        %v1200 = vadd.f32 0.0, %v1199
        %v1201 = vpop.f32.mrf.mxu0
        %v1202 = vadd.f32 0.0, %v1201
        %v1203 = vpop.f32.mrf.mxu0
        %v1204 = vadd.f32 0.0, %v1203
        %v1205 = vpop.f32.mrf.mxu0
        %v1206 = vadd.f32 0.0, %v1205
        %1207 = vmatprep.mubr.bf16.mxu0 0
        %1208 = vmatmul.mubr.bf16.gmra.mxu0 %v529
        %v1209 = vpop.f32.mrf.mxu0
        %v1210 = vadd.f32 0.0, %v1209
        %v1211 = vpop.f32.mrf.mxu0
        %v1212 = vadd.f32 0.0, %v1211
        %v1213 = vpop.f32.mrf.mxu0
        %v1214 = vadd.f32 0.0, %v1213
        %v1215 = vpop.f32.mrf.mxu0
        %v1216 = vadd.f32 0.0, %v1215
        %1217 = vmatprep.mubr.bf16.mxu0 0
        %1218 = vmatmul.mubr.bf16.gmra.mxu0 %v530
        %v1219 = vpop.f32.mrf.mxu0
        %v1220 = vadd.f32 0.0, %v1219
        %v1221 = vpop.f32.mrf.mxu0
        %v1222 = vadd.f32 0.0, %v1221
        %v1223 = vpop.f32.mrf.mxu0
        %v1224 = vadd.f32 0.0, %v1223
        %v1225 = vpop.f32.mrf.mxu0
        %v1226 = vadd.f32 0.0, %v1225
        %1227 = vmatprep.mubr.bf16.mxu0 0
        %1228 = vmatmul.mubr.bf16.gmra.mxu0 %v531
        %v1229 = vpop.f32.mrf.mxu0
        %v1230 = vadd.f32 0.0, %v1229
        %v1231 = vpop.f32.mrf.mxu0
        %v1232 = vadd.f32 0.0, %v1231
        %v1233 = vpop.f32.mrf.mxu0
        %v1234 = vadd.f32 0.0, %v1233
        %v1235 = vpop.f32.mrf.mxu0
        %v1236 = vadd.f32 0.0, %v1235
        %1237 = vmatprep.mubr.bf16.mxu0 0
        %1238 = vmatmul.mubr.bf16.gmra.mxu0 %v532
        %v1239 = vpop.f32.mrf.mxu0
        %v1240 = vadd.f32 0.0, %v1239
        %v1241 = vpop.f32.mrf.mxu0
        %v1242 = vadd.f32 0.0, %v1241
        %v1243 = vpop.f32.mrf.mxu0
        %v1244 = vadd.f32 0.0, %v1243
        %v1245 = vpop.f32.mrf.mxu0
        %v1246 = vadd.f32 0.0, %v1245
        %1247 = vdwg.mxu0
        %1248 = vmatprep.subr.bf16.mxu0 %v835
        %1249 = vmatpush1.bf16.msra.mxu0 %v834
        %1250 = vmatprep.subr.bf16.mxu0 %v826
        %1251 = vmatpush1.bf16.msra.mxu0 %v825
        %1252 = vmatprep.subr.bf16.mxu0 %v817
        %1253 = vmatpush1.bf16.msra.mxu0 %v816
        %1254 = vmatprep.subr.bf16.mxu0 %v808
        %1255 = vmatpush1.bf16.msra.mxu0 %v807
        %1256 = vmatprep.subr.bf16.mxu0 %v799
        %1257 = vmatpush1.bf16.msra.mxu0 %v798
        %1258 = vmatprep.subr.bf16.mxu0 %v790
        %1259 = vmatpush1.bf16.msra.mxu0 %v789
        %1260 = vmatprep.subr.bf16.mxu0 %v781
        %1261 = vmatpush1.bf16.msra.mxu0 %v780
        %1262 = vmatprep.subr.bf16.mxu0 %v772
        %1263 = vmatpush1.bf16.msra.mxu0 %v771
        %1264 = vmatprep.subr.bf16.mxu0 0
        %1265 = vmatpush2.bf16.msra.mxu0 0
        %1266 = vmatprep.subr.bf16.mxu0 0
        %1267 = vmatpush2.bf16.msra.mxu0 0
        %1268 = vmatprep.subr.bf16.mxu0 0
        %1269 = vmatpush2.bf16.msra.mxu0 0
        %1270 = vmatprep.subr.bf16.mxu0 0
        %1271 = vmatpush2.bf16.msra.mxu0 0
        %1272 = vmatprep.subr.bf16.mxu0 0
        %1273 = vmatpush2.bf16.msra.mxu0 0
        %1274 = vmatprep.subr.bf16.mxu0 0
        %1275 = vmatpush2.bf16.msra.mxu0 0
        %1276 = vmatprep.subr.bf16.mxu0 0
        %1277 = vmatpush2.bf16.msra.mxu0 0
        %1278 = vmatprep.subr.bf16.mxu0 0
        %1279 = vmatpush2.bf16.msra.mxu0 0
        %1280 = vmatprep.mubr.bf16.mxu0 0
        %1281 = vmatmul.mubr.bf16.gmra.mxu0 %v525
        %v1282 = vpop.f32.mrf.mxu0
        %v1283 = vadd.f32 0.0, %v1282
        %v1284 = vpop.f32.mrf.mxu0
        %v1285 = vadd.f32 0.0, %v1284
        %v1286 = vpop.f32.mrf.mxu0
        %v1287 = vadd.f32 0.0, %v1286
        %v1288 = vpop.f32.mrf.mxu0
        %v1289 = vadd.f32 0.0, %v1288
        %1290 = vmatprep.mubr.bf16.mxu0 0
        %1291 = vmatmul.mubr.bf16.gmra.mxu0 %v526
        %v1292 = vpop.f32.mrf.mxu0
        %v1293 = vadd.f32 0.0, %v1292
        %v1294 = vpop.f32.mrf.mxu0
        %v1295 = vadd.f32 0.0, %v1294
        %v1296 = vpop.f32.mrf.mxu0
        %v1297 = vadd.f32 0.0, %v1296
        %v1298 = vpop.f32.mrf.mxu0
        %v1299 = vadd.f32 0.0, %v1298
        %1300 = vmatprep.mubr.bf16.mxu0 0
        %1301 = vmatmul.mubr.bf16.gmra.mxu0 %v527
        %v1302 = vpop.f32.mrf.mxu0
        %v1303 = vadd.f32 0.0, %v1302
        %v1304 = vpop.f32.mrf.mxu0
        %v1305 = vadd.f32 0.0, %v1304
        %v1306 = vpop.f32.mrf.mxu0
        %v1307 = vadd.f32 0.0, %v1306
        %v1308 = vpop.f32.mrf.mxu0
        %v1309 = vadd.f32 0.0, %v1308
        %1310 = vmatprep.mubr.bf16.mxu0 0
        %1311 = vmatmul.mubr.bf16.gmra.mxu0 %v528
        %v1312 = vpop.f32.mrf.mxu0
        %v1313 = vadd.f32 0.0, %v1312
        %v1314 = vpop.f32.mrf.mxu0
        %v1315 = vadd.f32 0.0, %v1314
        %v1316 = vpop.f32.mrf.mxu0
        %v1317 = vadd.f32 0.0, %v1316
        %v1318 = vpop.f32.mrf.mxu0
        %v1319 = vadd.f32 0.0, %v1318
        %1320 = vmatprep.mubr.bf16.mxu0 0
        %1321 = vmatmul.mubr.bf16.gmra.mxu0 %v529
        %v1322 = vpop.f32.mrf.mxu0
        %v1323 = vadd.f32 0.0, %v1322
        %v1324 = vpop.f32.mrf.mxu0
        %v1325 = vadd.f32 0.0, %v1324
        %v1326 = vpop.f32.mrf.mxu0
        %v1327 = vadd.f32 0.0, %v1326
        %v1328 = vpop.f32.mrf.mxu0
        %v1329 = vadd.f32 0.0, %v1328
        %1330 = vmatprep.mubr.bf16.mxu0 0
        %1331 = vmatmul.mubr.bf16.gmra.mxu0 %v530
        %v1332 = vpop.f32.mrf.mxu0
        %v1333 = vadd.f32 0.0, %v1332
        %v1334 = vpop.f32.mrf.mxu0
        %v1335 = vadd.f32 0.0, %v1334
        %v1336 = vpop.f32.mrf.mxu0
        %v1337 = vadd.f32 0.0, %v1336
        %v1338 = vpop.f32.mrf.mxu0
        %v1339 = vadd.f32 0.0, %v1338
        %1340 = vmatprep.mubr.bf16.mxu0 0
        %1341 = vmatmul.mubr.bf16.gmra.mxu0 %v531
        %v1342 = vpop.f32.mrf.mxu0
        %v1343 = vadd.f32 0.0, %v1342
        %v1344 = vpop.f32.mrf.mxu0
        %v1345 = vadd.f32 0.0, %v1344
        %v1346 = vpop.f32.mrf.mxu0
        %v1347 = vadd.f32 0.0, %v1346
        %v1348 = vpop.f32.mrf.mxu0
        %v1349 = vadd.f32 0.0, %v1348
        %1350 = vmatprep.mubr.bf16.mxu0 0
        %1351 = vmatmul.mubr.bf16.gmra.mxu0 %v532
        %v1352 = vpop.f32.mrf.mxu0
        %v1353 = vadd.f32 0.0, %v1352
        %v1354 = vpop.f32.mrf.mxu0
        %v1355 = vadd.f32 0.0, %v1354
        %v1356 = vpop.f32.mrf.mxu0
        %v1357 = vadd.f32 0.0, %v1356
        %v1358 = vpop.f32.mrf.mxu0
        %v1359 = vadd.f32 0.0, %v1358
        %1360 = vdwg.mxu0
        %1361 = vmatprep.subr.bf16.mxu0 0
        %1362 = vmatpush1.bf16.msra.mxu0 %v836
        %1363 = vmatprep.subr.bf16.mxu0 0
        %1364 = vmatpush1.bf16.msra.mxu0 %v827
        %1365 = vmatprep.subr.bf16.mxu0 0
        %1366 = vmatpush1.bf16.msra.mxu0 %v818
        %1367 = vmatprep.subr.bf16.mxu0 0
        %1368 = vmatpush1.bf16.msra.mxu0 %v809
        %1369 = vmatprep.subr.bf16.mxu0 0
        %1370 = vmatpush1.bf16.msra.mxu0 %v800
        %1371 = vmatprep.subr.bf16.mxu0 0
        %1372 = vmatpush1.bf16.msra.mxu0 %v791
        %1373 = vmatprep.subr.bf16.mxu0 0
        %1374 = vmatpush1.bf16.msra.mxu0 %v782
        %1375 = vmatprep.subr.bf16.mxu0 0
        %1376 = vmatpush1.bf16.msra.mxu0 %v773
        %1377 = vmatprep.subr.bf16.mxu0 0
        %1378 = vmatpush2.bf16.msra.mxu0 0
        %1379 = vmatprep.subr.bf16.mxu0 0
        %1380 = vmatpush2.bf16.msra.mxu0 0
        %1381 = vmatprep.subr.bf16.mxu0 0
        %1382 = vmatpush2.bf16.msra.mxu0 0
        %1383 = vmatprep.subr.bf16.mxu0 0
        %1384 = vmatpush2.bf16.msra.mxu0 0
        %1385 = vmatprep.subr.bf16.mxu0 0
        %1386 = vmatpush2.bf16.msra.mxu0 0
        %1387 = vmatprep.subr.bf16.mxu0 0
        %1388 = vmatpush2.bf16.msra.mxu0 0
        %1389 = vmatprep.subr.bf16.mxu0 0
        %1390 = vmatpush2.bf16.msra.mxu0 0
        %1391 = vmatprep.subr.bf16.mxu0 0
        %1392 = vmatpush2.bf16.msra.mxu0 0
        %1393 = vmatprep.mubr.bf16.mxu0 0
        %1394 = vmatmul.mubr.bf16.gmra.mxu0 %v525
        %v1395 = vpop.f32.mrf.mxu0
        %v1396 = vadd.f32 0.0, %v1395
        %v1397 = vpop.f32.mrf.mxu0
        %v1398 = vpop.f32.mrf.mxu0
        %v1399 = vadd.f32 0.0, %v1398
        %v1400 = vpop.f32.mrf.mxu0
        %1401 = vmatprep.mubr.bf16.mxu0 0
        %1402 = vmatmul.mubr.bf16.gmra.mxu0 %v526
        %v1403 = vpop.f32.mrf.mxu0
        %v1404 = vadd.f32 0.0, %v1403
        %v1405 = vpop.f32.mrf.mxu0
        %v1406 = vpop.f32.mrf.mxu0
        %v1407 = vadd.f32 0.0, %v1406
        %v1408 = vpop.f32.mrf.mxu0
        %1409 = vmatprep.mubr.bf16.mxu0 0
        %1410 = vmatmul.mubr.bf16.gmra.mxu0 %v527
        %v1411 = vpop.f32.mrf.mxu0
        %v1412 = vadd.f32 0.0, %v1411
        %v1413 = vpop.f32.mrf.mxu0
        %v1414 = vpop.f32.mrf.mxu0
        %v1415 = vadd.f32 0.0, %v1414
        %v1416 = vpop.f32.mrf.mxu0
        %1417 = vmatprep.mubr.bf16.mxu0 0
        %1418 = vmatmul.mubr.bf16.gmra.mxu0 %v528
        %v1419 = vpop.f32.mrf.mxu0
        %v1420 = vadd.f32 0.0, %v1419
        %v1421 = vpop.f32.mrf.mxu0
        %v1422 = vpop.f32.mrf.mxu0
        %v1423 = vadd.f32 0.0, %v1422
        %v1424 = vpop.f32.mrf.mxu0
        %1425 = vmatprep.mubr.bf16.mxu0 0
        %1426 = vmatmul.mubr.bf16.gmra.mxu0 %v529
        %v1427 = vpop.f32.mrf.mxu0
        %v1428 = vadd.f32 0.0, %v1427
        %v1429 = vpop.f32.mrf.mxu0
        %v1430 = vpop.f32.mrf.mxu0
        %v1431 = vadd.f32 0.0, %v1430
        %v1432 = vpop.f32.mrf.mxu0
        %1433 = vmatprep.mubr.bf16.mxu0 0
        %1434 = vmatmul.mubr.bf16.gmra.mxu0 %v530
        %v1435 = vpop.f32.mrf.mxu0
        %v1436 = vadd.f32 0.0, %v1435
        %v1437 = vpop.f32.mrf.mxu0
        %v1438 = vpop.f32.mrf.mxu0
        %v1439 = vadd.f32 0.0, %v1438
        %v1440 = vpop.f32.mrf.mxu0
        %1441 = vmatprep.mubr.bf16.mxu0 0
        %1442 = vmatmul.mubr.bf16.gmra.mxu0 %v531
        %v1443 = vpop.f32.mrf.mxu0
        %v1444 = vadd.f32 0.0, %v1443
        %v1445 = vpop.f32.mrf.mxu0
        %v1446 = vpop.f32.mrf.mxu0
        %v1447 = vadd.f32 0.0, %v1446
        %v1448 = vpop.f32.mrf.mxu0
        %1449 = vmatprep.mubr.bf16.mxu0 0
        %1450 = vmatmul.mubr.bf16.gmra.mxu0 %v532
        %v1451 = vpop.f32.mrf.mxu0
        %v1452 = vadd.f32 0.0, %v1451
        %v1453 = vpop.f32.mrf.mxu0
        %v1454 = vpop.f32.mrf.mxu0
        %v1455 = vadd.f32 0.0, %v1454
        %v1456 = vpop.f32.mrf.mxu0
        %1457 = vdwg.mxu0
        %s1458 = sadd.s32 %s406, 14
        %s1459 = smul.u32 %s1458, 16
        %s1460 = scalar_lea.vmem [#allocation2], %s1459
        %v1461 = vld [vmem:[%s1460 + $0x2] sm:$0xff]
        %v1462 = vld [vmem:[%s1460 + $0xa] sm:$0x3f]
        %v1463 = vld [vmem:[%s1460 + $0x12] sm:$0xff]
        %v1464 = vld [vmem:[%s1460 + $0x1a] sm:$0x3f]
        %v1465 = vld [vmem:[%s1460 + $0x22] sm:$0xff]
        %v1466 = vld [vmem:[%s1460 + $0x2a] sm:$0x3f]
        %v1467 = vld [vmem:[%s1460 + $0x32] sm:$0xff]
        %v1468 = vld [vmem:[%s1460 + $0x3a] sm:$0x3f]
        %v1469 = vld [vmem:[%s1460 + $0x42] sm:$0xff]
        %v1470 = vld [vmem:[%s1460 + $0x4a] sm:$0x3f]
        %v1471 = vld [vmem:[%s1460 + $0x52] sm:$0xff]
        %v1472 = vld [vmem:[%s1460 + $0x5a] sm:$0x3f]
        %v1473 = vld [vmem:[%s1460 + $0x62] sm:$0xff]
        %v1474 = vld [vmem:[%s1460 + $0x6a] sm:$0x3f]
        %v1475 = vld [vmem:[%s1460 + $0x72] sm:$0xff]
        %v1476 = vld [vmem:[%s1460 + $0x7a] sm:$0x3f]
        %v1477 = vadd.f32 %v1461, %v944
        %v1478 = vadd.f32 %v1462, %v948
        %v1479 = vadd.f32 %v1463, %v954
        %v1480 = vadd.f32 %v1464, %v958
        %v1481 = vadd.f32 %v1465, %v964
        %v1482 = vadd.f32 %v1466, %v968
        %v1483 = vadd.f32 %v1467, %v974
        %v1484 = vadd.f32 %v1468, %v978
        %v1485 = vadd.f32 %v1469, %v984
        %v1486 = vadd.f32 %v1470, %v988
        %v1487 = vadd.f32 %v1471, %v994
        %v1488 = vadd.f32 %v1472, %v998
        %v1489 = vadd.f32 %v1473, %v1004
        %v1490 = vadd.f32 %v1474, %v1008
        %v1491 = vadd.f32 %v1475, %v1014
        %v1492 = vadd.f32 %v1476, %v1018
        %1493 = vst [vmem:[%s1460 + $0x2] sm:$0xff] %v1477
        %1494 = vst [vmem:[%s1460 + $0xa] sm:$0x3f] %v1478
        %1495 = vst [vmem:[%s1460 + $0x12] sm:$0xff] %v1479
        %1496 = vst [vmem:[%s1460 + $0x1a] sm:$0x3f] %v1480
        %1497 = vst [vmem:[%s1460 + $0x22] sm:$0xff] %v1481
        %1498 = vst [vmem:[%s1460 + $0x2a] sm:$0x3f] %v1482
        %1499 = vst [vmem:[%s1460 + $0x32] sm:$0xff] %v1483
        %1500 = vst [vmem:[%s1460 + $0x3a] sm:$0x3f] %v1484
        %1501 = vst [vmem:[%s1460 + $0x42] sm:$0xff] %v1485
        %1502 = vst [vmem:[%s1460 + $0x4a] sm:$0x3f] %v1486
        %1503 = vst [vmem:[%s1460 + $0x52] sm:$0xff] %v1487
        %1504 = vst [vmem:[%s1460 + $0x5a] sm:$0x3f] %v1488
        %1505 = vst [vmem:[%s1460 + $0x62] sm:$0xff] %v1489
        %1506 = vst [vmem:[%s1460 + $0x6a] sm:$0x3f] %v1490
        %1507 = vst [vmem:[%s1460 + $0x72] sm:$0xff] %v1491
        %1508 = vst [vmem:[%s1460 + $0x7a] sm:$0x3f] %v1492
        %v1509 = vld [vmem:[%s1460] sm:$0xff]
        %v1510 = vld [vmem:[%s1460 + $0x8] sm:$0xff]
        %v1511 = vld [vmem:[%s1460 + $0x10] sm:$0xff]
        %v1512 = vld [vmem:[%s1460 + $0x18] sm:$0xff]
        %v1513 = vld [vmem:[%s1460 + $0x20] sm:$0xff]
        %v1514 = vld [vmem:[%s1460 + $0x28] sm:$0xff]
        %v1515 = vld [vmem:[%s1460 + $0x30] sm:$0xff]
        %v1516 = vld [vmem:[%s1460 + $0x38] sm:$0xff]
        %v1517 = vld [vmem:[%s1460 + $0x40] sm:$0xff]
        %v1518 = vld [vmem:[%s1460 + $0x48] sm:$0xff]
        %v1519 = vld [vmem:[%s1460 + $0x50] sm:$0xff]
        %v1520 = vld [vmem:[%s1460 + $0x58] sm:$0xff]
        %v1521 = vld [vmem:[%s1460 + $0x60] sm:$0xff]
        %v1522 = vld [vmem:[%s1460 + $0x68] sm:$0xff]
        %v1523 = vld [vmem:[%s1460 + $0x70] sm:$0xff]
        %v1524 = vld [vmem:[%s1460 + $0x78] sm:$0xff]
        %v1525 = vadd.f32 %v1509, %v946
        %v1526 = vadd.f32 %v1510, %v950
        %v1527 = vadd.f32 %v1511, %v956
        %v1528 = vadd.f32 %v1512, %v960
        %v1529 = vadd.f32 %v1513, %v966
        %v1530 = vadd.f32 %v1514, %v970
        %v1531 = vadd.f32 %v1515, %v976
        %v1532 = vadd.f32 %v1516, %v980
        %v1533 = vadd.f32 %v1517, %v986
        %v1534 = vadd.f32 %v1518, %v990
        %v1535 = vadd.f32 %v1519, %v996
        %v1536 = vadd.f32 %v1520, %v1000
        %v1537 = vadd.f32 %v1521, %v1006
        %v1538 = vadd.f32 %v1522, %v1010
        %v1539 = vadd.f32 %v1523, %v1016
        %v1540 = vadd.f32 %v1524, %v1020
        %1541 = vst [vmem:[%s1460] sm:$0xff] %v1525
        %1542 = vst [vmem:[%s1460 + $0x8] sm:$0xff] %v1526
        %1543 = vst [vmem:[%s1460 + $0x10] sm:$0xff] %v1527
        %1544 = vst [vmem:[%s1460 + $0x18] sm:$0xff] %v1528
        %1545 = vst [vmem:[%s1460 + $0x20] sm:$0xff] %v1529
        %1546 = vst [vmem:[%s1460 + $0x28] sm:$0xff] %v1530
        %1547 = vst [vmem:[%s1460 + $0x30] sm:$0xff] %v1531
        %1548 = vst [vmem:[%s1460 + $0x38] sm:$0xff] %v1532
        %1549 = vst [vmem:[%s1460 + $0x40] sm:$0xff] %v1533
        %1550 = vst [vmem:[%s1460 + $0x48] sm:$0xff] %v1534
        %1551 = vst [vmem:[%s1460 + $0x50] sm:$0xff] %v1535
        %1552 = vst [vmem:[%s1460 + $0x58] sm:$0xff] %v1536
        %1553 = vst [vmem:[%s1460 + $0x60] sm:$0xff] %v1537
        %1554 = vst [vmem:[%s1460 + $0x68] sm:$0xff] %v1538
        %1555 = vst [vmem:[%s1460 + $0x70] sm:$0xff] %v1539
        %1556 = vst [vmem:[%s1460 + $0x78] sm:$0xff] %v1540
        %v1557 = vld [vmem:[%s1460] sm:$0xff]
        %v1558 = vld [vmem:[%s1460 + $0x8] sm:$0x3f]
        %v1559 = vld [vmem:[%s1460 + $0x10] sm:$0xff]
        %v1560 = vld [vmem:[%s1460 + $0x18] sm:$0x3f]
        %v1561 = vld [vmem:[%s1460 + $0x20] sm:$0xff]
        %v1562 = vld [vmem:[%s1460 + $0x28] sm:$0x3f]
        %v1563 = vld [vmem:[%s1460 + $0x30] sm:$0xff]
        %v1564 = vld [vmem:[%s1460 + $0x38] sm:$0x3f]
        %v1565 = vld [vmem:[%s1460 + $0x40] sm:$0xff]
        %v1566 = vld [vmem:[%s1460 + $0x48] sm:$0x3f]
        %v1567 = vld [vmem:[%s1460 + $0x50] sm:$0xff]
        %v1568 = vld [vmem:[%s1460 + $0x58] sm:$0x3f]
        %v1569 = vld [vmem:[%s1460 + $0x60] sm:$0xff]
        %v1570 = vld [vmem:[%s1460 + $0x68] sm:$0x3f]
        %v1571 = vld [vmem:[%s1460 + $0x70] sm:$0xff]
        %v1572 = vld [vmem:[%s1460 + $0x78] sm:$0x3f]
        %vm1589 = vcmask 1045504
        %v1590 = vrot.slane %v1057, 2
        %v1591 = vrot.slane %v1061, 2
        %v1592 = vsel %vm1589, %v1590, %v1591
        %v1593 = vrot.slane %v1067, 2
        %v1594 = vrot.slane %v1071, 2
        %v1595 = vsel %vm1589, %v1593, %v1594
        %v1596 = vrot.slane %v1077, 2
        %v1597 = vrot.slane %v1081, 2
        %v1598 = vsel %vm1589, %v1596, %v1597
        %v1599 = vrot.slane %v1087, 2
        %v1600 = vrot.slane %v1091, 2
        %v1601 = vsel %vm1589, %v1599, %v1600
        %v1602 = vrot.slane %v1097, 2
        %v1603 = vrot.slane %v1101, 2
        %v1604 = vsel %vm1589, %v1602, %v1603
        %v1605 = vrot.slane %v1107, 2
        %v1606 = vrot.slane %v1111, 2
        %v1607 = vsel %vm1589, %v1605, %v1606
        %v1608 = vrot.slane %v1117, 2
        %v1609 = vrot.slane %v1121, 2
        %v1610 = vsel %vm1589, %v1608, %v1609
        %v1611 = vrot.slane %v1127, 2
        %v1612 = vrot.slane %v1131, 2
        %v1613 = vsel %vm1589, %v1611, %v1612
        %v1630 = vadd.f32 %v1557, %v1592
        %v1631 = vadd.f32 %v1558, %v1591
        %v1632 = vadd.f32 %v1559, %v1595
        %v1633 = vadd.f32 %v1560, %v1594
        %v1634 = vadd.f32 %v1561, %v1598
        %v1635 = vadd.f32 %v1562, %v1597
        %v1636 = vadd.f32 %v1563, %v1601
        %v1637 = vadd.f32 %v1564, %v1600
        %v1638 = vadd.f32 %v1565, %v1604
        %v1639 = vadd.f32 %v1566, %v1603
        %v1640 = vadd.f32 %v1567, %v1607
        %v1641 = vadd.f32 %v1568, %v1606
        %v1642 = vadd.f32 %v1569, %v1610
        %v1643 = vadd.f32 %v1570, %v1609
        %v1644 = vadd.f32 %v1571, %v1613
        %v1645 = vadd.f32 %v1572, %v1612
        %1646 = vst [vmem:[%s1460] sm:$0xff] %v1630
        %1647 = vst [vmem:[%s1460 + $0x8] sm:$0x3f] %v1631
        %1648 = vst [vmem:[%s1460 + $0x10] sm:$0xff] %v1632
        %1649 = vst [vmem:[%s1460 + $0x18] sm:$0x3f] %v1633
        %1650 = vst [vmem:[%s1460 + $0x20] sm:$0xff] %v1634
        %1651 = vst [vmem:[%s1460 + $0x28] sm:$0x3f] %v1635
        %1652 = vst [vmem:[%s1460 + $0x30] sm:$0xff] %v1636
        %1653 = vst [vmem:[%s1460 + $0x38] sm:$0x3f] %v1637
        %1654 = vst [vmem:[%s1460 + $0x40] sm:$0xff] %v1638
        %1655 = vst [vmem:[%s1460 + $0x48] sm:$0x3f] %v1639
        %1656 = vst [vmem:[%s1460 + $0x50] sm:$0xff] %v1640
        %1657 = vst [vmem:[%s1460 + $0x58] sm:$0x3f] %v1641
        %1658 = vst [vmem:[%s1460 + $0x60] sm:$0xff] %v1642
        %1659 = vst [vmem:[%s1460 + $0x68] sm:$0x3f] %v1643
        %1660 = vst [vmem:[%s1460 + $0x70] sm:$0xff] %v1644
        %1661 = vst [vmem:[%s1460 + $0x78] sm:$0x3f] %v1645
        %s1662 = sadd.s32 %s406, 12
        %s1663 = smul.u32 %s1662, 16
        %s1664 = scalar_lea.vmem [#allocation2], %s1663
        %v1665 = vld [vmem:[%s1664 + $0x2] sm:$0xff]
        %v1666 = vld [vmem:[%s1664 + $0xa] sm:$0x3f]
        %v1667 = vld [vmem:[%s1664 + $0x12] sm:$0xff]
        %v1668 = vld [vmem:[%s1664 + $0x1a] sm:$0x3f]
        %v1669 = vld [vmem:[%s1664 + $0x22] sm:$0xff]
        %v1670 = vld [vmem:[%s1664 + $0x2a] sm:$0x3f]
        %v1671 = vld [vmem:[%s1664 + $0x32] sm:$0xff]
        %v1672 = vld [vmem:[%s1664 + $0x3a] sm:$0x3f]
        %v1673 = vld [vmem:[%s1664 + $0x42] sm:$0xff]
        %v1674 = vld [vmem:[%s1664 + $0x4a] sm:$0x3f]
        %v1675 = vld [vmem:[%s1664 + $0x52] sm:$0xff]
        %v1676 = vld [vmem:[%s1664 + $0x5a] sm:$0x3f]
        %v1677 = vld [vmem:[%s1664 + $0x62] sm:$0xff]
        %v1678 = vld [vmem:[%s1664 + $0x6a] sm:$0x3f]
        %v1679 = vld [vmem:[%s1664 + $0x72] sm:$0xff]
        %v1680 = vld [vmem:[%s1664 + $0x7a] sm:$0x3f]
        %v1681 = vadd.f32 %v1665, %v1059
        %v1682 = vadd.f32 %v1666, %v1063
        %v1683 = vadd.f32 %v1667, %v1069
        %v1684 = vadd.f32 %v1668, %v1073
        %v1685 = vadd.f32 %v1669, %v1079
        %v1686 = vadd.f32 %v1670, %v1083
        %v1687 = vadd.f32 %v1671, %v1089
        %v1688 = vadd.f32 %v1672, %v1093
        %v1689 = vadd.f32 %v1673, %v1099
        %v1690 = vadd.f32 %v1674, %v1103
        %v1691 = vadd.f32 %v1675, %v1109
        %v1692 = vadd.f32 %v1676, %v1113
        %v1693 = vadd.f32 %v1677, %v1119
        %v1694 = vadd.f32 %v1678, %v1123
        %v1695 = vadd.f32 %v1679, %v1129
        %v1696 = vadd.f32 %v1680, %v1133
        %1697 = vst [vmem:[%s1664 + $0x2] sm:$0xff] %v1681
        %1698 = vst [vmem:[%s1664 + $0xa] sm:$0x3f] %v1682
        %1699 = vst [vmem:[%s1664 + $0x12] sm:$0xff] %v1683
        %1700 = vst [vmem:[%s1664 + $0x1a] sm:$0x3f] %v1684
        %1701 = vst [vmem:[%s1664 + $0x22] sm:$0xff] %v1685
        %1702 = vst [vmem:[%s1664 + $0x2a] sm:$0x3f] %v1686
        %1703 = vst [vmem:[%s1664 + $0x32] sm:$0xff] %v1687
        %1704 = vst [vmem:[%s1664 + $0x3a] sm:$0x3f] %v1688
        %1705 = vst [vmem:[%s1664 + $0x42] sm:$0xff] %v1689
        %1706 = vst [vmem:[%s1664 + $0x4a] sm:$0x3f] %v1690
        %1707 = vst [vmem:[%s1664 + $0x52] sm:$0xff] %v1691
        %1708 = vst [vmem:[%s1664 + $0x5a] sm:$0x3f] %v1692
        %1709 = vst [vmem:[%s1664 + $0x62] sm:$0xff] %v1693
        %1710 = vst [vmem:[%s1664 + $0x6a] sm:$0x3f] %v1694
        %1711 = vst [vmem:[%s1664 + $0x72] sm:$0xff] %v1695
        %1712 = vst [vmem:[%s1664 + $0x7a] sm:$0x3f] %v1696
        %v1713 = vld [vmem:[%s1664] sm:$0xff]
        %v1714 = vld [vmem:[%s1664 + $0x8] sm:$0xff]
        %v1715 = vld [vmem:[%s1664 + $0x10] sm:$0xff]
        %v1716 = vld [vmem:[%s1664 + $0x18] sm:$0xff]
        %v1717 = vld [vmem:[%s1664 + $0x20] sm:$0xff]
        %v1718 = vld [vmem:[%s1664 + $0x28] sm:$0xff]
        %v1719 = vld [vmem:[%s1664 + $0x30] sm:$0xff]
        %v1720 = vld [vmem:[%s1664 + $0x38] sm:$0xff]
        %v1721 = vld [vmem:[%s1664 + $0x40] sm:$0xff]
        %v1722 = vld [vmem:[%s1664 + $0x48] sm:$0xff]
        %v1723 = vld [vmem:[%s1664 + $0x50] sm:$0xff]
        %v1724 = vld [vmem:[%s1664 + $0x58] sm:$0xff]
        %v1725 = vld [vmem:[%s1664 + $0x60] sm:$0xff]
        %v1726 = vld [vmem:[%s1664 + $0x68] sm:$0xff]
        %v1727 = vld [vmem:[%s1664 + $0x70] sm:$0xff]
        %v1728 = vld [vmem:[%s1664 + $0x78] sm:$0xff]
        %v1729 = vadd.f32 %v1713, %v1170
        %v1730 = vadd.f32 %v1714, %v1174
        %v1731 = vadd.f32 %v1715, %v1180
        %v1732 = vadd.f32 %v1716, %v1184
        %v1733 = vadd.f32 %v1717, %v1190
        %v1734 = vadd.f32 %v1718, %v1194
        %v1735 = vadd.f32 %v1719, %v1200
        %v1736 = vadd.f32 %v1720, %v1204
        %v1737 = vadd.f32 %v1721, %v1210
        %v1738 = vadd.f32 %v1722, %v1214
        %v1739 = vadd.f32 %v1723, %v1220
        %v1740 = vadd.f32 %v1724, %v1224
        %v1741 = vadd.f32 %v1725, %v1230
        %v1742 = vadd.f32 %v1726, %v1234
        %v1743 = vadd.f32 %v1727, %v1240
        %v1744 = vadd.f32 %v1728, %v1244
        %1745 = vst [vmem:[%s1664] sm:$0xff] %v1729
        %1746 = vst [vmem:[%s1664 + $0x8] sm:$0xff] %v1730
        %1747 = vst [vmem:[%s1664 + $0x10] sm:$0xff] %v1731
        %1748 = vst [vmem:[%s1664 + $0x18] sm:$0xff] %v1732
        %1749 = vst [vmem:[%s1664 + $0x20] sm:$0xff] %v1733
        %1750 = vst [vmem:[%s1664 + $0x28] sm:$0xff] %v1734
        %1751 = vst [vmem:[%s1664 + $0x30] sm:$0xff] %v1735
        %1752 = vst [vmem:[%s1664 + $0x38] sm:$0xff] %v1736
        %1753 = vst [vmem:[%s1664 + $0x40] sm:$0xff] %v1737
        %1754 = vst [vmem:[%s1664 + $0x48] sm:$0xff] %v1738
        %1755 = vst [vmem:[%s1664 + $0x50] sm:$0xff] %v1739
        %1756 = vst [vmem:[%s1664 + $0x58] sm:$0xff] %v1740
        %1757 = vst [vmem:[%s1664 + $0x60] sm:$0xff] %v1741
        %1758 = vst [vmem:[%s1664 + $0x68] sm:$0xff] %v1742
        %1759 = vst [vmem:[%s1664 + $0x70] sm:$0xff] %v1743
        %1760 = vst [vmem:[%s1664 + $0x78] sm:$0xff] %v1744
        %v1761 = vld [vmem:[%s1664] sm:$0xff]
        %v1762 = vld [vmem:[%s1664 + $0x8] sm:$0x3f]
        %v1763 = vld [vmem:[%s1664 + $0x10] sm:$0xff]
        %v1764 = vld [vmem:[%s1664 + $0x18] sm:$0x3f]
        %v1765 = vld [vmem:[%s1664 + $0x20] sm:$0xff]
        %v1766 = vld [vmem:[%s1664 + $0x28] sm:$0x3f]
        %v1767 = vld [vmem:[%s1664 + $0x30] sm:$0xff]
        %v1768 = vld [vmem:[%s1664 + $0x38] sm:$0x3f]
        %v1769 = vld [vmem:[%s1664 + $0x40] sm:$0xff]
        %v1770 = vld [vmem:[%s1664 + $0x48] sm:$0x3f]
        %v1771 = vld [vmem:[%s1664 + $0x50] sm:$0xff]
        %v1772 = vld [vmem:[%s1664 + $0x58] sm:$0x3f]
        %v1773 = vld [vmem:[%s1664 + $0x60] sm:$0xff]
        %v1774 = vld [vmem:[%s1664 + $0x68] sm:$0x3f]
        %v1775 = vld [vmem:[%s1664 + $0x70] sm:$0xff]
        %v1776 = vld [vmem:[%s1664 + $0x78] sm:$0x3f]
        %v1793 = vrot.slane %v1172, 2
        %v1794 = vrot.slane %v1176, 2
        %v1795 = vsel %vm1589, %v1793, %v1794
        %v1796 = vrot.slane %v1182, 2
        %v1797 = vrot.slane %v1186, 2
        %v1798 = vsel %vm1589, %v1796, %v1797
        %v1799 = vrot.slane %v1192, 2
        %v1800 = vrot.slane %v1196, 2
        %v1801 = vsel %vm1589, %v1799, %v1800
        %v1802 = vrot.slane %v1202, 2
        %v1803 = vrot.slane %v1206, 2
        %v1804 = vsel %vm1589, %v1802, %v1803
        %v1805 = vrot.slane %v1212, 2
        %v1806 = vrot.slane %v1216, 2
        %v1807 = vsel %vm1589, %v1805, %v1806
        %v1808 = vrot.slane %v1222, 2
        %v1809 = vrot.slane %v1226, 2
        %v1810 = vsel %vm1589, %v1808, %v1809
        %v1811 = vrot.slane %v1232, 2
        %v1812 = vrot.slane %v1236, 2
        %v1813 = vsel %vm1589, %v1811, %v1812
        %v1814 = vrot.slane %v1242, 2
        %v1815 = vrot.slane %v1246, 2
        %v1816 = vsel %vm1589, %v1814, %v1815
        %v1833 = vadd.f32 %v1761, %v1795
        %v1834 = vadd.f32 %v1762, %v1794
        %v1835 = vadd.f32 %v1763, %v1798
        %v1836 = vadd.f32 %v1764, %v1797
        %v1837 = vadd.f32 %v1765, %v1801
        %v1838 = vadd.f32 %v1766, %v1800
        %v1839 = vadd.f32 %v1767, %v1804
        %v1840 = vadd.f32 %v1768, %v1803
        %v1841 = vadd.f32 %v1769, %v1807
        %v1842 = vadd.f32 %v1770, %v1806
        %v1843 = vadd.f32 %v1771, %v1810
        %v1844 = vadd.f32 %v1772, %v1809
        %v1845 = vadd.f32 %v1773, %v1813
        %v1846 = vadd.f32 %v1774, %v1812
        %v1847 = vadd.f32 %v1775, %v1816
        %v1848 = vadd.f32 %v1776, %v1815
        %1849 = vst [vmem:[%s1664] sm:$0xff] %v1833
        %1850 = vst [vmem:[%s1664 + $0x8] sm:$0x3f] %v1834
        %1851 = vst [vmem:[%s1664 + $0x10] sm:$0xff] %v1835
        %1852 = vst [vmem:[%s1664 + $0x18] sm:$0x3f] %v1836
        %1853 = vst [vmem:[%s1664 + $0x20] sm:$0xff] %v1837
        %1854 = vst [vmem:[%s1664 + $0x28] sm:$0x3f] %v1838
        %1855 = vst [vmem:[%s1664 + $0x30] sm:$0xff] %v1839
        %1856 = vst [vmem:[%s1664 + $0x38] sm:$0x3f] %v1840
        %1857 = vst [vmem:[%s1664 + $0x40] sm:$0xff] %v1841
        %1858 = vst [vmem:[%s1664 + $0x48] sm:$0x3f] %v1842
        %1859 = vst [vmem:[%s1664 + $0x50] sm:$0xff] %v1843
        %1860 = vst [vmem:[%s1664 + $0x58] sm:$0x3f] %v1844
        %1861 = vst [vmem:[%s1664 + $0x60] sm:$0xff] %v1845
        %1862 = vst [vmem:[%s1664 + $0x68] sm:$0x3f] %v1846
        %1863 = vst [vmem:[%s1664 + $0x70] sm:$0xff] %v1847
        %1864 = vst [vmem:[%s1664 + $0x78] sm:$0x3f] %v1848
        %s1865 = sadd.s32 %s406, 10
        %s1866 = smul.u32 %s1865, 16
        %s1867 = scalar_lea.vmem [#allocation2], %s1866
        %v1868 = vld [vmem:[%s1867 + $0x2] sm:$0xff]
        %v1869 = vld [vmem:[%s1867 + $0xa] sm:$0x3f]
        %v1870 = vld [vmem:[%s1867 + $0x12] sm:$0xff]
        %v1871 = vld [vmem:[%s1867 + $0x1a] sm:$0x3f]
        %v1872 = vld [vmem:[%s1867 + $0x22] sm:$0xff]
        %v1873 = vld [vmem:[%s1867 + $0x2a] sm:$0x3f]
        %v1874 = vld [vmem:[%s1867 + $0x32] sm:$0xff]
        %v1875 = vld [vmem:[%s1867 + $0x3a] sm:$0x3f]
        %v1876 = vld [vmem:[%s1867 + $0x42] sm:$0xff]
        %v1877 = vld [vmem:[%s1867 + $0x4a] sm:$0x3f]
        %v1878 = vld [vmem:[%s1867 + $0x52] sm:$0xff]
        %v1879 = vld [vmem:[%s1867 + $0x5a] sm:$0x3f]
        %v1880 = vld [vmem:[%s1867 + $0x62] sm:$0xff]
        %v1881 = vld [vmem:[%s1867 + $0x6a] sm:$0x3f]
        %v1882 = vld [vmem:[%s1867 + $0x72] sm:$0xff]
        %v1883 = vld [vmem:[%s1867 + $0x7a] sm:$0x3f]
        %v1884 = vadd.f32 %v1868, %v1283
        %v1885 = vadd.f32 %v1869, %v1287
        %v1886 = vadd.f32 %v1870, %v1293
        %v1887 = vadd.f32 %v1871, %v1297
        %v1888 = vadd.f32 %v1872, %v1303
        %v1889 = vadd.f32 %v1873, %v1307
        %v1890 = vadd.f32 %v1874, %v1313
        %v1891 = vadd.f32 %v1875, %v1317
        %v1892 = vadd.f32 %v1876, %v1323
        %v1893 = vadd.f32 %v1877, %v1327
        %v1894 = vadd.f32 %v1878, %v1333
        %v1895 = vadd.f32 %v1879, %v1337
        %v1896 = vadd.f32 %v1880, %v1343
        %v1897 = vadd.f32 %v1881, %v1347
        %v1898 = vadd.f32 %v1882, %v1353
        %v1899 = vadd.f32 %v1883, %v1357
        %1900 = vst [vmem:[%s1867 + $0x2] sm:$0xff] %v1884
        %1901 = vst [vmem:[%s1867 + $0xa] sm:$0x3f] %v1885
        %1902 = vst [vmem:[%s1867 + $0x12] sm:$0xff] %v1886
        %1903 = vst [vmem:[%s1867 + $0x1a] sm:$0x3f] %v1887
        %1904 = vst [vmem:[%s1867 + $0x22] sm:$0xff] %v1888
        %1905 = vst [vmem:[%s1867 + $0x2a] sm:$0x3f] %v1889
        %1906 = vst [vmem:[%s1867 + $0x32] sm:$0xff] %v1890
        %1907 = vst [vmem:[%s1867 + $0x3a] sm:$0x3f] %v1891
        %1908 = vst [vmem:[%s1867 + $0x42] sm:$0xff] %v1892
        %1909 = vst [vmem:[%s1867 + $0x4a] sm:$0x3f] %v1893
        %1910 = vst [vmem:[%s1867 + $0x52] sm:$0xff] %v1894
        %1911 = vst [vmem:[%s1867 + $0x5a] sm:$0x3f] %v1895
        %1912 = vst [vmem:[%s1867 + $0x62] sm:$0xff] %v1896
        %1913 = vst [vmem:[%s1867 + $0x6a] sm:$0x3f] %v1897
        %1914 = vst [vmem:[%s1867 + $0x72] sm:$0xff] %v1898
        %1915 = vst [vmem:[%s1867 + $0x7a] sm:$0x3f] %v1899
        %v1916 = vld [vmem:[%s1867] sm:$0xff]
        %v1917 = vld [vmem:[%s1867 + $0x8] sm:$0xff]
        %v1918 = vld [vmem:[%s1867 + $0x10] sm:$0xff]
        %v1919 = vld [vmem:[%s1867 + $0x18] sm:$0xff]
        %v1920 = vld [vmem:[%s1867 + $0x20] sm:$0xff]
        %v1921 = vld [vmem:[%s1867 + $0x28] sm:$0xff]
        %v1922 = vld [vmem:[%s1867 + $0x30] sm:$0xff]
        %v1923 = vld [vmem:[%s1867 + $0x38] sm:$0xff]
        %v1924 = vld [vmem:[%s1867 + $0x40] sm:$0xff]
        %v1925 = vld [vmem:[%s1867 + $0x48] sm:$0xff]
        %v1926 = vld [vmem:[%s1867 + $0x50] sm:$0xff]
        %v1927 = vld [vmem:[%s1867 + $0x58] sm:$0xff]
        %v1928 = vld [vmem:[%s1867 + $0x60] sm:$0xff]
        %v1929 = vld [vmem:[%s1867 + $0x68] sm:$0xff]
        %v1930 = vld [vmem:[%s1867 + $0x70] sm:$0xff]
        %v1931 = vld [vmem:[%s1867 + $0x78] sm:$0xff]
        %v1932 = vadd.f32 %v1916, %v1285
        %v1933 = vadd.f32 %v1917, %v1289
        %v1934 = vadd.f32 %v1918, %v1295
        %v1935 = vadd.f32 %v1919, %v1299
        %v1936 = vadd.f32 %v1920, %v1305
        %v1937 = vadd.f32 %v1921, %v1309
        %v1938 = vadd.f32 %v1922, %v1315
        %v1939 = vadd.f32 %v1923, %v1319
        %v1940 = vadd.f32 %v1924, %v1325
        %v1941 = vadd.f32 %v1925, %v1329
        %v1942 = vadd.f32 %v1926, %v1335
        %v1943 = vadd.f32 %v1927, %v1339
        %v1944 = vadd.f32 %v1928, %v1345
        %v1945 = vadd.f32 %v1929, %v1349
        %v1946 = vadd.f32 %v1930, %v1355
        %v1947 = vadd.f32 %v1931, %v1359
        %1948 = vst [vmem:[%s1867] sm:$0xff] %v1932
        %1949 = vst [vmem:[%s1867 + $0x8] sm:$0xff] %v1933
        %1950 = vst [vmem:[%s1867 + $0x10] sm:$0xff] %v1934
        %1951 = vst [vmem:[%s1867 + $0x18] sm:$0xff] %v1935
        %1952 = vst [vmem:[%s1867 + $0x20] sm:$0xff] %v1936
        %1953 = vst [vmem:[%s1867 + $0x28] sm:$0xff] %v1937
        %1954 = vst [vmem:[%s1867 + $0x30] sm:$0xff] %v1938
        %1955 = vst [vmem:[%s1867 + $0x38] sm:$0xff] %v1939
        %1956 = vst [vmem:[%s1867 + $0x40] sm:$0xff] %v1940
        %1957 = vst [vmem:[%s1867 + $0x48] sm:$0xff] %v1941
        %1958 = vst [vmem:[%s1867 + $0x50] sm:$0xff] %v1942
        %1959 = vst [vmem:[%s1867 + $0x58] sm:$0xff] %v1943
        %1960 = vst [vmem:[%s1867 + $0x60] sm:$0xff] %v1944
        %1961 = vst [vmem:[%s1867 + $0x68] sm:$0xff] %v1945
        %1962 = vst [vmem:[%s1867 + $0x70] sm:$0xff] %v1946
        %1963 = vst [vmem:[%s1867 + $0x78] sm:$0xff] %v1947
        %v1964 = vld [vmem:[%s1867] sm:$0xff]
        %v1965 = vld [vmem:[%s1867 + $0x8] sm:$0x3f]
        %v1966 = vld [vmem:[%s1867 + $0x10] sm:$0xff]
        %v1967 = vld [vmem:[%s1867 + $0x18] sm:$0x3f]
        %v1968 = vld [vmem:[%s1867 + $0x20] sm:$0xff]
        %v1969 = vld [vmem:[%s1867 + $0x28] sm:$0x3f]
        %v1970 = vld [vmem:[%s1867 + $0x30] sm:$0xff]
        %v1971 = vld [vmem:[%s1867 + $0x38] sm:$0x3f]
        %v1972 = vld [vmem:[%s1867 + $0x40] sm:$0xff]
        %v1973 = vld [vmem:[%s1867 + $0x48] sm:$0x3f]
        %v1974 = vld [vmem:[%s1867 + $0x50] sm:$0xff]
        %v1975 = vld [vmem:[%s1867 + $0x58] sm:$0x3f]
        %v1976 = vld [vmem:[%s1867 + $0x60] sm:$0xff]
        %v1977 = vld [vmem:[%s1867 + $0x68] sm:$0x3f]
        %v1978 = vld [vmem:[%s1867 + $0x70] sm:$0xff]
        %v1979 = vld [vmem:[%s1867 + $0x78] sm:$0x3f]
        %v1996 = vrot.slane %v1396, 2
        %v1997 = vrot.slane %v1399, 2
        %v1998 = vsel %vm1589, %v1996, %v1997
        %v1999 = vrot.slane %v1404, 2
        %v2000 = vrot.slane %v1407, 2
        %v2001 = vsel %vm1589, %v1999, %v2000
        %v2002 = vrot.slane %v1412, 2
        %v2003 = vrot.slane %v1415, 2
        %v2004 = vsel %vm1589, %v2002, %v2003
        %v2005 = vrot.slane %v1420, 2
        %v2006 = vrot.slane %v1423, 2
        %v2007 = vsel %vm1589, %v2005, %v2006
        %v2008 = vrot.slane %v1428, 2
        %v2009 = vrot.slane %v1431, 2
        %v2010 = vsel %vm1589, %v2008, %v2009
        %v2011 = vrot.slane %v1436, 2
        %v2012 = vrot.slane %v1439, 2
        %v2013 = vsel %vm1589, %v2011, %v2012
        %v2014 = vrot.slane %v1444, 2
        %v2015 = vrot.slane %v1447, 2
        %v2016 = vsel %vm1589, %v2014, %v2015
        %v2017 = vrot.slane %v1452, 2
        %v2018 = vrot.slane %v1455, 2
        %v2019 = vsel %vm1589, %v2017, %v2018
        %v2036 = vadd.f32 %v1964, %v1998
        %v2037 = vadd.f32 %v1965, %v1997
        %v2038 = vadd.f32 %v1966, %v2001
        %v2039 = vadd.f32 %v1967, %v2000
        %v2040 = vadd.f32 %v1968, %v2004
        %v2041 = vadd.f32 %v1969, %v2003
        %v2042 = vadd.f32 %v1970, %v2007
        %v2043 = vadd.f32 %v1971, %v2006
        %v2044 = vadd.f32 %v1972, %v2010
        %v2045 = vadd.f32 %v1973, %v2009
        %v2046 = vadd.f32 %v1974, %v2013
        %v2047 = vadd.f32 %v1975, %v2012
        %v2048 = vadd.f32 %v1976, %v2016
        %v2049 = vadd.f32 %v1977, %v2015
        %v2050 = vadd.f32 %v1978, %v2019
        %v2051 = vadd.f32 %v1979, %v2018
        %2052 = vst [vmem:[%s1867] sm:$0xff] %v2036
        %2053 = vst [vmem:[%s1867 + $0x8] sm:$0x3f] %v2037
        %2054 = vst [vmem:[%s1867 + $0x10] sm:$0xff] %v2038
        %2055 = vst [vmem:[%s1867 + $0x18] sm:$0x3f] %v2039
        %2056 = vst [vmem:[%s1867 + $0x20] sm:$0xff] %v2040
        %2057 = vst [vmem:[%s1867 + $0x28] sm:$0x3f] %v2041
        %2058 = vst [vmem:[%s1867 + $0x30] sm:$0xff] %v2042
        %2059 = vst [vmem:[%s1867 + $0x38] sm:$0x3f] %v2043
        %2060 = vst [vmem:[%s1867 + $0x40] sm:$0xff] %v2044
        %2061 = vst [vmem:[%s1867 + $0x48] sm:$0x3f] %v2045
        %2062 = vst [vmem:[%s1867 + $0x50] sm:$0xff] %v2046
        %2063 = vst [vmem:[%s1867 + $0x58] sm:$0x3f] %v2047
        %2064 = vst [vmem:[%s1867 + $0x60] sm:$0xff] %v2048
        %2065 = vst [vmem:[%s1867 + $0x68] sm:$0x3f] %v2049
        %2066 = vst [vmem:[%s1867 + $0x70] sm:$0xff] %v2050
        %2067 = vst [vmem:[%s1867 + $0x78] sm:$0x3f] %v2051
        %v2068 = vld [vmem:[%s412 + $0x24] sm:$0xff]
        %v2069 = vld [vmem:[%s412 + $0x2c] sm:$0xff]
        %v2070 = vld [vmem:[%s412 + $0x34] sm:$0xff]
        %v2071 = vld [vmem:[%s412 + $0x3c] sm:$0xff]
        %v2072 = vld [vmem:[%s412 + $0xa8] sm:$0xff]
        %v2073 = vld [vmem:[%s412 + $0xb0] sm:$0xff]
        %v2074 = vld [vmem:[%s412 + $0xb8] sm:$0xff]
        %v2075 = vld [vmem:[%s412 + $0xc0] sm:$0xff]
        %v2076 = vld [vmem:[%s412 + $0x12c] sm:$0xff]
        %v2077 = vld [vmem:[%s412 + $0x134] sm:$0xff]
        %v2078 = vld [vmem:[%s412 + $0x13c] sm:$0xff]
        %v2079 = vld [vmem:[%s412 + $0x144] sm:$0xff]
        %v2080 = vld [vmem:[%s412 + $0x1b0] sm:$0xff]
        %v2081 = vld [vmem:[%s412 + $0x1b8] sm:$0xff]
        %v2082 = vld [vmem:[%s412 + $0x1c0] sm:$0xff]
        %v2083 = vld [vmem:[%s412 + $0x1c8] sm:$0xff]
        %v2084 = vld [vmem:[%s412 + $0x234] sm:$0xff]
        %v2085 = vld [vmem:[%s412 + $0x23c] sm:$0xff]
        %v2086 = vld [vmem:[%s412 + $0x244] sm:$0xff]
        %v2087 = vld [vmem:[%s412 + $0x24c] sm:$0xff]
        %v2088 = vld [vmem:[%s412 + $0x2b8] sm:$0xff]
        %v2089 = vld [vmem:[%s412 + $0x2c0] sm:$0xff]
        %v2090 = vld [vmem:[%s412 + $0x2c8] sm:$0xff]
        %v2091 = vld [vmem:[%s412 + $0x2d0] sm:$0xff]
        %v2092 = vld [vmem:[%s412 + $0x33c] sm:$0xff]
        %v2093 = vld [vmem:[%s412 + $0x344] sm:$0xff]
        %v2094 = vld [vmem:[%s412 + $0x34c] sm:$0xff]
        %v2095 = vld [vmem:[%s412 + $0x354] sm:$0xff]
        %v2096 = vld [vmem:[%s412 + $0x3c0] sm:$0xff]
        %v2097 = vld [vmem:[%s412 + $0x3c8] sm:$0xff]
        %v2098 = vld [vmem:[%s412 + $0x3d0] sm:$0xff]
        %v2099 = vld [vmem:[%s412 + $0x3d8] sm:$0xff]
        %v2100 = vld [vmem:[%s412 + $0x444] sm:$0xff]
        %v2101 = vld [vmem:[%s412 + $0x44c] sm:$0xff]
        %v2102 = vld [vmem:[%s412 + $0x454] sm:$0xff]
        %v2103 = vld [vmem:[%s412 + $0x45c] sm:$0xff]
        %v2104 = vld [vmem:[%s412 + $0x4c8] sm:$0xff]
        %v2105 = vld [vmem:[%s412 + $0x4d0] sm:$0xff]
        %v2106 = vld [vmem:[%s412 + $0x4d8] sm:$0xff]
        %v2107 = vld [vmem:[%s412 + $0x4e0] sm:$0xff]
        %v2108 = vld [vmem:[%s412 + $0x54c] sm:$0xff]
        %v2109 = vld [vmem:[%s412 + $0x554] sm:$0xff]
        %v2110 = vld [vmem:[%s412 + $0x55c] sm:$0xff]
        %v2111 = vld [vmem:[%s412 + $0x564] sm:$0xff]
        %v2112 = vld [vmem:[%s412 + $0x5d0] sm:$0xff]
        %v2113 = vld [vmem:[%s412 + $0x5d8] sm:$0xff]
        %v2114 = vld [vmem:[%s412 + $0x5e0] sm:$0xff]
        %v2115 = vld [vmem:[%s412 + $0x5e8] sm:$0xff]
        %v2116 = vld [vmem:[%s412 + $0x654] sm:$0xff]
        %v2117 = vld [vmem:[%s412 + $0x65c] sm:$0xff]
        %v2118 = vld [vmem:[%s412 + $0x664] sm:$0xff]
        %v2119 = vld [vmem:[%s412 + $0x66c] sm:$0xff]
        %v2120 = vld [vmem:[%s412 + $0x6d8] sm:$0xff]
        %v2121 = vld [vmem:[%s412 + $0x6e0] sm:$0xff]
        %v2122 = vld [vmem:[%s412 + $0x6e8] sm:$0xff]
        %v2123 = vld [vmem:[%s412 + $0x6f0] sm:$0xff]
        %v2124 = vld [vmem:[%s412 + $0x75c] sm:$0xff]
        %v2125 = vld [vmem:[%s412 + $0x764] sm:$0xff]
        %v2126 = vld [vmem:[%s412 + $0x76c] sm:$0xff]
        %v2127 = vld [vmem:[%s412 + $0x774] sm:$0xff]
        %v2128 = vld [vmem:[%s412 + $0x7e0] sm:$0xff]
        %v2129 = vld [vmem:[%s412 + $0x7e8] sm:$0xff]
        %v2130 = vld [vmem:[%s412 + $0x7f0] sm:$0xff]
        %v2131 = vld [vmem:[%s412 + $0x7f8] sm:$0xff]
        %v2196 = vunpack.c.l.b16 %v2068
        %v2197 = vunpack.c.h.b16 %v2068
        %v2198 = vunpack.c.l.b16 %v2069
        %v2199 = vunpack.c.h.b16 %v2069
        %v2200 = vunpack.c.l.b16 %v2070
        %v2201 = vunpack.c.h.b16 %v2070
        %v2202 = vunpack.c.l.b16 %v2071
        %v2203 = vunpack.c.h.b16 %v2071
        %v2204 = vunpack.c.l.b16 %v2072
        %v2205 = vunpack.c.h.b16 %v2072
        %v2206 = vunpack.c.l.b16 %v2073
        %v2207 = vunpack.c.h.b16 %v2073
        %v2208 = vunpack.c.l.b16 %v2074
        %v2209 = vunpack.c.h.b16 %v2074
        %v2210 = vunpack.c.l.b16 %v2075
        %v2211 = vunpack.c.h.b16 %v2075
        %v2212 = vunpack.c.l.b16 %v2076
        %v2213 = vunpack.c.h.b16 %v2076
        %v2214 = vunpack.c.l.b16 %v2077
        %v2215 = vunpack.c.h.b16 %v2077
        %v2216 = vunpack.c.l.b16 %v2078
        %v2217 = vunpack.c.h.b16 %v2078
        %v2218 = vunpack.c.l.b16 %v2079
        %v2219 = vunpack.c.h.b16 %v2079
        %v2220 = vunpack.c.l.b16 %v2080
        %v2221 = vunpack.c.h.b16 %v2080
        %v2222 = vunpack.c.l.b16 %v2081
        %v2223 = vunpack.c.h.b16 %v2081
        %v2224 = vunpack.c.l.b16 %v2082
        %v2225 = vunpack.c.h.b16 %v2082
        %v2226 = vunpack.c.l.b16 %v2083
        %v2227 = vunpack.c.h.b16 %v2083
        %v2228 = vunpack.c.l.b16 %v2084
        %v2229 = vunpack.c.h.b16 %v2084
        %v2230 = vunpack.c.l.b16 %v2085
        %v2231 = vunpack.c.h.b16 %v2085
        %v2232 = vunpack.c.l.b16 %v2086
        %v2233 = vunpack.c.h.b16 %v2086
        %v2234 = vunpack.c.l.b16 %v2087
        %v2235 = vunpack.c.h.b16 %v2087
        %v2236 = vunpack.c.l.b16 %v2088
        %v2237 = vunpack.c.h.b16 %v2088
        %v2238 = vunpack.c.l.b16 %v2089
        %v2239 = vunpack.c.h.b16 %v2089
        %v2240 = vunpack.c.l.b16 %v2090
        %v2241 = vunpack.c.h.b16 %v2090
        %v2242 = vunpack.c.l.b16 %v2091
        %v2243 = vunpack.c.h.b16 %v2091
        %v2244 = vunpack.c.l.b16 %v2092
        %v2245 = vunpack.c.h.b16 %v2092
        %v2246 = vunpack.c.l.b16 %v2093
        %v2247 = vunpack.c.h.b16 %v2093
        %v2248 = vunpack.c.l.b16 %v2094
        %v2249 = vunpack.c.h.b16 %v2094
        %v2250 = vunpack.c.l.b16 %v2095
        %v2251 = vunpack.c.h.b16 %v2095
        %v2252 = vunpack.c.l.b16 %v2096
        %v2253 = vunpack.c.h.b16 %v2096
        %v2254 = vunpack.c.l.b16 %v2097
        %v2255 = vunpack.c.h.b16 %v2097
        %v2256 = vunpack.c.l.b16 %v2098
        %v2257 = vunpack.c.h.b16 %v2098
        %v2258 = vunpack.c.l.b16 %v2099
        %v2259 = vunpack.c.h.b16 %v2099
        %v2260 = vunpack.c.l.b16 %v2100
        %v2261 = vunpack.c.h.b16 %v2100
        %v2262 = vunpack.c.l.b16 %v2101
        %v2263 = vunpack.c.h.b16 %v2101
        %v2264 = vunpack.c.l.b16 %v2102
        %v2265 = vunpack.c.h.b16 %v2102
        %v2266 = vunpack.c.l.b16 %v2103
        %v2267 = vunpack.c.h.b16 %v2103
        %v2268 = vunpack.c.l.b16 %v2104
        %v2269 = vunpack.c.h.b16 %v2104
        %v2270 = vunpack.c.l.b16 %v2105
        %v2271 = vunpack.c.h.b16 %v2105
        %v2272 = vunpack.c.l.b16 %v2106
        %v2273 = vunpack.c.h.b16 %v2106
        %v2274 = vunpack.c.l.b16 %v2107
        %v2275 = vunpack.c.h.b16 %v2107
        %v2276 = vunpack.c.l.b16 %v2108
        %v2277 = vunpack.c.h.b16 %v2108
        %v2278 = vunpack.c.l.b16 %v2109
        %v2279 = vunpack.c.h.b16 %v2109
        %v2280 = vunpack.c.l.b16 %v2110
        %v2281 = vunpack.c.h.b16 %v2110
        %v2282 = vunpack.c.l.b16 %v2111
        %v2283 = vunpack.c.h.b16 %v2111
        %v2284 = vunpack.c.l.b16 %v2112
        %v2285 = vunpack.c.h.b16 %v2112
        %v2286 = vunpack.c.l.b16 %v2113
        %v2287 = vunpack.c.h.b16 %v2113
        %v2288 = vunpack.c.l.b16 %v2114
        %v2289 = vunpack.c.h.b16 %v2114
        %v2290 = vunpack.c.l.b16 %v2115
        %v2291 = vunpack.c.h.b16 %v2115
        %v2292 = vunpack.c.l.b16 %v2116
        %v2293 = vunpack.c.h.b16 %v2116
        %v2294 = vunpack.c.l.b16 %v2117
        %v2295 = vunpack.c.h.b16 %v2117
        %v2296 = vunpack.c.l.b16 %v2118
        %v2297 = vunpack.c.h.b16 %v2118
        %v2298 = vunpack.c.l.b16 %v2119
        %v2299 = vunpack.c.h.b16 %v2119
        %v2300 = vunpack.c.l.b16 %v2120
        %v2301 = vunpack.c.h.b16 %v2120
        %v2302 = vunpack.c.l.b16 %v2121
        %v2303 = vunpack.c.h.b16 %v2121
        %v2304 = vunpack.c.l.b16 %v2122
        %v2305 = vunpack.c.h.b16 %v2122
        %v2306 = vunpack.c.l.b16 %v2123
        %v2307 = vunpack.c.h.b16 %v2123
        %v2308 = vunpack.c.l.b16 %v2124
        %v2309 = vunpack.c.h.b16 %v2124
        %v2310 = vunpack.c.l.b16 %v2125
        %v2311 = vunpack.c.h.b16 %v2125
        %v2312 = vunpack.c.l.b16 %v2126
        %v2313 = vunpack.c.h.b16 %v2126
        %v2314 = vunpack.c.l.b16 %v2127
        %v2315 = vunpack.c.h.b16 %v2127
        %v2316 = vunpack.c.l.b16 %v2128
        %v2317 = vunpack.c.h.b16 %v2128
        %v2318 = vunpack.c.l.b16 %v2129
        %v2319 = vunpack.c.h.b16 %v2129
        %v2320 = vunpack.c.l.b16 %v2130
        %v2321 = vunpack.c.h.b16 %v2130
        %v2322 = vunpack.c.l.b16 %v2131
        %v2323 = vunpack.c.h.b16 %v2131
        %v2324 = vpack.c.b16 %v2204, %v2196
        %v2325 = vpack.c.b16 %v2205, %v2197
        %v2326 = vpack.c.b16 %v2206, %v2198
        %v2327 = vpack.c.b16 %v2207, %v2199
        %v2328 = vpack.c.b16 %v2208, %v2200
        %v2329 = vpack.c.b16 %v2209, %v2201
        %v2330 = vpack.c.b16 %v2210, %v2202
        %v2331 = vpack.c.b16 %v2211, %v2203
        %v2332 = vpack.c.b16 %v2220, %v2212
        %v2333 = vpack.c.b16 %v2221, %v2213
        %v2334 = vpack.c.b16 %v2222, %v2214
        %v2335 = vpack.c.b16 %v2223, %v2215
        %v2336 = vpack.c.b16 %v2224, %v2216
        %v2337 = vpack.c.b16 %v2225, %v2217
        %v2338 = vpack.c.b16 %v2226, %v2218
        %v2339 = vpack.c.b16 %v2227, %v2219
        %v2340 = vpack.c.b16 %v2236, %v2228
        %v2341 = vpack.c.b16 %v2237, %v2229
        %v2342 = vpack.c.b16 %v2238, %v2230
        %v2343 = vpack.c.b16 %v2239, %v2231
        %v2344 = vpack.c.b16 %v2240, %v2232
        %v2345 = vpack.c.b16 %v2241, %v2233
        %v2346 = vpack.c.b16 %v2242, %v2234
        %v2347 = vpack.c.b16 %v2243, %v2235
        %v2348 = vpack.c.b16 %v2252, %v2244
        %v2349 = vpack.c.b16 %v2253, %v2245
        %v2350 = vpack.c.b16 %v2254, %v2246
        %v2351 = vpack.c.b16 %v2255, %v2247
        %v2352 = vpack.c.b16 %v2256, %v2248
        %v2353 = vpack.c.b16 %v2257, %v2249
        %v2354 = vpack.c.b16 %v2258, %v2250
        %v2355 = vpack.c.b16 %v2259, %v2251
        %v2356 = vpack.c.b16 %v2268, %v2260
        %v2357 = vpack.c.b16 %v2269, %v2261
        %v2358 = vpack.c.b16 %v2270, %v2262
        %v2359 = vpack.c.b16 %v2271, %v2263
        %v2360 = vpack.c.b16 %v2272, %v2264
        %v2361 = vpack.c.b16 %v2273, %v2265
        %v2362 = vpack.c.b16 %v2274, %v2266
        %v2363 = vpack.c.b16 %v2275, %v2267
        %v2364 = vpack.c.b16 %v2284, %v2276
        %v2365 = vpack.c.b16 %v2285, %v2277
        %v2366 = vpack.c.b16 %v2286, %v2278
        %v2367 = vpack.c.b16 %v2287, %v2279
        %v2368 = vpack.c.b16 %v2288, %v2280
        %v2369 = vpack.c.b16 %v2289, %v2281
        %v2370 = vpack.c.b16 %v2290, %v2282
        %v2371 = vpack.c.b16 %v2291, %v2283
        %v2372 = vpack.c.b16 %v2300, %v2292
        %v2373 = vpack.c.b16 %v2301, %v2293
        %v2374 = vpack.c.b16 %v2302, %v2294
        %v2375 = vpack.c.b16 %v2303, %v2295
        %v2376 = vpack.c.b16 %v2304, %v2296
        %v2377 = vpack.c.b16 %v2305, %v2297
        %v2378 = vpack.c.b16 %v2306, %v2298
        %v2379 = vpack.c.b16 %v2307, %v2299
        %v2380 = vpack.c.b16 %v2316, %v2308
        %v2381 = vpack.c.b16 %v2317, %v2309
        %v2382 = vpack.c.b16 %v2318, %v2310
        %v2383 = vpack.c.b16 %v2319, %v2311
        %v2384 = vpack.c.b16 %v2320, %v2312
        %v2385 = vpack.c.b16 %v2321, %v2313
        %v2386 = vpack.c.b16 %v2322, %v2314
        %v2387 = vpack.c.b16 %v2323, %v2315
        %2452 = vmatprep.subr.bf16.mxu0 %v2381
        %2453 = vmatpush1.bf16.msra.mxu0 %v2380
        %2454 = vmatprep.subr.bf16.mxu0 %v2373
        %2455 = vmatpush1.bf16.msra.mxu0 %v2372
        %2456 = vmatprep.subr.bf16.mxu0 %v2365
        %2457 = vmatpush1.bf16.msra.mxu0 %v2364
        %2458 = vmatprep.subr.bf16.mxu0 %v2357
        %2459 = vmatpush1.bf16.msra.mxu0 %v2356
        %2460 = vmatprep.subr.bf16.mxu0 %v2349
        %2461 = vmatpush1.bf16.msra.mxu0 %v2348
        %2462 = vmatprep.subr.bf16.mxu0 %v2341
        %2463 = vmatpush1.bf16.msra.mxu0 %v2340
        %2464 = vmatprep.subr.bf16.mxu0 %v2333
        %2465 = vmatpush1.bf16.msra.mxu0 %v2332
        %2466 = vmatprep.subr.bf16.mxu0 %v2325
        %2467 = vmatpush1.bf16.msra.mxu0 %v2324
        %2468 = vmatprep.subr.bf16.mxu0 0
        %2469 = vmatpush2.bf16.msra.mxu0 0
        %2470 = vmatprep.subr.bf16.mxu0 0
        %2471 = vmatpush2.bf16.msra.mxu0 0
        %2472 = vmatprep.subr.bf16.mxu0 0
        %2473 = vmatpush2.bf16.msra.mxu0 0
        %2474 = vmatprep.subr.bf16.mxu0 0
        %2475 = vmatpush2.bf16.msra.mxu0 0
        %2476 = vmatprep.subr.bf16.mxu0 0
        %2477 = vmatpush2.bf16.msra.mxu0 0
        %2478 = vmatprep.subr.bf16.mxu0 0
        %2479 = vmatpush2.bf16.msra.mxu0 0
        %2480 = vmatprep.subr.bf16.mxu0 0
        %2481 = vmatpush2.bf16.msra.mxu0 0
        %2482 = vmatprep.subr.bf16.mxu0 0
        %2483 = vmatpush2.bf16.msra.mxu0 0
        %2484 = vmatprep.mubr.bf16.mxu0 0
        %2485 = vmatmul.mubr.bf16.gmra.mxu0 %v525
        %v2486 = vpop.f32.mrf.mxu0
        %v2487 = vadd.f32 0.0, %v2486
        %v2488 = vpop.f32.mrf.mxu0
        %v2489 = vadd.f32 0.0, %v2488
        %v2490 = vpop.f32.mrf.mxu0
        %v2491 = vadd.f32 0.0, %v2490
        %v2492 = vpop.f32.mrf.mxu0
        %v2493 = vadd.f32 0.0, %v2492
        %2494 = vmatprep.mubr.bf16.mxu0 0
        %2495 = vmatmul.mubr.bf16.gmra.mxu0 %v526
        %v2496 = vpop.f32.mrf.mxu0
        %v2497 = vadd.f32 0.0, %v2496
        %v2498 = vpop.f32.mrf.mxu0
        %v2499 = vadd.f32 0.0, %v2498
        %v2500 = vpop.f32.mrf.mxu0
        %v2501 = vadd.f32 0.0, %v2500
        %v2502 = vpop.f32.mrf.mxu0
        %v2503 = vadd.f32 0.0, %v2502
        %2504 = vmatprep.mubr.bf16.mxu0 0
        %2505 = vmatmul.mubr.bf16.gmra.mxu0 %v527
        %v2506 = vpop.f32.mrf.mxu0
        %v2507 = vadd.f32 0.0, %v2506
        %v2508 = vpop.f32.mrf.mxu0
        %v2509 = vadd.f32 0.0, %v2508
        %v2510 = vpop.f32.mrf.mxu0
        %v2511 = vadd.f32 0.0, %v2510
        %v2512 = vpop.f32.mrf.mxu0
        %v2513 = vadd.f32 0.0, %v2512
        %2514 = vmatprep.mubr.bf16.mxu0 0
        %2515 = vmatmul.mubr.bf16.gmra.mxu0 %v528
        %v2516 = vpop.f32.mrf.mxu0
        %v2517 = vadd.f32 0.0, %v2516
        %v2518 = vpop.f32.mrf.mxu0
        %v2519 = vadd.f32 0.0, %v2518
        %v2520 = vpop.f32.mrf.mxu0
        %v2521 = vadd.f32 0.0, %v2520
        %v2522 = vpop.f32.mrf.mxu0
        %v2523 = vadd.f32 0.0, %v2522
        %2524 = vmatprep.mubr.bf16.mxu0 0
        %2525 = vmatmul.mubr.bf16.gmra.mxu0 %v529
        %v2526 = vpop.f32.mrf.mxu0
        %v2527 = vadd.f32 0.0, %v2526
        %v2528 = vpop.f32.mrf.mxu0
        %v2529 = vadd.f32 0.0, %v2528
        %v2530 = vpop.f32.mrf.mxu0
        %v2531 = vadd.f32 0.0, %v2530
        %v2532 = vpop.f32.mrf.mxu0
        %v2533 = vadd.f32 0.0, %v2532
        %2534 = vmatprep.mubr.bf16.mxu0 0
        %2535 = vmatmul.mubr.bf16.gmra.mxu0 %v530
        %v2536 = vpop.f32.mrf.mxu0
        %v2537 = vadd.f32 0.0, %v2536
        %v2538 = vpop.f32.mrf.mxu0
        %v2539 = vadd.f32 0.0, %v2538
        %v2540 = vpop.f32.mrf.mxu0
        %v2541 = vadd.f32 0.0, %v2540
        %v2542 = vpop.f32.mrf.mxu0
        %v2543 = vadd.f32 0.0, %v2542
        %2544 = vmatprep.mubr.bf16.mxu0 0
        %2545 = vmatmul.mubr.bf16.gmra.mxu0 %v531
        %v2546 = vpop.f32.mrf.mxu0
        %v2547 = vadd.f32 0.0, %v2546
        %v2548 = vpop.f32.mrf.mxu0
        %v2549 = vadd.f32 0.0, %v2548
        %v2550 = vpop.f32.mrf.mxu0
        %v2551 = vadd.f32 0.0, %v2550
        %v2552 = vpop.f32.mrf.mxu0
        %v2553 = vadd.f32 0.0, %v2552
        %2554 = vmatprep.mubr.bf16.mxu0 0
        %2555 = vmatmul.mubr.bf16.gmra.mxu0 %v532
        %v2556 = vpop.f32.mrf.mxu0
        %v2557 = vadd.f32 0.0, %v2556
        %v2558 = vpop.f32.mrf.mxu0
        %v2559 = vadd.f32 0.0, %v2558
        %v2560 = vpop.f32.mrf.mxu0
        %v2561 = vadd.f32 0.0, %v2560
        %v2562 = vpop.f32.mrf.mxu0
        %v2563 = vadd.f32 0.0, %v2562
        %2564 = vdwg.mxu0
        %2565 = vmatprep.subr.bf16.mxu0 %v2383
        %2566 = vmatpush1.bf16.msra.mxu0 %v2382
        %2567 = vmatprep.subr.bf16.mxu0 %v2375
        %2568 = vmatpush1.bf16.msra.mxu0 %v2374
        %2569 = vmatprep.subr.bf16.mxu0 %v2367
        %2570 = vmatpush1.bf16.msra.mxu0 %v2366
        %2571 = vmatprep.subr.bf16.mxu0 %v2359
        %2572 = vmatpush1.bf16.msra.mxu0 %v2358
        %2573 = vmatprep.subr.bf16.mxu0 %v2351
        %2574 = vmatpush1.bf16.msra.mxu0 %v2350
        %2575 = vmatprep.subr.bf16.mxu0 %v2343
        %2576 = vmatpush1.bf16.msra.mxu0 %v2342
        %2577 = vmatprep.subr.bf16.mxu0 %v2335
        %2578 = vmatpush1.bf16.msra.mxu0 %v2334
        %2579 = vmatprep.subr.bf16.mxu0 %v2327
        %2580 = vmatpush1.bf16.msra.mxu0 %v2326
        %2581 = vmatprep.subr.bf16.mxu0 0
        %2582 = vmatpush2.bf16.msra.mxu0 0
        %2583 = vmatprep.subr.bf16.mxu0 0
        %2584 = vmatpush2.bf16.msra.mxu0 0
        %2585 = vmatprep.subr.bf16.mxu0 0
        %2586 = vmatpush2.bf16.msra.mxu0 0
        %2587 = vmatprep.subr.bf16.mxu0 0
        %2588 = vmatpush2.bf16.msra.mxu0 0
        %2589 = vmatprep.subr.bf16.mxu0 0
        %2590 = vmatpush2.bf16.msra.mxu0 0
        %2591 = vmatprep.subr.bf16.mxu0 0
        %2592 = vmatpush2.bf16.msra.mxu0 0
        %2593 = vmatprep.subr.bf16.mxu0 0
        %2594 = vmatpush2.bf16.msra.mxu0 0
        %2595 = vmatprep.subr.bf16.mxu0 0
        %2596 = vmatpush2.bf16.msra.mxu0 0
        %2597 = vmatprep.mubr.bf16.mxu0 0
        %2598 = vmatmul.mubr.bf16.gmra.mxu0 %v525
        %v2599 = vpop.f32.mrf.mxu0
        %v2600 = vadd.f32 0.0, %v2599
        %v2601 = vpop.f32.mrf.mxu0
        %v2602 = vadd.f32 0.0, %v2601
        %v2603 = vpop.f32.mrf.mxu0
        %v2604 = vadd.f32 0.0, %v2603
        %v2605 = vpop.f32.mrf.mxu0
        %v2606 = vadd.f32 0.0, %v2605
        %2607 = vmatprep.mubr.bf16.mxu0 0
        %2608 = vmatmul.mubr.bf16.gmra.mxu0 %v526
        %v2609 = vpop.f32.mrf.mxu0
        %v2610 = vadd.f32 0.0, %v2609
        %v2611 = vpop.f32.mrf.mxu0
        %v2612 = vadd.f32 0.0, %v2611
        %v2613 = vpop.f32.mrf.mxu0
        %v2614 = vadd.f32 0.0, %v2613
        %v2615 = vpop.f32.mrf.mxu0
        %v2616 = vadd.f32 0.0, %v2615
        %2617 = vmatprep.mubr.bf16.mxu0 0
        %2618 = vmatmul.mubr.bf16.gmra.mxu0 %v527
        %v2619 = vpop.f32.mrf.mxu0
        %v2620 = vadd.f32 0.0, %v2619
        %v2621 = vpop.f32.mrf.mxu0
        %v2622 = vadd.f32 0.0, %v2621
        %v2623 = vpop.f32.mrf.mxu0
        %v2624 = vadd.f32 0.0, %v2623
        %v2625 = vpop.f32.mrf.mxu0
        %v2626 = vadd.f32 0.0, %v2625
        %2627 = vmatprep.mubr.bf16.mxu0 0
        %2628 = vmatmul.mubr.bf16.gmra.mxu0 %v528
        %v2629 = vpop.f32.mrf.mxu0
        %v2630 = vadd.f32 0.0, %v2629
        %v2631 = vpop.f32.mrf.mxu0
        %v2632 = vadd.f32 0.0, %v2631
        %v2633 = vpop.f32.mrf.mxu0
        %v2634 = vadd.f32 0.0, %v2633
        %v2635 = vpop.f32.mrf.mxu0
        %v2636 = vadd.f32 0.0, %v2635
        %2637 = vmatprep.mubr.bf16.mxu0 0
        %2638 = vmatmul.mubr.bf16.gmra.mxu0 %v529
        %v2639 = vpop.f32.mrf.mxu0
        %v2640 = vadd.f32 0.0, %v2639
        %v2641 = vpop.f32.mrf.mxu0
        %v2642 = vadd.f32 0.0, %v2641
        %v2643 = vpop.f32.mrf.mxu0
        %v2644 = vadd.f32 0.0, %v2643
        %v2645 = vpop.f32.mrf.mxu0
        %v2646 = vadd.f32 0.0, %v2645
        %2647 = vmatprep.mubr.bf16.mxu0 0
        %2648 = vmatmul.mubr.bf16.gmra.mxu0 %v530
        %v2649 = vpop.f32.mrf.mxu0
        %v2650 = vadd.f32 0.0, %v2649
        %v2651 = vpop.f32.mrf.mxu0
        %v2652 = vadd.f32 0.0, %v2651
        %v2653 = vpop.f32.mrf.mxu0
        %v2654 = vadd.f32 0.0, %v2653
        %v2655 = vpop.f32.mrf.mxu0
        %v2656 = vadd.f32 0.0, %v2655
        %2657 = vmatprep.mubr.bf16.mxu0 0
        %2658 = vmatmul.mubr.bf16.gmra.mxu0 %v531
        %v2659 = vpop.f32.mrf.mxu0
        %v2660 = vadd.f32 0.0, %v2659
        %v2661 = vpop.f32.mrf.mxu0
        %v2662 = vadd.f32 0.0, %v2661
        %v2663 = vpop.f32.mrf.mxu0
        %v2664 = vadd.f32 0.0, %v2663
        %v2665 = vpop.f32.mrf.mxu0
        %v2666 = vadd.f32 0.0, %v2665
        %2667 = vmatprep.mubr.bf16.mxu0 0
        %2668 = vmatmul.mubr.bf16.gmra.mxu0 %v532
        %v2669 = vpop.f32.mrf.mxu0
        %v2670 = vadd.f32 0.0, %v2669
        %v2671 = vpop.f32.mrf.mxu0
        %v2672 = vadd.f32 0.0, %v2671
        %v2673 = vpop.f32.mrf.mxu0
        %v2674 = vadd.f32 0.0, %v2673
        %v2675 = vpop.f32.mrf.mxu0
        %v2676 = vadd.f32 0.0, %v2675
        %2677 = vdwg.mxu0
        %2678 = vmatprep.subr.bf16.mxu0 %v2385
        %2679 = vmatpush1.bf16.msra.mxu0 %v2384
        %2680 = vmatprep.subr.bf16.mxu0 %v2377
        %2681 = vmatpush1.bf16.msra.mxu0 %v2376
        %2682 = vmatprep.subr.bf16.mxu0 %v2369
        %2683 = vmatpush1.bf16.msra.mxu0 %v2368
        %2684 = vmatprep.subr.bf16.mxu0 %v2361
        %2685 = vmatpush1.bf16.msra.mxu0 %v2360
        %2686 = vmatprep.subr.bf16.mxu0 %v2353
        %2687 = vmatpush1.bf16.msra.mxu0 %v2352
        %2688 = vmatprep.subr.bf16.mxu0 %v2345
        %2689 = vmatpush1.bf16.msra.mxu0 %v2344
        %2690 = vmatprep.subr.bf16.mxu0 %v2337
        %2691 = vmatpush1.bf16.msra.mxu0 %v2336
        %2692 = vmatprep.subr.bf16.mxu0 %v2329
        %2693 = vmatpush1.bf16.msra.mxu0 %v2328
        %2694 = vmatprep.subr.bf16.mxu0 0
        %2695 = vmatpush2.bf16.msra.mxu0 0
        %2696 = vmatprep.subr.bf16.mxu0 0
        %2697 = vmatpush2.bf16.msra.mxu0 0
        %2698 = vmatprep.subr.bf16.mxu0 0
        %2699 = vmatpush2.bf16.msra.mxu0 0
        %2700 = vmatprep.subr.bf16.mxu0 0
        %2701 = vmatpush2.bf16.msra.mxu0 0
        %2702 = vmatprep.subr.bf16.mxu0 0
        %2703 = vmatpush2.bf16.msra.mxu0 0
        %2704 = vmatprep.subr.bf16.mxu0 0
        %2705 = vmatpush2.bf16.msra.mxu0 0
        %2706 = vmatprep.subr.bf16.mxu0 0
        %2707 = vmatpush2.bf16.msra.mxu0 0
        %2708 = vmatprep.subr.bf16.mxu0 0
        %2709 = vmatpush2.bf16.msra.mxu0 0
        %2710 = vmatprep.mubr.bf16.mxu0 0
        %2711 = vmatmul.mubr.bf16.gmra.mxu0 %v525
        %v2712 = vpop.f32.mrf.mxu0
        %v2713 = vadd.f32 0.0, %v2712
        %v2714 = vpop.f32.mrf.mxu0
        %v2715 = vadd.f32 0.0, %v2714
        %v2716 = vpop.f32.mrf.mxu0
        %v2717 = vadd.f32 0.0, %v2716
        %v2718 = vpop.f32.mrf.mxu0
        %v2719 = vadd.f32 0.0, %v2718
        %2720 = vmatprep.mubr.bf16.mxu0 0
        %2721 = vmatmul.mubr.bf16.gmra.mxu0 %v526
        %v2722 = vpop.f32.mrf.mxu0
        %v2723 = vadd.f32 0.0, %v2722
        %v2724 = vpop.f32.mrf.mxu0
        %v2725 = vadd.f32 0.0, %v2724
        %v2726 = vpop.f32.mrf.mxu0
        %v2727 = vadd.f32 0.0, %v2726
        %v2728 = vpop.f32.mrf.mxu0
        %v2729 = vadd.f32 0.0, %v2728
        %2730 = vmatprep.mubr.bf16.mxu0 0
        %2731 = vmatmul.mubr.bf16.gmra.mxu0 %v527
        %v2732 = vpop.f32.mrf.mxu0
        %v2733 = vadd.f32 0.0, %v2732
        %v2734 = vpop.f32.mrf.mxu0
        %v2735 = vadd.f32 0.0, %v2734
        %v2736 = vpop.f32.mrf.mxu0
        %v2737 = vadd.f32 0.0, %v2736
        %v2738 = vpop.f32.mrf.mxu0
        %v2739 = vadd.f32 0.0, %v2738
        %2740 = vmatprep.mubr.bf16.mxu0 0
        %2741 = vmatmul.mubr.bf16.gmra.mxu0 %v528
        %v2742 = vpop.f32.mrf.mxu0
        %v2743 = vadd.f32 0.0, %v2742
        %v2744 = vpop.f32.mrf.mxu0
        %v2745 = vadd.f32 0.0, %v2744
        %v2746 = vpop.f32.mrf.mxu0
        %v2747 = vadd.f32 0.0, %v2746
        %v2748 = vpop.f32.mrf.mxu0
        %v2749 = vadd.f32 0.0, %v2748
        %2750 = vmatprep.mubr.bf16.mxu0 0
        %2751 = vmatmul.mubr.bf16.gmra.mxu0 %v529
        %v2752 = vpop.f32.mrf.mxu0
        %v2753 = vadd.f32 0.0, %v2752
        %v2754 = vpop.f32.mrf.mxu0
        %v2755 = vadd.f32 0.0, %v2754
        %v2756 = vpop.f32.mrf.mxu0
        %v2757 = vadd.f32 0.0, %v2756
        %v2758 = vpop.f32.mrf.mxu0
        %v2759 = vadd.f32 0.0, %v2758
        %2760 = vmatprep.mubr.bf16.mxu0 0
        %2761 = vmatmul.mubr.bf16.gmra.mxu0 %v530
        %v2762 = vpop.f32.mrf.mxu0
        %v2763 = vadd.f32 0.0, %v2762
        %v2764 = vpop.f32.mrf.mxu0
        %v2765 = vadd.f32 0.0, %v2764
        %v2766 = vpop.f32.mrf.mxu0
        %v2767 = vadd.f32 0.0, %v2766
        %v2768 = vpop.f32.mrf.mxu0
        %v2769 = vadd.f32 0.0, %v2768
        %2770 = vmatprep.mubr.bf16.mxu0 0
        %2771 = vmatmul.mubr.bf16.gmra.mxu0 %v531
        %v2772 = vpop.f32.mrf.mxu0
        %v2773 = vadd.f32 0.0, %v2772
        %v2774 = vpop.f32.mrf.mxu0
        %v2775 = vadd.f32 0.0, %v2774
        %v2776 = vpop.f32.mrf.mxu0
        %v2777 = vadd.f32 0.0, %v2776
        %v2778 = vpop.f32.mrf.mxu0
        %v2779 = vadd.f32 0.0, %v2778
        %2780 = vmatprep.mubr.bf16.mxu0 0
        %2781 = vmatmul.mubr.bf16.gmra.mxu0 %v532
        %v2782 = vpop.f32.mrf.mxu0
        %v2783 = vadd.f32 0.0, %v2782
        %v2784 = vpop.f32.mrf.mxu0
        %v2785 = vadd.f32 0.0, %v2784
        %v2786 = vpop.f32.mrf.mxu0
        %v2787 = vadd.f32 0.0, %v2786
        %v2788 = vpop.f32.mrf.mxu0
        %v2789 = vadd.f32 0.0, %v2788
        %2790 = vdwg.mxu0
        %2791 = vmatprep.subr.bf16.mxu0 %v2387
        %2792 = vmatpush1.bf16.msra.mxu0 %v2386
        %2793 = vmatprep.subr.bf16.mxu0 %v2379
        %2794 = vmatpush1.bf16.msra.mxu0 %v2378
        %2795 = vmatprep.subr.bf16.mxu0 %v2371
        %2796 = vmatpush1.bf16.msra.mxu0 %v2370
        %2797 = vmatprep.subr.bf16.mxu0 %v2363
        %2798 = vmatpush1.bf16.msra.mxu0 %v2362
        %2799 = vmatprep.subr.bf16.mxu0 %v2355
        %2800 = vmatpush1.bf16.msra.mxu0 %v2354
        %2801 = vmatprep.subr.bf16.mxu0 %v2347
        %2802 = vmatpush1.bf16.msra.mxu0 %v2346
        %2803 = vmatprep.subr.bf16.mxu0 %v2339
        %2804 = vmatpush1.bf16.msra.mxu0 %v2338
        %2805 = vmatprep.subr.bf16.mxu0 %v2331
        %2806 = vmatpush1.bf16.msra.mxu0 %v2330
        %2807 = vmatprep.subr.bf16.mxu0 0
        %2808 = vmatpush2.bf16.msra.mxu0 0
        %2809 = vmatprep.subr.bf16.mxu0 0
        %2810 = vmatpush2.bf16.msra.mxu0 0
        %2811 = vmatprep.subr.bf16.mxu0 0
        %2812 = vmatpush2.bf16.msra.mxu0 0
        %2813 = vmatprep.subr.bf16.mxu0 0
        %2814 = vmatpush2.bf16.msra.mxu0 0
        %2815 = vmatprep.subr.bf16.mxu0 0
        %2816 = vmatpush2.bf16.msra.mxu0 0
        %2817 = vmatprep.subr.bf16.mxu0 0
        %2818 = vmatpush2.bf16.msra.mxu0 0
        %2819 = vmatprep.subr.bf16.mxu0 0
        %2820 = vmatpush2.bf16.msra.mxu0 0
        %2821 = vmatprep.subr.bf16.mxu0 0
        %2822 = vmatpush2.bf16.msra.mxu0 0
        %2823 = vmatprep.mubr.bf16.mxu0 0
        %2824 = vmatmul.mubr.bf16.gmra.mxu0 %v525
        %v2825 = vpop.f32.mrf.mxu0
        %v2826 = vadd.f32 0.0, %v2825
        %v2827 = vpop.f32.mrf.mxu0
        %v2828 = vadd.f32 0.0, %v2827
        %v2829 = vpop.f32.mrf.mxu0
        %v2830 = vadd.f32 0.0, %v2829
        %v2831 = vpop.f32.mrf.mxu0
        %v2832 = vadd.f32 0.0, %v2831
        %2833 = vmatprep.mubr.bf16.mxu0 0
        %2834 = vmatmul.mubr.bf16.gmra.mxu0 %v526
        %v2835 = vpop.f32.mrf.mxu0
        %v2836 = vadd.f32 0.0, %v2835
        %v2837 = vpop.f32.mrf.mxu0
        %v2838 = vadd.f32 0.0, %v2837
        %v2839 = vpop.f32.mrf.mxu0
        %v2840 = vadd.f32 0.0, %v2839
        %v2841 = vpop.f32.mrf.mxu0
        %v2842 = vadd.f32 0.0, %v2841
        %2843 = vmatprep.mubr.bf16.mxu0 0
        %2844 = vmatmul.mubr.bf16.gmra.mxu0 %v527
        %v2845 = vpop.f32.mrf.mxu0
        %v2846 = vadd.f32 0.0, %v2845
        %v2847 = vpop.f32.mrf.mxu0
        %v2848 = vadd.f32 0.0, %v2847
        %v2849 = vpop.f32.mrf.mxu0
        %v2850 = vadd.f32 0.0, %v2849
        %v2851 = vpop.f32.mrf.mxu0
        %v2852 = vadd.f32 0.0, %v2851
        %2853 = vmatprep.mubr.bf16.mxu0 0
        %2854 = vmatmul.mubr.bf16.gmra.mxu0 %v528
        %v2855 = vpop.f32.mrf.mxu0
        %v2856 = vadd.f32 0.0, %v2855
        %v2857 = vpop.f32.mrf.mxu0
        %v2858 = vadd.f32 0.0, %v2857
        %v2859 = vpop.f32.mrf.mxu0
        %v2860 = vadd.f32 0.0, %v2859
        %v2861 = vpop.f32.mrf.mxu0
        %v2862 = vadd.f32 0.0, %v2861
        %2863 = vmatprep.mubr.bf16.mxu0 0
        %2864 = vmatmul.mubr.bf16.gmra.mxu0 %v529
        %v2865 = vpop.f32.mrf.mxu0
        %v2866 = vadd.f32 0.0, %v2865
        %v2867 = vpop.f32.mrf.mxu0
        %v2868 = vadd.f32 0.0, %v2867
        %v2869 = vpop.f32.mrf.mxu0
        %v2870 = vadd.f32 0.0, %v2869
        %v2871 = vpop.f32.mrf.mxu0
        %v2872 = vadd.f32 0.0, %v2871
        %2873 = vmatprep.mubr.bf16.mxu0 0
        %2874 = vmatmul.mubr.bf16.gmra.mxu0 %v530
        %v2875 = vpop.f32.mrf.mxu0
        %v2876 = vadd.f32 0.0, %v2875
        %v2877 = vpop.f32.mrf.mxu0
        %v2878 = vadd.f32 0.0, %v2877
        %v2879 = vpop.f32.mrf.mxu0
        %v2880 = vadd.f32 0.0, %v2879
        %v2881 = vpop.f32.mrf.mxu0
        %v2882 = vadd.f32 0.0, %v2881
        %2883 = vmatprep.mubr.bf16.mxu0 0
        %2884 = vmatmul.mubr.bf16.gmra.mxu0 %v531
        %v2885 = vpop.f32.mrf.mxu0
        %v2886 = vadd.f32 0.0, %v2885
        %v2887 = vpop.f32.mrf.mxu0
        %v2888 = vadd.f32 0.0, %v2887
        %v2889 = vpop.f32.mrf.mxu0
        %v2890 = vadd.f32 0.0, %v2889
        %v2891 = vpop.f32.mrf.mxu0
        %v2892 = vadd.f32 0.0, %v2891
        %2893 = vmatprep.mubr.bf16.mxu0 0
        %2894 = vmatmul.mubr.bf16.gmra.mxu0 %v532
        %v2895 = vpop.f32.mrf.mxu0
        %v2896 = vadd.f32 0.0, %v2895
        %v2897 = vpop.f32.mrf.mxu0
        %v2898 = vadd.f32 0.0, %v2897
        %v2899 = vpop.f32.mrf.mxu0
        %v2900 = vadd.f32 0.0, %v2899
        %v2901 = vpop.f32.mrf.mxu0
        %v2902 = vadd.f32 0.0, %v2901
        %2903 = vdwg.mxu0
        %s2904 = sadd.s32 %s406, 16
        %s2905 = smul.u32 %s2904, 16
        %s2906 = scalar_lea.vmem [#allocation2], %s2905
        %v2907 = vld [vmem:[%s2906 + $0x4] sm:$0xff]
        %v2908 = vld [vmem:[%s2906 + $0xc] sm:$0xf]
        %v2909 = vld [vmem:[%s2906 + $0x14] sm:$0xff]
        %v2910 = vld [vmem:[%s2906 + $0x1c] sm:$0xf]
        %v2911 = vld [vmem:[%s2906 + $0x24] sm:$0xff]
        %v2912 = vld [vmem:[%s2906 + $0x2c] sm:$0xf]
        %v2913 = vld [vmem:[%s2906 + $0x34] sm:$0xff]
        %v2914 = vld [vmem:[%s2906 + $0x3c] sm:$0xf]
        %v2915 = vld [vmem:[%s2906 + $0x44] sm:$0xff]
        %v2916 = vld [vmem:[%s2906 + $0x4c] sm:$0xf]
        %v2917 = vld [vmem:[%s2906 + $0x54] sm:$0xff]
        %v2918 = vld [vmem:[%s2906 + $0x5c] sm:$0xf]
        %v2919 = vld [vmem:[%s2906 + $0x64] sm:$0xff]
        %v2920 = vld [vmem:[%s2906 + $0x6c] sm:$0xf]
        %v2921 = vld [vmem:[%s2906 + $0x74] sm:$0xff]
        %v2922 = vld [vmem:[%s2906 + $0x7c] sm:$0xf]
        %v2923 = vadd.f32 %v2907, %v2487
        %v2924 = vadd.f32 %v2908, %v2491
        %v2925 = vadd.f32 %v2909, %v2497
        %v2926 = vadd.f32 %v2910, %v2501
        %v2927 = vadd.f32 %v2911, %v2507
        %v2928 = vadd.f32 %v2912, %v2511
        %v2929 = vadd.f32 %v2913, %v2517
        %v2930 = vadd.f32 %v2914, %v2521
        %v2931 = vadd.f32 %v2915, %v2527
        %v2932 = vadd.f32 %v2916, %v2531
        %v2933 = vadd.f32 %v2917, %v2537
        %v2934 = vadd.f32 %v2918, %v2541
        %v2935 = vadd.f32 %v2919, %v2547
        %v2936 = vadd.f32 %v2920, %v2551
        %v2937 = vadd.f32 %v2921, %v2557
        %v2938 = vadd.f32 %v2922, %v2561
        %2939 = vst [vmem:[%s2906 + $0x4] sm:$0xff] %v2923
        %2940 = vst [vmem:[%s2906 + $0xc] sm:$0xf] %v2924
        %2941 = vst [vmem:[%s2906 + $0x14] sm:$0xff] %v2925
        %2942 = vst [vmem:[%s2906 + $0x1c] sm:$0xf] %v2926
        %2943 = vst [vmem:[%s2906 + $0x24] sm:$0xff] %v2927
        %2944 = vst [vmem:[%s2906 + $0x2c] sm:$0xf] %v2928
        %2945 = vst [vmem:[%s2906 + $0x34] sm:$0xff] %v2929
        %2946 = vst [vmem:[%s2906 + $0x3c] sm:$0xf] %v2930
        %2947 = vst [vmem:[%s2906 + $0x44] sm:$0xff] %v2931
        %2948 = vst [vmem:[%s2906 + $0x4c] sm:$0xf] %v2932
        %2949 = vst [vmem:[%s2906 + $0x54] sm:$0xff] %v2933
        %2950 = vst [vmem:[%s2906 + $0x5c] sm:$0xf] %v2934
        %2951 = vst [vmem:[%s2906 + $0x64] sm:$0xff] %v2935
        %2952 = vst [vmem:[%s2906 + $0x6c] sm:$0xf] %v2936
        %2953 = vst [vmem:[%s2906 + $0x74] sm:$0xff] %v2937
        %2954 = vst [vmem:[%s2906 + $0x7c] sm:$0xf] %v2938
        %v2955 = vld [vmem:[%s2906] sm:$0xff]
        %v2956 = vld [vmem:[%s2906 + $0x8] sm:$0xff]
        %v2957 = vld [vmem:[%s2906 + $0x10] sm:$0xff]
        %v2958 = vld [vmem:[%s2906 + $0x18] sm:$0xff]
        %v2959 = vld [vmem:[%s2906 + $0x20] sm:$0xff]
        %v2960 = vld [vmem:[%s2906 + $0x28] sm:$0xff]
        %v2961 = vld [vmem:[%s2906 + $0x30] sm:$0xff]
        %v2962 = vld [vmem:[%s2906 + $0x38] sm:$0xff]
        %v2963 = vld [vmem:[%s2906 + $0x40] sm:$0xff]
        %v2964 = vld [vmem:[%s2906 + $0x48] sm:$0xff]
        %v2965 = vld [vmem:[%s2906 + $0x50] sm:$0xff]
        %v2966 = vld [vmem:[%s2906 + $0x58] sm:$0xff]
        %v2967 = vld [vmem:[%s2906 + $0x60] sm:$0xff]
        %v2968 = vld [vmem:[%s2906 + $0x68] sm:$0xff]
        %v2969 = vld [vmem:[%s2906 + $0x70] sm:$0xff]
        %v2970 = vld [vmem:[%s2906 + $0x78] sm:$0xff]
        %v2971 = vadd.f32 %v2955, %v2489
        %v2972 = vadd.f32 %v2956, %v2493
        %v2973 = vadd.f32 %v2957, %v2499
        %v2974 = vadd.f32 %v2958, %v2503
        %v2975 = vadd.f32 %v2959, %v2509
        %v2976 = vadd.f32 %v2960, %v2513
        %v2977 = vadd.f32 %v2961, %v2519
        %v2978 = vadd.f32 %v2962, %v2523
        %v2979 = vadd.f32 %v2963, %v2529
        %v2980 = vadd.f32 %v2964, %v2533
        %v2981 = vadd.f32 %v2965, %v2539
        %v2982 = vadd.f32 %v2966, %v2543
        %v2983 = vadd.f32 %v2967, %v2549
        %v2984 = vadd.f32 %v2968, %v2553
        %v2985 = vadd.f32 %v2969, %v2559
        %v2986 = vadd.f32 %v2970, %v2563
        %2987 = vst [vmem:[%s2906] sm:$0xff] %v2971
        %2988 = vst [vmem:[%s2906 + $0x8] sm:$0xff] %v2972
        %2989 = vst [vmem:[%s2906 + $0x10] sm:$0xff] %v2973
        %2990 = vst [vmem:[%s2906 + $0x18] sm:$0xff] %v2974
        %2991 = vst [vmem:[%s2906 + $0x20] sm:$0xff] %v2975
        %2992 = vst [vmem:[%s2906 + $0x28] sm:$0xff] %v2976
        %2993 = vst [vmem:[%s2906 + $0x30] sm:$0xff] %v2977
        %2994 = vst [vmem:[%s2906 + $0x38] sm:$0xff] %v2978
        %2995 = vst [vmem:[%s2906 + $0x40] sm:$0xff] %v2979
        %2996 = vst [vmem:[%s2906 + $0x48] sm:$0xff] %v2980
        %2997 = vst [vmem:[%s2906 + $0x50] sm:$0xff] %v2981
        %2998 = vst [vmem:[%s2906 + $0x58] sm:$0xff] %v2982
        %2999 = vst [vmem:[%s2906 + $0x60] sm:$0xff] %v2983
        %3000 = vst [vmem:[%s2906 + $0x68] sm:$0xff] %v2984
        %3001 = vst [vmem:[%s2906 + $0x70] sm:$0xff] %v2985
        %3002 = vst [vmem:[%s2906 + $0x78] sm:$0xff] %v2986
        %v3003 = vld [vmem:[%s2906] sm:$0xff]
        %v3004 = vld [vmem:[%s2906 + $0x8] sm:$0xf]
        %v3005 = vld [vmem:[%s2906 + $0x10] sm:$0xff]
        %v3006 = vld [vmem:[%s2906 + $0x18] sm:$0xf]
        %v3007 = vld [vmem:[%s2906 + $0x20] sm:$0xff]
        %v3008 = vld [vmem:[%s2906 + $0x28] sm:$0xf]
        %v3009 = vld [vmem:[%s2906 + $0x30] sm:$0xff]
        %v3010 = vld [vmem:[%s2906 + $0x38] sm:$0xf]
        %v3011 = vld [vmem:[%s2906 + $0x40] sm:$0xff]
        %v3012 = vld [vmem:[%s2906 + $0x48] sm:$0xf]
        %v3013 = vld [vmem:[%s2906 + $0x50] sm:$0xff]
        %v3014 = vld [vmem:[%s2906 + $0x58] sm:$0xf]
        %v3015 = vld [vmem:[%s2906 + $0x60] sm:$0xff]
        %v3016 = vld [vmem:[%s2906 + $0x68] sm:$0xf]
        %v3017 = vld [vmem:[%s2906 + $0x70] sm:$0xff]
        %v3018 = vld [vmem:[%s2906 + $0x78] sm:$0xf]
        %vm3035 = vcmask 1043456
        %v3036 = vrot.slane %v2600, 4
        %v3037 = vrot.slane %v2604, 4
        %v3038 = vsel %vm3035, %v3036, %v3037
        %v3039 = vrot.slane %v2610, 4
        %v3040 = vrot.slane %v2614, 4
        %v3041 = vsel %vm3035, %v3039, %v3040
        %v3042 = vrot.slane %v2620, 4
        %v3043 = vrot.slane %v2624, 4
        %v3044 = vsel %vm3035, %v3042, %v3043
        %v3045 = vrot.slane %v2630, 4
        %v3046 = vrot.slane %v2634, 4
        %v3047 = vsel %vm3035, %v3045, %v3046
        %v3048 = vrot.slane %v2640, 4
        %v3049 = vrot.slane %v2644, 4
        %v3050 = vsel %vm3035, %v3048, %v3049
        %v3051 = vrot.slane %v2650, 4
        %v3052 = vrot.slane %v2654, 4
        %v3053 = vsel %vm3035, %v3051, %v3052
        %v3054 = vrot.slane %v2660, 4
        %v3055 = vrot.slane %v2664, 4
        %v3056 = vsel %vm3035, %v3054, %v3055
        %v3057 = vrot.slane %v2670, 4
        %v3058 = vrot.slane %v2674, 4
        %v3059 = vsel %vm3035, %v3057, %v3058
        %v3076 = vadd.f32 %v3003, %v3038
        %v3077 = vadd.f32 %v3004, %v3037
        %v3078 = vadd.f32 %v3005, %v3041
        %v3079 = vadd.f32 %v3006, %v3040
        %v3080 = vadd.f32 %v3007, %v3044
        %v3081 = vadd.f32 %v3008, %v3043
        %v3082 = vadd.f32 %v3009, %v3047
        %v3083 = vadd.f32 %v3010, %v3046
        %v3084 = vadd.f32 %v3011, %v3050
        %v3085 = vadd.f32 %v3012, %v3049
        %v3086 = vadd.f32 %v3013, %v3053
        %v3087 = vadd.f32 %v3014, %v3052
        %v3088 = vadd.f32 %v3015, %v3056
        %v3089 = vadd.f32 %v3016, %v3055
        %v3090 = vadd.f32 %v3017, %v3059
        %v3091 = vadd.f32 %v3018, %v3058
        %3092 = vst [vmem:[%s2906] sm:$0xff] %v3076
        %3093 = vst [vmem:[%s2906 + $0x8] sm:$0xf] %v3077
        %3094 = vst [vmem:[%s2906 + $0x10] sm:$0xff] %v3078
        %3095 = vst [vmem:[%s2906 + $0x18] sm:$0xf] %v3079
        %3096 = vst [vmem:[%s2906 + $0x20] sm:$0xff] %v3080
        %3097 = vst [vmem:[%s2906 + $0x28] sm:$0xf] %v3081
        %3098 = vst [vmem:[%s2906 + $0x30] sm:$0xff] %v3082
        %3099 = vst [vmem:[%s2906 + $0x38] sm:$0xf] %v3083
        %3100 = vst [vmem:[%s2906 + $0x40] sm:$0xff] %v3084
        %3101 = vst [vmem:[%s2906 + $0x48] sm:$0xf] %v3085
        %3102 = vst [vmem:[%s2906 + $0x50] sm:$0xff] %v3086
        %3103 = vst [vmem:[%s2906 + $0x58] sm:$0xf] %v3087
        %3104 = vst [vmem:[%s2906 + $0x60] sm:$0xff] %v3088
        %3105 = vst [vmem:[%s2906 + $0x68] sm:$0xf] %v3089
        %3106 = vst [vmem:[%s2906 + $0x70] sm:$0xff] %v3090
        %3107 = vst [vmem:[%s2906 + $0x78] sm:$0xf] %v3091
        %v3108 = vld [vmem:[%s1664 + $0x4] sm:$0xff]
        %v3109 = vld [vmem:[%s1664 + $0xc] sm:$0xf]
        %v3110 = vld [vmem:[%s1664 + $0x14] sm:$0xff]
        %v3111 = vld [vmem:[%s1664 + $0x1c] sm:$0xf]
        %v3112 = vld [vmem:[%s1664 + $0x24] sm:$0xff]
        %v3113 = vld [vmem:[%s1664 + $0x2c] sm:$0xf]
        %v3114 = vld [vmem:[%s1664 + $0x34] sm:$0xff]
        %v3115 = vld [vmem:[%s1664 + $0x3c] sm:$0xf]
        %v3116 = vld [vmem:[%s1664 + $0x44] sm:$0xff]
        %v3117 = vld [vmem:[%s1664 + $0x4c] sm:$0xf]
        %v3118 = vld [vmem:[%s1664 + $0x54] sm:$0xff]
        %v3119 = vld [vmem:[%s1664 + $0x5c] sm:$0xf]
        %v3120 = vld [vmem:[%s1664 + $0x64] sm:$0xff]
        %v3121 = vld [vmem:[%s1664 + $0x6c] sm:$0xf]
        %v3122 = vld [vmem:[%s1664 + $0x74] sm:$0xff]
        %v3123 = vld [vmem:[%s1664 + $0x7c] sm:$0xf]
        %v3124 = vadd.f32 %v3108, %v2602
        %v3125 = vadd.f32 %v3109, %v2606
        %v3126 = vadd.f32 %v3110, %v2612
        %v3127 = vadd.f32 %v3111, %v2616
        %v3128 = vadd.f32 %v3112, %v2622
        %v3129 = vadd.f32 %v3113, %v2626
        %v3130 = vadd.f32 %v3114, %v2632
        %v3131 = vadd.f32 %v3115, %v2636
        %v3132 = vadd.f32 %v3116, %v2642
        %v3133 = vadd.f32 %v3117, %v2646
        %v3134 = vadd.f32 %v3118, %v2652
        %v3135 = vadd.f32 %v3119, %v2656
        %v3136 = vadd.f32 %v3120, %v2662
        %v3137 = vadd.f32 %v3121, %v2666
        %v3138 = vadd.f32 %v3122, %v2672
        %v3139 = vadd.f32 %v3123, %v2676
        %3140 = vst [vmem:[%s1664 + $0x4] sm:$0xff] %v3124
        %3141 = vst [vmem:[%s1664 + $0xc] sm:$0xf] %v3125
        %3142 = vst [vmem:[%s1664 + $0x14] sm:$0xff] %v3126
        %3143 = vst [vmem:[%s1664 + $0x1c] sm:$0xf] %v3127
        %3144 = vst [vmem:[%s1664 + $0x24] sm:$0xff] %v3128
        %3145 = vst [vmem:[%s1664 + $0x2c] sm:$0xf] %v3129
        %3146 = vst [vmem:[%s1664 + $0x34] sm:$0xff] %v3130
        %3147 = vst [vmem:[%s1664 + $0x3c] sm:$0xf] %v3131
        %3148 = vst [vmem:[%s1664 + $0x44] sm:$0xff] %v3132
        %3149 = vst [vmem:[%s1664 + $0x4c] sm:$0xf] %v3133
        %3150 = vst [vmem:[%s1664 + $0x54] sm:$0xff] %v3134
        %3151 = vst [vmem:[%s1664 + $0x5c] sm:$0xf] %v3135
        %3152 = vst [vmem:[%s1664 + $0x64] sm:$0xff] %v3136
        %3153 = vst [vmem:[%s1664 + $0x6c] sm:$0xf] %v3137
        %3154 = vst [vmem:[%s1664 + $0x74] sm:$0xff] %v3138
        %3155 = vst [vmem:[%s1664 + $0x7c] sm:$0xf] %v3139
        %v3156 = vld [vmem:[%s1664] sm:$0xff]
        %v3157 = vld [vmem:[%s1664 + $0x8] sm:$0xf]
        %v3158 = vld [vmem:[%s1664 + $0x10] sm:$0xff]
        %v3159 = vld [vmem:[%s1664 + $0x18] sm:$0xf]
        %v3160 = vld [vmem:[%s1664 + $0x20] sm:$0xff]
        %v3161 = vld [vmem:[%s1664 + $0x28] sm:$0xf]
        %v3162 = vld [vmem:[%s1664 + $0x30] sm:$0xff]
        %v3163 = vld [vmem:[%s1664 + $0x38] sm:$0xf]
        %v3164 = vld [vmem:[%s1664 + $0x40] sm:$0xff]
        %v3165 = vld [vmem:[%s1664 + $0x48] sm:$0xf]
        %v3166 = vld [vmem:[%s1664 + $0x50] sm:$0xff]
        %v3167 = vld [vmem:[%s1664 + $0x58] sm:$0xf]
        %v3168 = vld [vmem:[%s1664 + $0x60] sm:$0xff]
        %v3169 = vld [vmem:[%s1664 + $0x68] sm:$0xf]
        %v3170 = vld [vmem:[%s1664 + $0x70] sm:$0xff]
        %v3171 = vld [vmem:[%s1664 + $0x78] sm:$0xf]
        %v3188 = vrot.slane %v2713, 4
        %v3189 = vrot.slane %v2717, 4
        %v3190 = vsel %vm3035, %v3188, %v3189
        %v3191 = vrot.slane %v2723, 4
        %v3192 = vrot.slane %v2727, 4
        %v3193 = vsel %vm3035, %v3191, %v3192
        %v3194 = vrot.slane %v2733, 4
        %v3195 = vrot.slane %v2737, 4
        %v3196 = vsel %vm3035, %v3194, %v3195
        %v3197 = vrot.slane %v2743, 4
        %v3198 = vrot.slane %v2747, 4
        %v3199 = vsel %vm3035, %v3197, %v3198
        %v3200 = vrot.slane %v2753, 4
        %v3201 = vrot.slane %v2757, 4
        %v3202 = vsel %vm3035, %v3200, %v3201
        %v3203 = vrot.slane %v2763, 4
        %v3204 = vrot.slane %v2767, 4
        %v3205 = vsel %vm3035, %v3203, %v3204
        %v3206 = vrot.slane %v2773, 4
        %v3207 = vrot.slane %v2777, 4
        %v3208 = vsel %vm3035, %v3206, %v3207
        %v3209 = vrot.slane %v2783, 4
        %v3210 = vrot.slane %v2787, 4
        %v3211 = vsel %vm3035, %v3209, %v3210
        %v3228 = vadd.f32 %v3156, %v3190
        %v3229 = vadd.f32 %v3157, %v3189
        %v3230 = vadd.f32 %v3158, %v3193
        %v3231 = vadd.f32 %v3159, %v3192
        %v3232 = vadd.f32 %v3160, %v3196
        %v3233 = vadd.f32 %v3161, %v3195
        %v3234 = vadd.f32 %v3162, %v3199
        %v3235 = vadd.f32 %v3163, %v3198
        %v3236 = vadd.f32 %v3164, %v3202
        %v3237 = vadd.f32 %v3165, %v3201
        %v3238 = vadd.f32 %v3166, %v3205
        %v3239 = vadd.f32 %v3167, %v3204
        %v3240 = vadd.f32 %v3168, %v3208
        %v3241 = vadd.f32 %v3169, %v3207
        %v3242 = vadd.f32 %v3170, %v3211
        %v3243 = vadd.f32 %v3171, %v3210
        %3244 = vst [vmem:[%s1664] sm:$0xff] %v3228
        %3245 = vst [vmem:[%s1664 + $0x8] sm:$0xf] %v3229
        %3246 = vst [vmem:[%s1664 + $0x10] sm:$0xff] %v3230
        %3247 = vst [vmem:[%s1664 + $0x18] sm:$0xf] %v3231
        %3248 = vst [vmem:[%s1664 + $0x20] sm:$0xff] %v3232
        %3249 = vst [vmem:[%s1664 + $0x28] sm:$0xf] %v3233
        %3250 = vst [vmem:[%s1664 + $0x30] sm:$0xff] %v3234
        %3251 = vst [vmem:[%s1664 + $0x38] sm:$0xf] %v3235
        %3252 = vst [vmem:[%s1664 + $0x40] sm:$0xff] %v3236
        %3253 = vst [vmem:[%s1664 + $0x48] sm:$0xf] %v3237
        %3254 = vst [vmem:[%s1664 + $0x50] sm:$0xff] %v3238
        %3255 = vst [vmem:[%s1664 + $0x58] sm:$0xf] %v3239
        %3256 = vst [vmem:[%s1664 + $0x60] sm:$0xff] %v3240
        %3257 = vst [vmem:[%s1664 + $0x68] sm:$0xf] %v3241
        %3258 = vst [vmem:[%s1664 + $0x70] sm:$0xff] %v3242
        %3259 = vst [vmem:[%s1664 + $0x78] sm:$0xf] %v3243
        %s3260 = sadd.s32 %s406, 8
        %s3261 = smul.u32 %s3260, 16
        %s3262 = scalar_lea.vmem [#allocation2], %s3261
        %v3263 = vld [vmem:[%s3262 + $0x4] sm:$0xff]
        %v3264 = vld [vmem:[%s3262 + $0xc] sm:$0xf]
        %v3265 = vld [vmem:[%s3262 + $0x14] sm:$0xff]
        %v3266 = vld [vmem:[%s3262 + $0x1c] sm:$0xf]
        %v3267 = vld [vmem:[%s3262 + $0x24] sm:$0xff]
        %v3268 = vld [vmem:[%s3262 + $0x2c] sm:$0xf]
        %v3269 = vld [vmem:[%s3262 + $0x34] sm:$0xff]
        %v3270 = vld [vmem:[%s3262 + $0x3c] sm:$0xf]
        %v3271 = vld [vmem:[%s3262 + $0x44] sm:$0xff]
        %v3272 = vld [vmem:[%s3262 + $0x4c] sm:$0xf]
        %v3273 = vld [vmem:[%s3262 + $0x54] sm:$0xff]
        %v3274 = vld [vmem:[%s3262 + $0x5c] sm:$0xf]
        %v3275 = vld [vmem:[%s3262 + $0x64] sm:$0xff]
        %v3276 = vld [vmem:[%s3262 + $0x6c] sm:$0xf]
        %v3277 = vld [vmem:[%s3262 + $0x74] sm:$0xff]
        %v3278 = vld [vmem:[%s3262 + $0x7c] sm:$0xf]
        %v3279 = vadd.f32 %v3263, %v2715
        %v3280 = vadd.f32 %v3264, %v2719
        %v3281 = vadd.f32 %v3265, %v2725
        %v3282 = vadd.f32 %v3266, %v2729
        %v3283 = vadd.f32 %v3267, %v2735
        %v3284 = vadd.f32 %v3268, %v2739
        %v3285 = vadd.f32 %v3269, %v2745
        %v3286 = vadd.f32 %v3270, %v2749
        %v3287 = vadd.f32 %v3271, %v2755
        %v3288 = vadd.f32 %v3272, %v2759
        %v3289 = vadd.f32 %v3273, %v2765
        %v3290 = vadd.f32 %v3274, %v2769
        %v3291 = vadd.f32 %v3275, %v2775
        %v3292 = vadd.f32 %v3276, %v2779
        %v3293 = vadd.f32 %v3277, %v2785
        %v3294 = vadd.f32 %v3278, %v2789
        %3295 = vst [vmem:[%s3262 + $0x4] sm:$0xff] %v3279
        %3296 = vst [vmem:[%s3262 + $0xc] sm:$0xf] %v3280
        %3297 = vst [vmem:[%s3262 + $0x14] sm:$0xff] %v3281
        %3298 = vst [vmem:[%s3262 + $0x1c] sm:$0xf] %v3282
        %3299 = vst [vmem:[%s3262 + $0x24] sm:$0xff] %v3283
        %3300 = vst [vmem:[%s3262 + $0x2c] sm:$0xf] %v3284
        %3301 = vst [vmem:[%s3262 + $0x34] sm:$0xff] %v3285
        %3302 = vst [vmem:[%s3262 + $0x3c] sm:$0xf] %v3286
        %3303 = vst [vmem:[%s3262 + $0x44] sm:$0xff] %v3287
        %3304 = vst [vmem:[%s3262 + $0x4c] sm:$0xf] %v3288
        %3305 = vst [vmem:[%s3262 + $0x54] sm:$0xff] %v3289
        %3306 = vst [vmem:[%s3262 + $0x5c] sm:$0xf] %v3290
        %3307 = vst [vmem:[%s3262 + $0x64] sm:$0xff] %v3291
        %3308 = vst [vmem:[%s3262 + $0x6c] sm:$0xf] %v3292
        %3309 = vst [vmem:[%s3262 + $0x74] sm:$0xff] %v3293
        %3310 = vst [vmem:[%s3262 + $0x7c] sm:$0xf] %v3294
        %v3311 = vld [vmem:[%s3262] sm:$0xff]
        %v3312 = vld [vmem:[%s3262 + $0x8] sm:$0xff]
        %v3313 = vld [vmem:[%s3262 + $0x10] sm:$0xff]
        %v3314 = vld [vmem:[%s3262 + $0x18] sm:$0xff]
        %v3315 = vld [vmem:[%s3262 + $0x20] sm:$0xff]
        %v3316 = vld [vmem:[%s3262 + $0x28] sm:$0xff]
        %v3317 = vld [vmem:[%s3262 + $0x30] sm:$0xff]
        %v3318 = vld [vmem:[%s3262 + $0x38] sm:$0xff]
        %v3319 = vld [vmem:[%s3262 + $0x40] sm:$0xff]
        %v3320 = vld [vmem:[%s3262 + $0x48] sm:$0xff]
        %v3321 = vld [vmem:[%s3262 + $0x50] sm:$0xff]
        %v3322 = vld [vmem:[%s3262 + $0x58] sm:$0xff]
        %v3323 = vld [vmem:[%s3262 + $0x60] sm:$0xff]
        %v3324 = vld [vmem:[%s3262 + $0x68] sm:$0xff]
        %v3325 = vld [vmem:[%s3262 + $0x70] sm:$0xff]
        %v3326 = vld [vmem:[%s3262 + $0x78] sm:$0xff]
        %v3327 = vadd.f32 %v3311, %v2826
        %v3328 = vadd.f32 %v3312, %v2830
        %v3329 = vadd.f32 %v3313, %v2836
        %v3330 = vadd.f32 %v3314, %v2840
        %v3331 = vadd.f32 %v3315, %v2846
        %v3332 = vadd.f32 %v3316, %v2850
        %v3333 = vadd.f32 %v3317, %v2856
        %v3334 = vadd.f32 %v3318, %v2860
        %v3335 = vadd.f32 %v3319, %v2866
        %v3336 = vadd.f32 %v3320, %v2870
        %v3337 = vadd.f32 %v3321, %v2876
        %v3338 = vadd.f32 %v3322, %v2880
        %v3339 = vadd.f32 %v3323, %v2886
        %v3340 = vadd.f32 %v3324, %v2890
        %v3341 = vadd.f32 %v3325, %v2896
        %v3342 = vadd.f32 %v3326, %v2900
        %3343 = vst [vmem:[%s3262] sm:$0xff] %v3327
        %3344 = vst [vmem:[%s3262 + $0x8] sm:$0xff] %v3328
        %3345 = vst [vmem:[%s3262 + $0x10] sm:$0xff] %v3329
        %3346 = vst [vmem:[%s3262 + $0x18] sm:$0xff] %v3330
        %3347 = vst [vmem:[%s3262 + $0x20] sm:$0xff] %v3331
        %3348 = vst [vmem:[%s3262 + $0x28] sm:$0xff] %v3332
        %3349 = vst [vmem:[%s3262 + $0x30] sm:$0xff] %v3333
        %3350 = vst [vmem:[%s3262 + $0x38] sm:$0xff] %v3334
        %3351 = vst [vmem:[%s3262 + $0x40] sm:$0xff] %v3335
        %3352 = vst [vmem:[%s3262 + $0x48] sm:$0xff] %v3336
        %3353 = vst [vmem:[%s3262 + $0x50] sm:$0xff] %v3337
        %3354 = vst [vmem:[%s3262 + $0x58] sm:$0xff] %v3338
        %3355 = vst [vmem:[%s3262 + $0x60] sm:$0xff] %v3339
        %3356 = vst [vmem:[%s3262 + $0x68] sm:$0xff] %v3340
        %3357 = vst [vmem:[%s3262 + $0x70] sm:$0xff] %v3341
        %3358 = vst [vmem:[%s3262 + $0x78] sm:$0xff] %v3342
        %v3359 = vld [vmem:[%s3262] sm:$0xff]
        %v3360 = vld [vmem:[%s3262 + $0x8] sm:$0xf]
        %v3361 = vld [vmem:[%s3262 + $0x10] sm:$0xff]
        %v3362 = vld [vmem:[%s3262 + $0x18] sm:$0xf]
        %v3363 = vld [vmem:[%s3262 + $0x20] sm:$0xff]
        %v3364 = vld [vmem:[%s3262 + $0x28] sm:$0xf]
        %v3365 = vld [vmem:[%s3262 + $0x30] sm:$0xff]
        %v3366 = vld [vmem:[%s3262 + $0x38] sm:$0xf]
        %v3367 = vld [vmem:[%s3262 + $0x40] sm:$0xff]
        %v3368 = vld [vmem:[%s3262 + $0x48] sm:$0xf]
        %v3369 = vld [vmem:[%s3262 + $0x50] sm:$0xff]
        %v3370 = vld [vmem:[%s3262 + $0x58] sm:$0xf]
        %v3371 = vld [vmem:[%s3262 + $0x60] sm:$0xff]
        %v3372 = vld [vmem:[%s3262 + $0x68] sm:$0xf]
        %v3373 = vld [vmem:[%s3262 + $0x70] sm:$0xff]
        %v3374 = vld [vmem:[%s3262 + $0x78] sm:$0xf]
        %v3391 = vrot.slane %v2828, 4
        %v3392 = vrot.slane %v2832, 4
        %v3393 = vsel %vm3035, %v3391, %v3392
        %v3394 = vrot.slane %v2838, 4
        %v3395 = vrot.slane %v2842, 4
        %v3396 = vsel %vm3035, %v3394, %v3395
        %v3397 = vrot.slane %v2848, 4
        %v3398 = vrot.slane %v2852, 4
        %v3399 = vsel %vm3035, %v3397, %v3398
        %v3400 = vrot.slane %v2858, 4
        %v3401 = vrot.slane %v2862, 4
        %v3402 = vsel %vm3035, %v3400, %v3401
        %v3403 = vrot.slane %v2868, 4
        %v3404 = vrot.slane %v2872, 4
        %v3405 = vsel %vm3035, %v3403, %v3404
        %v3406 = vrot.slane %v2878, 4
        %v3407 = vrot.slane %v2882, 4
        %v3408 = vsel %vm3035, %v3406, %v3407
        %v3409 = vrot.slane %v2888, 4
        %v3410 = vrot.slane %v2892, 4
        %v3411 = vsel %vm3035, %v3409, %v3410
        %v3412 = vrot.slane %v2898, 4
        %v3413 = vrot.slane %v2902, 4
        %v3414 = vsel %vm3035, %v3412, %v3413
        %v3431 = vadd.f32 %v3359, %v3393
        %v3432 = vadd.f32 %v3360, %v3392
        %v3433 = vadd.f32 %v3361, %v3396
        %v3434 = vadd.f32 %v3362, %v3395
        %v3435 = vadd.f32 %v3363, %v3399
        %v3436 = vadd.f32 %v3364, %v3398
        %v3437 = vadd.f32 %v3365, %v3402
        %v3438 = vadd.f32 %v3366, %v3401
        %v3439 = vadd.f32 %v3367, %v3405
        %v3440 = vadd.f32 %v3368, %v3404
        %v3441 = vadd.f32 %v3369, %v3408
        %v3442 = vadd.f32 %v3370, %v3407
        %v3443 = vadd.f32 %v3371, %v3411
        %v3444 = vadd.f32 %v3372, %v3410
        %v3445 = vadd.f32 %v3373, %v3414
        %v3446 = vadd.f32 %v3374, %v3413
        %3447 = vst [vmem:[%s3262] sm:$0xff] %v3431
        %3448 = vst [vmem:[%s3262 + $0x8] sm:$0xf] %v3432
        %3449 = vst [vmem:[%s3262 + $0x10] sm:$0xff] %v3433
        %3450 = vst [vmem:[%s3262 + $0x18] sm:$0xf] %v3434
        %3451 = vst [vmem:[%s3262 + $0x20] sm:$0xff] %v3435
        %3452 = vst [vmem:[%s3262 + $0x28] sm:$0xf] %v3436
        %3453 = vst [vmem:[%s3262 + $0x30] sm:$0xff] %v3437
        %3454 = vst [vmem:[%s3262 + $0x38] sm:$0xf] %v3438
        %3455 = vst [vmem:[%s3262 + $0x40] sm:$0xff] %v3439
        %3456 = vst [vmem:[%s3262 + $0x48] sm:$0xf] %v3440
        %3457 = vst [vmem:[%s3262 + $0x50] sm:$0xff] %v3441
        %3458 = vst [vmem:[%s3262 + $0x58] sm:$0xf] %v3442
        %3459 = vst [vmem:[%s3262 + $0x60] sm:$0xff] %v3443
        %3460 = vst [vmem:[%s3262 + $0x68] sm:$0xf] %v3444
        %3461 = vst [vmem:[%s3262 + $0x70] sm:$0xff] %v3445
        %3462 = vst [vmem:[%s3262 + $0x78] sm:$0xf] %v3446
        %v3463 = vld [vmem:[%s412 + $0x44] sm:$0xff]
        %v3464 = vld [vmem:[%s412 + $0x4c] sm:$0xff]
        %v3465 = vld [vmem:[%s412 + $0x54] sm:$0xff]
        %v3466 = vld [vmem:[%s412 + $0x5c] sm:$0xff]
        %v3467 = vld [vmem:[%s412 + $0xc8] sm:$0xff]
        %v3468 = vld [vmem:[%s412 + $0xd0] sm:$0xff]
        %v3469 = vld [vmem:[%s412 + $0xd8] sm:$0xff]
        %v3470 = vld [vmem:[%s412 + $0xe0] sm:$0xff]
        %v3471 = vld [vmem:[%s412 + $0x14c] sm:$0xff]
        %v3472 = vld [vmem:[%s412 + $0x154] sm:$0xff]
        %v3473 = vld [vmem:[%s412 + $0x15c] sm:$0xff]
        %v3474 = vld [vmem:[%s412 + $0x164] sm:$0xff]
        %v3475 = vld [vmem:[%s412 + $0x1d0] sm:$0xff]
        %v3476 = vld [vmem:[%s412 + $0x1d8] sm:$0xff]
        %v3477 = vld [vmem:[%s412 + $0x1e0] sm:$0xff]
        %v3478 = vld [vmem:[%s412 + $0x1e8] sm:$0xff]
        %v3479 = vld [vmem:[%s412 + $0x254] sm:$0xff]
        %v3480 = vld [vmem:[%s412 + $0x25c] sm:$0xff]
        %v3481 = vld [vmem:[%s412 + $0x264] sm:$0xff]
        %v3482 = vld [vmem:[%s412 + $0x26c] sm:$0xff]
        %v3483 = vld [vmem:[%s412 + $0x2d8] sm:$0xff]
        %v3484 = vld [vmem:[%s412 + $0x2e0] sm:$0xff]
        %v3485 = vld [vmem:[%s412 + $0x2e8] sm:$0xff]
        %v3486 = vld [vmem:[%s412 + $0x2f0] sm:$0xff]
        %v3487 = vld [vmem:[%s412 + $0x35c] sm:$0xff]
        %v3488 = vld [vmem:[%s412 + $0x364] sm:$0xff]
        %v3489 = vld [vmem:[%s412 + $0x36c] sm:$0xff]
        %v3490 = vld [vmem:[%s412 + $0x374] sm:$0xff]
        %v3491 = vld [vmem:[%s412 + $0x3e0] sm:$0xff]
        %v3492 = vld [vmem:[%s412 + $0x3e8] sm:$0xff]
        %v3493 = vld [vmem:[%s412 + $0x3f0] sm:$0xff]
        %v3494 = vld [vmem:[%s412 + $0x3f8] sm:$0xff]
        %v3495 = vld [vmem:[%s412 + $0x464] sm:$0xff]
        %v3496 = vld [vmem:[%s412 + $0x46c] sm:$0xff]
        %v3497 = vld [vmem:[%s412 + $0x474] sm:$0xff]
        %v3498 = vld [vmem:[%s412 + $0x47c] sm:$0xff]
        %v3499 = vld [vmem:[%s412 + $0x4e8] sm:$0xff]
        %v3500 = vld [vmem:[%s412 + $0x4f0] sm:$0xff]
        %v3501 = vld [vmem:[%s412 + $0x4f8] sm:$0xff]
        %v3502 = vld [vmem:[%s412 + $0x500] sm:$0xff]
        %v3503 = vld [vmem:[%s412 + $0x56c] sm:$0xff]
        %v3504 = vld [vmem:[%s412 + $0x574] sm:$0xff]
        %v3505 = vld [vmem:[%s412 + $0x57c] sm:$0xff]
        %v3506 = vld [vmem:[%s412 + $0x584] sm:$0xff]
        %v3507 = vld [vmem:[%s412 + $0x5f0] sm:$0xff]
        %v3508 = vld [vmem:[%s412 + $0x5f8] sm:$0xff]
        %v3509 = vld [vmem:[%s412 + $0x600] sm:$0xff]
        %v3510 = vld [vmem:[%s412 + $0x608] sm:$0xff]
        %v3511 = vld [vmem:[%s412 + $0x674] sm:$0xff]
        %v3512 = vld [vmem:[%s412 + $0x67c] sm:$0xff]
        %v3513 = vld [vmem:[%s412 + $0x684] sm:$0xff]
        %v3514 = vld [vmem:[%s412 + $0x68c] sm:$0xff]
        %v3515 = vld [vmem:[%s412 + $0x6f8] sm:$0xff]
        %v3516 = vld [vmem:[%s412 + $0x700] sm:$0xff]
        %v3517 = vld [vmem:[%s412 + $0x708] sm:$0xff]
        %v3518 = vld [vmem:[%s412 + $0x710] sm:$0xff]
        %v3519 = vld [vmem:[%s412 + $0x77c] sm:$0xff]
        %v3520 = vld [vmem:[%s412 + $0x784] sm:$0xff]
        %v3521 = vld [vmem:[%s412 + $0x78c] sm:$0xff]
        %v3522 = vld [vmem:[%s412 + $0x794] sm:$0xff]
        %v3523 = vld [vmem:[%s412 + $0x800] sm:$0xff]
        %v3524 = vld [vmem:[%s412 + $0x808] sm:$0xff]
        %v3525 = vld [vmem:[%s412 + $0x810] sm:$0xff]
        %v3526 = vld [vmem:[%s412 + $0x818] sm:$0xff]
        %v3591 = vunpack.c.l.b16 %v3463
        %v3592 = vunpack.c.h.b16 %v3463
        %v3593 = vunpack.c.l.b16 %v3464
        %v3594 = vunpack.c.h.b16 %v3464
        %v3595 = vunpack.c.l.b16 %v3465
        %v3596 = vunpack.c.h.b16 %v3465
        %v3597 = vunpack.c.l.b16 %v3466
        %v3598 = vunpack.c.h.b16 %v3466
        %v3599 = vunpack.c.l.b16 %v3467
        %v3600 = vunpack.c.h.b16 %v3467
        %v3601 = vunpack.c.l.b16 %v3468
        %v3602 = vunpack.c.h.b16 %v3468
        %v3603 = vunpack.c.l.b16 %v3469
        %v3604 = vunpack.c.h.b16 %v3469
        %v3605 = vunpack.c.l.b16 %v3470
        %v3606 = vunpack.c.h.b16 %v3470
        %v3607 = vunpack.c.l.b16 %v3471
        %v3608 = vunpack.c.h.b16 %v3471
        %v3609 = vunpack.c.l.b16 %v3472
        %v3610 = vunpack.c.h.b16 %v3472
        %v3611 = vunpack.c.l.b16 %v3473
        %v3612 = vunpack.c.h.b16 %v3473
        %v3613 = vunpack.c.l.b16 %v3474
        %v3614 = vunpack.c.h.b16 %v3474
        %v3615 = vunpack.c.l.b16 %v3475
        %v3616 = vunpack.c.h.b16 %v3475
        %v3617 = vunpack.c.l.b16 %v3476
        %v3618 = vunpack.c.h.b16 %v3476
        %v3619 = vunpack.c.l.b16 %v3477
        %v3620 = vunpack.c.h.b16 %v3477
        %v3621 = vunpack.c.l.b16 %v3478
        %v3622 = vunpack.c.h.b16 %v3478
        %v3623 = vunpack.c.l.b16 %v3479
        %v3624 = vunpack.c.h.b16 %v3479
        %v3625 = vunpack.c.l.b16 %v3480
        %v3626 = vunpack.c.h.b16 %v3480
        %v3627 = vunpack.c.l.b16 %v3481
        %v3628 = vunpack.c.h.b16 %v3481
        %v3629 = vunpack.c.l.b16 %v3482
        %v3630 = vunpack.c.h.b16 %v3482
        %v3631 = vunpack.c.l.b16 %v3483
        %v3632 = vunpack.c.h.b16 %v3483
        %v3633 = vunpack.c.l.b16 %v3484
        %v3634 = vunpack.c.h.b16 %v3484
        %v3635 = vunpack.c.l.b16 %v3485
        %v3636 = vunpack.c.h.b16 %v3485
        %v3637 = vunpack.c.l.b16 %v3486
        %v3638 = vunpack.c.h.b16 %v3486
        %v3639 = vunpack.c.l.b16 %v3487
        %v3640 = vunpack.c.h.b16 %v3487
        %v3641 = vunpack.c.l.b16 %v3488
        %v3642 = vunpack.c.h.b16 %v3488
        %v3643 = vunpack.c.l.b16 %v3489
        %v3644 = vunpack.c.h.b16 %v3489
        %v3645 = vunpack.c.l.b16 %v3490
        %v3646 = vunpack.c.h.b16 %v3490
        %v3647 = vunpack.c.l.b16 %v3491
        %v3648 = vunpack.c.h.b16 %v3491
        %v3649 = vunpack.c.l.b16 %v3492
        %v3650 = vunpack.c.h.b16 %v3492
        %v3651 = vunpack.c.l.b16 %v3493
        %v3652 = vunpack.c.h.b16 %v3493
        %v3653 = vunpack.c.l.b16 %v3494
        %v3654 = vunpack.c.h.b16 %v3494
        %v3655 = vunpack.c.l.b16 %v3495
        %v3656 = vunpack.c.h.b16 %v3495
        %v3657 = vunpack.c.l.b16 %v3496
        %v3658 = vunpack.c.h.b16 %v3496
        %v3659 = vunpack.c.l.b16 %v3497
        %v3660 = vunpack.c.h.b16 %v3497
        %v3661 = vunpack.c.l.b16 %v3498
        %v3662 = vunpack.c.h.b16 %v3498
        %v3663 = vunpack.c.l.b16 %v3499
        %v3664 = vunpack.c.h.b16 %v3499
        %v3665 = vunpack.c.l.b16 %v3500
        %v3666 = vunpack.c.h.b16 %v3500
        %v3667 = vunpack.c.l.b16 %v3501
        %v3668 = vunpack.c.h.b16 %v3501
        %v3669 = vunpack.c.l.b16 %v3502
        %v3670 = vunpack.c.h.b16 %v3502
        %v3671 = vunpack.c.l.b16 %v3503
        %v3672 = vunpack.c.h.b16 %v3503
        %v3673 = vunpack.c.l.b16 %v3504
        %v3674 = vunpack.c.h.b16 %v3504
        %v3675 = vunpack.c.l.b16 %v3505
        %v3676 = vunpack.c.h.b16 %v3505
        %v3677 = vunpack.c.l.b16 %v3506
        %v3678 = vunpack.c.h.b16 %v3506
        %v3679 = vunpack.c.l.b16 %v3507
        %v3680 = vunpack.c.h.b16 %v3507
        %v3681 = vunpack.c.l.b16 %v3508
        %v3682 = vunpack.c.h.b16 %v3508
        %v3683 = vunpack.c.l.b16 %v3509
        %v3684 = vunpack.c.h.b16 %v3509
        %v3685 = vunpack.c.l.b16 %v3510
        %v3686 = vunpack.c.h.b16 %v3510
        %v3687 = vunpack.c.l.b16 %v3511
        %v3688 = vunpack.c.h.b16 %v3511
        %v3689 = vunpack.c.l.b16 %v3512
        %v3690 = vunpack.c.h.b16 %v3512
        %v3691 = vunpack.c.l.b16 %v3513
        %v3692 = vunpack.c.h.b16 %v3513
        %v3693 = vunpack.c.l.b16 %v3514
        %v3694 = vunpack.c.h.b16 %v3514
        %v3695 = vunpack.c.l.b16 %v3515
        %v3696 = vunpack.c.h.b16 %v3515
        %v3697 = vunpack.c.l.b16 %v3516
        %v3698 = vunpack.c.h.b16 %v3516
        %v3699 = vunpack.c.l.b16 %v3517
        %v3700 = vunpack.c.h.b16 %v3517
        %v3701 = vunpack.c.l.b16 %v3518
        %v3702 = vunpack.c.h.b16 %v3518
        %v3703 = vunpack.c.l.b16 %v3519
        %v3704 = vunpack.c.h.b16 %v3519
        %v3705 = vunpack.c.l.b16 %v3520
        %v3706 = vunpack.c.h.b16 %v3520
        %v3707 = vunpack.c.l.b16 %v3521
        %v3708 = vunpack.c.h.b16 %v3521
        %v3709 = vunpack.c.l.b16 %v3522
        %v3710 = vunpack.c.h.b16 %v3522
        %v3711 = vunpack.c.l.b16 %v3523
        %v3712 = vunpack.c.h.b16 %v3523
        %v3713 = vunpack.c.l.b16 %v3524
        %v3714 = vunpack.c.h.b16 %v3524
        %v3715 = vunpack.c.l.b16 %v3525
        %v3716 = vunpack.c.h.b16 %v3525
        %v3717 = vunpack.c.l.b16 %v3526
        %v3718 = vunpack.c.h.b16 %v3526
        %v3719 = vpack.c.b16 %v3599, %v3591
        %v3720 = vpack.c.b16 %v3600, %v3592
        %v3721 = vpack.c.b16 %v3601, %v3593
        %v3722 = vpack.c.b16 %v3602, %v3594
        %v3723 = vpack.c.b16 %v3603, %v3595
        %v3724 = vpack.c.b16 %v3604, %v3596
        %v3725 = vpack.c.b16 %v3605, %v3597
        %v3726 = vpack.c.b16 %v3606, %v3598
        %v3727 = vpack.c.b16 %v3615, %v3607
        %v3728 = vpack.c.b16 %v3616, %v3608
        %v3729 = vpack.c.b16 %v3617, %v3609
        %v3730 = vpack.c.b16 %v3618, %v3610
        %v3731 = vpack.c.b16 %v3619, %v3611
        %v3732 = vpack.c.b16 %v3620, %v3612
        %v3733 = vpack.c.b16 %v3621, %v3613
        %v3734 = vpack.c.b16 %v3622, %v3614
        %v3735 = vpack.c.b16 %v3631, %v3623
        %v3736 = vpack.c.b16 %v3632, %v3624
        %v3737 = vpack.c.b16 %v3633, %v3625
        %v3738 = vpack.c.b16 %v3634, %v3626
        %v3739 = vpack.c.b16 %v3635, %v3627
        %v3740 = vpack.c.b16 %v3636, %v3628
        %v3741 = vpack.c.b16 %v3637, %v3629
        %v3742 = vpack.c.b16 %v3638, %v3630
        %v3743 = vpack.c.b16 %v3647, %v3639
        %v3744 = vpack.c.b16 %v3648, %v3640
        %v3745 = vpack.c.b16 %v3649, %v3641
        %v3746 = vpack.c.b16 %v3650, %v3642
        %v3747 = vpack.c.b16 %v3651, %v3643
        %v3748 = vpack.c.b16 %v3652, %v3644
        %v3749 = vpack.c.b16 %v3653, %v3645
        %v3750 = vpack.c.b16 %v3654, %v3646
        %v3751 = vpack.c.b16 %v3663, %v3655
        %v3752 = vpack.c.b16 %v3664, %v3656
        %v3753 = vpack.c.b16 %v3665, %v3657
        %v3754 = vpack.c.b16 %v3666, %v3658
        %v3755 = vpack.c.b16 %v3667, %v3659
        %v3756 = vpack.c.b16 %v3668, %v3660
        %v3757 = vpack.c.b16 %v3669, %v3661
        %v3758 = vpack.c.b16 %v3670, %v3662
        %v3759 = vpack.c.b16 %v3679, %v3671
        %v3760 = vpack.c.b16 %v3680, %v3672
        %v3761 = vpack.c.b16 %v3681, %v3673
        %v3762 = vpack.c.b16 %v3682, %v3674
        %v3763 = vpack.c.b16 %v3683, %v3675
        %v3764 = vpack.c.b16 %v3684, %v3676
        %v3765 = vpack.c.b16 %v3685, %v3677
        %v3766 = vpack.c.b16 %v3686, %v3678
        %v3767 = vpack.c.b16 %v3695, %v3687
        %v3768 = vpack.c.b16 %v3696, %v3688
        %v3769 = vpack.c.b16 %v3697, %v3689
        %v3770 = vpack.c.b16 %v3698, %v3690
        %v3771 = vpack.c.b16 %v3699, %v3691
        %v3772 = vpack.c.b16 %v3700, %v3692
        %v3773 = vpack.c.b16 %v3701, %v3693
        %v3774 = vpack.c.b16 %v3702, %v3694
        %v3775 = vpack.c.b16 %v3711, %v3703
        %v3776 = vpack.c.b16 %v3712, %v3704
        %v3777 = vpack.c.b16 %v3713, %v3705
        %v3778 = vpack.c.b16 %v3714, %v3706
        %v3779 = vpack.c.b16 %v3715, %v3707
        %v3780 = vpack.c.b16 %v3716, %v3708
        %v3781 = vpack.c.b16 %v3717, %v3709
        %v3782 = vpack.c.b16 %v3718, %v3710
        %3847 = vmatprep.subr.bf16.mxu0 %v3776
        %3848 = vmatpush1.bf16.msra.mxu0 %v3775
        %3849 = vmatprep.subr.bf16.mxu0 %v3768
        %3850 = vmatpush1.bf16.msra.mxu0 %v3767
        %3851 = vmatprep.subr.bf16.mxu0 %v3760
        %3852 = vmatpush1.bf16.msra.mxu0 %v3759
        %3853 = vmatprep.subr.bf16.mxu0 %v3752
        %3854 = vmatpush1.bf16.msra.mxu0 %v3751
        %3855 = vmatprep.subr.bf16.mxu0 %v3744
        %3856 = vmatpush1.bf16.msra.mxu0 %v3743
        %3857 = vmatprep.subr.bf16.mxu0 %v3736
        %3858 = vmatpush1.bf16.msra.mxu0 %v3735
        %3859 = vmatprep.subr.bf16.mxu0 %v3728
        %3860 = vmatpush1.bf16.msra.mxu0 %v3727
        %3861 = vmatprep.subr.bf16.mxu0 %v3720
        %3862 = vmatpush1.bf16.msra.mxu0 %v3719
        %3863 = vmatprep.subr.bf16.mxu0 0
        %3864 = vmatpush2.bf16.msra.mxu0 0
        %3865 = vmatprep.subr.bf16.mxu0 0
        %3866 = vmatpush2.bf16.msra.mxu0 0
        %3867 = vmatprep.subr.bf16.mxu0 0
        %3868 = vmatpush2.bf16.msra.mxu0 0
        %3869 = vmatprep.subr.bf16.mxu0 0
        %3870 = vmatpush2.bf16.msra.mxu0 0
        %3871 = vmatprep.subr.bf16.mxu0 0
        %3872 = vmatpush2.bf16.msra.mxu0 0
        %3873 = vmatprep.subr.bf16.mxu0 0
        %3874 = vmatpush2.bf16.msra.mxu0 0
        %3875 = vmatprep.subr.bf16.mxu0 0
        %3876 = vmatpush2.bf16.msra.mxu0 0
        %3877 = vmatprep.subr.bf16.mxu0 0
        %3878 = vmatpush2.bf16.msra.mxu0 0
        %3879 = vmatprep.mubr.bf16.mxu0 0
        %3880 = vmatmul.mubr.bf16.gmra.mxu0 %v525
        %v3881 = vpop.f32.mrf.mxu0
        %v3882 = vadd.f32 0.0, %v3881
        %v3883 = vpop.f32.mrf.mxu0
        %v3884 = vadd.f32 0.0, %v3883
        %v3885 = vpop.f32.mrf.mxu0
        %v3886 = vpop.f32.mrf.mxu0
        %v3887 = vadd.f32 0.0, %v3886
        %3888 = vmatprep.mubr.bf16.mxu0 0
        %3889 = vmatmul.mubr.bf16.gmra.mxu0 %v526
        %v3890 = vpop.f32.mrf.mxu0
        %v3891 = vadd.f32 0.0, %v3890
        %v3892 = vpop.f32.mrf.mxu0
        %v3893 = vadd.f32 0.0, %v3892
        %v3894 = vpop.f32.mrf.mxu0
        %v3895 = vpop.f32.mrf.mxu0
        %v3896 = vadd.f32 0.0, %v3895
        %3897 = vmatprep.mubr.bf16.mxu0 0
        %3898 = vmatmul.mubr.bf16.gmra.mxu0 %v527
        %v3899 = vpop.f32.mrf.mxu0
        %v3900 = vadd.f32 0.0, %v3899
        %v3901 = vpop.f32.mrf.mxu0
        %v3902 = vadd.f32 0.0, %v3901
        %v3903 = vpop.f32.mrf.mxu0
        %v3904 = vpop.f32.mrf.mxu0
        %v3905 = vadd.f32 0.0, %v3904
        %3906 = vmatprep.mubr.bf16.mxu0 0
        %3907 = vmatmul.mubr.bf16.gmra.mxu0 %v528
        %v3908 = vpop.f32.mrf.mxu0
        %v3909 = vadd.f32 0.0, %v3908
        %v3910 = vpop.f32.mrf.mxu0
        %v3911 = vadd.f32 0.0, %v3910
        %v3912 = vpop.f32.mrf.mxu0
        %v3913 = vpop.f32.mrf.mxu0
        %v3914 = vadd.f32 0.0, %v3913
        %3915 = vmatprep.mubr.bf16.mxu0 0
        %3916 = vmatmul.mubr.bf16.gmra.mxu0 %v529
        %v3917 = vpop.f32.mrf.mxu0
        %v3918 = vadd.f32 0.0, %v3917
        %v3919 = vpop.f32.mrf.mxu0
        %v3920 = vadd.f32 0.0, %v3919
        %v3921 = vpop.f32.mrf.mxu0
        %v3922 = vpop.f32.mrf.mxu0
        %v3923 = vadd.f32 0.0, %v3922
        %3924 = vmatprep.mubr.bf16.mxu0 0
        %3925 = vmatmul.mubr.bf16.gmra.mxu0 %v530
        %v3926 = vpop.f32.mrf.mxu0
        %v3927 = vadd.f32 0.0, %v3926
        %v3928 = vpop.f32.mrf.mxu0
        %v3929 = vadd.f32 0.0, %v3928
        %v3930 = vpop.f32.mrf.mxu0
        %v3931 = vpop.f32.mrf.mxu0
        %v3932 = vadd.f32 0.0, %v3931
        %3933 = vmatprep.mubr.bf16.mxu0 0
        %3934 = vmatmul.mubr.bf16.gmra.mxu0 %v531
        %v3935 = vpop.f32.mrf.mxu0
        %v3936 = vadd.f32 0.0, %v3935
        %v3937 = vpop.f32.mrf.mxu0
        %v3938 = vadd.f32 0.0, %v3937
        %v3939 = vpop.f32.mrf.mxu0
        %v3940 = vpop.f32.mrf.mxu0
        %v3941 = vadd.f32 0.0, %v3940
        %3942 = vmatprep.mubr.bf16.mxu0 0
        %3943 = vmatmul.mubr.bf16.gmra.mxu0 %v532
        %v3944 = vpop.f32.mrf.mxu0
        %v3945 = vadd.f32 0.0, %v3944
        %v3946 = vpop.f32.mrf.mxu0
        %v3947 = vadd.f32 0.0, %v3946
        %v3948 = vpop.f32.mrf.mxu0
        %v3949 = vpop.f32.mrf.mxu0
        %v3950 = vadd.f32 0.0, %v3949
        %3951 = vdwg.mxu0
        %3952 = vmatprep.subr.bf16.mxu0 %v3778
        %3953 = vmatpush1.bf16.msra.mxu0 %v3777
        %3954 = vmatprep.subr.bf16.mxu0 %v3770
        %3955 = vmatpush1.bf16.msra.mxu0 %v3769
        %3956 = vmatprep.subr.bf16.mxu0 %v3762
        %3957 = vmatpush1.bf16.msra.mxu0 %v3761
        %3958 = vmatprep.subr.bf16.mxu0 %v3754
        %3959 = vmatpush1.bf16.msra.mxu0 %v3753
        %3960 = vmatprep.subr.bf16.mxu0 %v3746
        %3961 = vmatpush1.bf16.msra.mxu0 %v3745
        %3962 = vmatprep.subr.bf16.mxu0 %v3738
        %3963 = vmatpush1.bf16.msra.mxu0 %v3737
        %3964 = vmatprep.subr.bf16.mxu0 %v3730
        %3965 = vmatpush1.bf16.msra.mxu0 %v3729
        %3966 = vmatprep.subr.bf16.mxu0 %v3722
        %3967 = vmatpush1.bf16.msra.mxu0 %v3721
        %3968 = vmatprep.subr.bf16.mxu0 0
        %3969 = vmatpush2.bf16.msra.mxu0 0
        %3970 = vmatprep.subr.bf16.mxu0 0
        %3971 = vmatpush2.bf16.msra.mxu0 0
        %3972 = vmatprep.subr.bf16.mxu0 0
        %3973 = vmatpush2.bf16.msra.mxu0 0
        %3974 = vmatprep.subr.bf16.mxu0 0
        %3975 = vmatpush2.bf16.msra.mxu0 0
        %3976 = vmatprep.subr.bf16.mxu0 0
        %3977 = vmatpush2.bf16.msra.mxu0 0
        %3978 = vmatprep.subr.bf16.mxu0 0
        %3979 = vmatpush2.bf16.msra.mxu0 0
        %3980 = vmatprep.subr.bf16.mxu0 0
        %3981 = vmatpush2.bf16.msra.mxu0 0
        %3982 = vmatprep.subr.bf16.mxu0 0
        %3983 = vmatpush2.bf16.msra.mxu0 0
        %3984 = vmatprep.mubr.bf16.mxu0 0
        %3985 = vmatmul.mubr.bf16.gmra.mxu0 %v525
        %v3986 = vpop.f32.mrf.mxu0
        %v3987 = vpop.f32.mrf.mxu0
        %v3988 = vadd.f32 0.0, %v3987
        %v3989 = vpop.f32.mrf.mxu0
        %v3990 = vadd.f32 0.0, %v3989
        %v3991 = vpop.f32.mrf.mxu0
        %3992 = vmatprep.mubr.bf16.mxu0 0
        %3993 = vmatmul.mubr.bf16.gmra.mxu0 %v526
        %v3994 = vpop.f32.mrf.mxu0
        %v3995 = vpop.f32.mrf.mxu0
        %v3996 = vadd.f32 0.0, %v3995
        %v3997 = vpop.f32.mrf.mxu0
        %v3998 = vadd.f32 0.0, %v3997
        %v3999 = vpop.f32.mrf.mxu0
        %4000 = vmatprep.mubr.bf16.mxu0 0
        %4001 = vmatmul.mubr.bf16.gmra.mxu0 %v527
        %v4002 = vpop.f32.mrf.mxu0
        %v4003 = vpop.f32.mrf.mxu0
        %v4004 = vadd.f32 0.0, %v4003
        %v4005 = vpop.f32.mrf.mxu0
        %v4006 = vadd.f32 0.0, %v4005
        %v4007 = vpop.f32.mrf.mxu0
        %4008 = vmatprep.mubr.bf16.mxu0 0
        %4009 = vmatmul.mubr.bf16.gmra.mxu0 %v528
        %v4010 = vpop.f32.mrf.mxu0
        %v4011 = vpop.f32.mrf.mxu0
        %v4012 = vadd.f32 0.0, %v4011
        %v4013 = vpop.f32.mrf.mxu0
        %v4014 = vadd.f32 0.0, %v4013
        %v4015 = vpop.f32.mrf.mxu0
        %4016 = vmatprep.mubr.bf16.mxu0 0
        %4017 = vmatmul.mubr.bf16.gmra.mxu0 %v529
        %v4018 = vpop.f32.mrf.mxu0
        %v4019 = vpop.f32.mrf.mxu0
        %v4020 = vadd.f32 0.0, %v4019
        %v4021 = vpop.f32.mrf.mxu0
        %v4022 = vadd.f32 0.0, %v4021
        %v4023 = vpop.f32.mrf.mxu0
        %4024 = vmatprep.mubr.bf16.mxu0 0
        %4025 = vmatmul.mubr.bf16.gmra.mxu0 %v530
        %v4026 = vpop.f32.mrf.mxu0
        %v4027 = vpop.f32.mrf.mxu0
        %v4028 = vadd.f32 0.0, %v4027
        %v4029 = vpop.f32.mrf.mxu0
        %v4030 = vadd.f32 0.0, %v4029
        %v4031 = vpop.f32.mrf.mxu0
        %4032 = vmatprep.mubr.bf16.mxu0 0
        %4033 = vmatmul.mubr.bf16.gmra.mxu0 %v531
        %v4034 = vpop.f32.mrf.mxu0
        %v4035 = vpop.f32.mrf.mxu0
        %v4036 = vadd.f32 0.0, %v4035
        %v4037 = vpop.f32.mrf.mxu0
        %v4038 = vadd.f32 0.0, %v4037
        %v4039 = vpop.f32.mrf.mxu0
        %4040 = vmatprep.mubr.bf16.mxu0 0
        %4041 = vmatmul.mubr.bf16.gmra.mxu0 %v532
        %v4042 = vpop.f32.mrf.mxu0
        %v4043 = vpop.f32.mrf.mxu0
        %v4044 = vadd.f32 0.0, %v4043
        %v4045 = vpop.f32.mrf.mxu0
        %v4046 = vadd.f32 0.0, %v4045
        %v4047 = vpop.f32.mrf.mxu0
        %4048 = vdwg.mxu0
        %4049 = vmatprep.subr.bf16.mxu0 %v3780
        %4050 = vmatpush1.bf16.msra.mxu0 %v3779
        %4051 = vmatprep.subr.bf16.mxu0 %v3772
        %4052 = vmatpush1.bf16.msra.mxu0 %v3771
        %4053 = vmatprep.subr.bf16.mxu0 %v3764
        %4054 = vmatpush1.bf16.msra.mxu0 %v3763
        %4055 = vmatprep.subr.bf16.mxu0 %v3756
        %4056 = vmatpush1.bf16.msra.mxu0 %v3755
        %4057 = vmatprep.subr.bf16.mxu0 %v3748
        %4058 = vmatpush1.bf16.msra.mxu0 %v3747
        %4059 = vmatprep.subr.bf16.mxu0 %v3740
        %4060 = vmatpush1.bf16.msra.mxu0 %v3739
        %4061 = vmatprep.subr.bf16.mxu0 %v3732
        %4062 = vmatpush1.bf16.msra.mxu0 %v3731
        %4063 = vmatprep.subr.bf16.mxu0 %v3724
        %4064 = vmatpush1.bf16.msra.mxu0 %v3723
        %4065 = vmatprep.subr.bf16.mxu0 0
        %4066 = vmatpush2.bf16.msra.mxu0 0
        %4067 = vmatprep.subr.bf16.mxu0 0
        %4068 = vmatpush2.bf16.msra.mxu0 0
        %4069 = vmatprep.subr.bf16.mxu0 0
        %4070 = vmatpush2.bf16.msra.mxu0 0
        %4071 = vmatprep.subr.bf16.mxu0 0
        %4072 = vmatpush2.bf16.msra.mxu0 0
        %4073 = vmatprep.subr.bf16.mxu0 0
        %4074 = vmatpush2.bf16.msra.mxu0 0
        %4075 = vmatprep.subr.bf16.mxu0 0
        %4076 = vmatpush2.bf16.msra.mxu0 0
        %4077 = vmatprep.subr.bf16.mxu0 0
        %4078 = vmatpush2.bf16.msra.mxu0 0
        %4079 = vmatprep.subr.bf16.mxu0 0
        %4080 = vmatpush2.bf16.msra.mxu0 0
        %4081 = vmatprep.mubr.bf16.mxu0 0
        %4082 = vmatmul.mubr.bf16.gmra.mxu0 %v525
        %v4083 = vpop.f32.mrf.mxu0
        %v4084 = vpop.f32.mrf.mxu0
        %v4085 = vadd.f32 0.0, %v4084
        %v4086 = vpop.f32.mrf.mxu0
        %v4087 = vadd.f32 0.0, %v4086
        %v4088 = vpop.f32.mrf.mxu0
        %4089 = vmatprep.mubr.bf16.mxu0 0
        %4090 = vmatmul.mubr.bf16.gmra.mxu0 %v526
        %v4091 = vpop.f32.mrf.mxu0
        %v4092 = vpop.f32.mrf.mxu0
        %v4093 = vadd.f32 0.0, %v4092
        %v4094 = vpop.f32.mrf.mxu0
        %v4095 = vadd.f32 0.0, %v4094
        %v4096 = vpop.f32.mrf.mxu0
        %4097 = vmatprep.mubr.bf16.mxu0 0
        %4098 = vmatmul.mubr.bf16.gmra.mxu0 %v527
        %v4099 = vpop.f32.mrf.mxu0
        %v4100 = vpop.f32.mrf.mxu0
        %v4101 = vadd.f32 0.0, %v4100
        %v4102 = vpop.f32.mrf.mxu0
        %v4103 = vadd.f32 0.0, %v4102
        %v4104 = vpop.f32.mrf.mxu0
        %4105 = vmatprep.mubr.bf16.mxu0 0
        %4106 = vmatmul.mubr.bf16.gmra.mxu0 %v528
        %v4107 = vpop.f32.mrf.mxu0
        %v4108 = vpop.f32.mrf.mxu0
        %v4109 = vadd.f32 0.0, %v4108
        %v4110 = vpop.f32.mrf.mxu0
        %v4111 = vadd.f32 0.0, %v4110
        %v4112 = vpop.f32.mrf.mxu0
        %4113 = vmatprep.mubr.bf16.mxu0 0
        %4114 = vmatmul.mubr.bf16.gmra.mxu0 %v529
        %v4115 = vpop.f32.mrf.mxu0
        %v4116 = vpop.f32.mrf.mxu0
        %v4117 = vadd.f32 0.0, %v4116
        %v4118 = vpop.f32.mrf.mxu0
        %v4119 = vadd.f32 0.0, %v4118
        %v4120 = vpop.f32.mrf.mxu0
        %4121 = vmatprep.mubr.bf16.mxu0 0
        %4122 = vmatmul.mubr.bf16.gmra.mxu0 %v530
        %v4123 = vpop.f32.mrf.mxu0
        %v4124 = vpop.f32.mrf.mxu0
        %v4125 = vadd.f32 0.0, %v4124
        %v4126 = vpop.f32.mrf.mxu0
        %v4127 = vadd.f32 0.0, %v4126
        %v4128 = vpop.f32.mrf.mxu0
        %4129 = vmatprep.mubr.bf16.mxu0 0
        %4130 = vmatmul.mubr.bf16.gmra.mxu0 %v531
        %v4131 = vpop.f32.mrf.mxu0
        %v4132 = vpop.f32.mrf.mxu0
        %v4133 = vadd.f32 0.0, %v4132
        %v4134 = vpop.f32.mrf.mxu0
        %v4135 = vadd.f32 0.0, %v4134
        %v4136 = vpop.f32.mrf.mxu0
        %4137 = vmatprep.mubr.bf16.mxu0 0
        %4138 = vmatmul.mubr.bf16.gmra.mxu0 %v532
        %v4139 = vpop.f32.mrf.mxu0
        %v4140 = vpop.f32.mrf.mxu0
        %v4141 = vadd.f32 0.0, %v4140
        %v4142 = vpop.f32.mrf.mxu0
        %v4143 = vadd.f32 0.0, %v4142
        %v4144 = vpop.f32.mrf.mxu0
        %4145 = vdwg.mxu0
        %4146 = vmatprep.subr.bf16.mxu0 %v3782
        %4147 = vmatpush1.bf16.msra.mxu0 %v3781
        %4148 = vmatprep.subr.bf16.mxu0 %v3774
        %4149 = vmatpush1.bf16.msra.mxu0 %v3773
        %4150 = vmatprep.subr.bf16.mxu0 %v3766
        %4151 = vmatpush1.bf16.msra.mxu0 %v3765
        %4152 = vmatprep.subr.bf16.mxu0 %v3758
        %4153 = vmatpush1.bf16.msra.mxu0 %v3757
        %4154 = vmatprep.subr.bf16.mxu0 %v3750
        %4155 = vmatpush1.bf16.msra.mxu0 %v3749
        %4156 = vmatprep.subr.bf16.mxu0 %v3742
        %4157 = vmatpush1.bf16.msra.mxu0 %v3741
        %4158 = vmatprep.subr.bf16.mxu0 %v3734
        %4159 = vmatpush1.bf16.msra.mxu0 %v3733
        %4160 = vmatprep.subr.bf16.mxu0 %v3726
        %4161 = vmatpush1.bf16.msra.mxu0 %v3725
        %4162 = vmatprep.subr.bf16.mxu0 0
        %4163 = vmatpush2.bf16.msra.mxu0 0
        %4164 = vmatprep.subr.bf16.mxu0 0
        %4165 = vmatpush2.bf16.msra.mxu0 0
        %4166 = vmatprep.subr.bf16.mxu0 0
        %4167 = vmatpush2.bf16.msra.mxu0 0
        %4168 = vmatprep.subr.bf16.mxu0 0
        %4169 = vmatpush2.bf16.msra.mxu0 0
        %4170 = vmatprep.subr.bf16.mxu0 0
        %4171 = vmatpush2.bf16.msra.mxu0 0
        %4172 = vmatprep.subr.bf16.mxu0 0
        %4173 = vmatpush2.bf16.msra.mxu0 0
        %4174 = vmatprep.subr.bf16.mxu0 0
        %4175 = vmatpush2.bf16.msra.mxu0 0
        %4176 = vmatprep.subr.bf16.mxu0 0
        %4177 = vmatpush2.bf16.msra.mxu0 0
        %4178 = vmatprep.mubr.bf16.mxu0 0
        %4179 = vmatmul.mubr.bf16.gmra.mxu0 %v525
        %v4180 = vpop.f32.mrf.mxu0
        %v4181 = vadd.f32 0.0, %v4180
        %v4182 = vpop.f32.mrf.mxu0
        %v4183 = vpop.f32.mrf.mxu0
        %v4184 = vadd.f32 0.0, %v4183
        %v4185 = vpop.f32.mrf.mxu0
        %v4186 = vadd.f32 0.0, %v4185
        %4187 = vmatprep.mubr.bf16.mxu0 0
        %4188 = vmatmul.mubr.bf16.gmra.mxu0 %v526
        %v4189 = vpop.f32.mrf.mxu0
        %v4190 = vadd.f32 0.0, %v4189
        %v4191 = vpop.f32.mrf.mxu0
        %v4192 = vpop.f32.mrf.mxu0
        %v4193 = vadd.f32 0.0, %v4192
        %v4194 = vpop.f32.mrf.mxu0
        %v4195 = vadd.f32 0.0, %v4194
        %4196 = vmatprep.mubr.bf16.mxu0 0
        %4197 = vmatmul.mubr.bf16.gmra.mxu0 %v527
        %v4198 = vpop.f32.mrf.mxu0
        %v4199 = vadd.f32 0.0, %v4198
        %v4200 = vpop.f32.mrf.mxu0
        %v4201 = vpop.f32.mrf.mxu0
        %v4202 = vadd.f32 0.0, %v4201
        %v4203 = vpop.f32.mrf.mxu0
        %v4204 = vadd.f32 0.0, %v4203
        %4205 = vmatprep.mubr.bf16.mxu0 0
        %4206 = vmatmul.mubr.bf16.gmra.mxu0 %v528
        %v4207 = vpop.f32.mrf.mxu0
        %v4208 = vadd.f32 0.0, %v4207
        %v4209 = vpop.f32.mrf.mxu0
        %v4210 = vpop.f32.mrf.mxu0
        %v4211 = vadd.f32 0.0, %v4210
        %v4212 = vpop.f32.mrf.mxu0
        %v4213 = vadd.f32 0.0, %v4212
        %4214 = vmatprep.mubr.bf16.mxu0 0
        %4215 = vmatmul.mubr.bf16.gmra.mxu0 %v529
        %v4216 = vpop.f32.mrf.mxu0
        %v4217 = vadd.f32 0.0, %v4216
        %v4218 = vpop.f32.mrf.mxu0
        %v4219 = vpop.f32.mrf.mxu0
        %v4220 = vadd.f32 0.0, %v4219
        %v4221 = vpop.f32.mrf.mxu0
        %v4222 = vadd.f32 0.0, %v4221
        %4223 = vmatprep.mubr.bf16.mxu0 0
        %4224 = vmatmul.mubr.bf16.gmra.mxu0 %v530
        %v4225 = vpop.f32.mrf.mxu0
        %v4226 = vadd.f32 0.0, %v4225
        %v4227 = vpop.f32.mrf.mxu0
        %v4228 = vpop.f32.mrf.mxu0
        %v4229 = vadd.f32 0.0, %v4228
        %v4230 = vpop.f32.mrf.mxu0
        %v4231 = vadd.f32 0.0, %v4230
        %4232 = vmatprep.mubr.bf16.mxu0 0
        %4233 = vmatmul.mubr.bf16.gmra.mxu0 %v531
        %v4234 = vpop.f32.mrf.mxu0
        %v4235 = vadd.f32 0.0, %v4234
        %v4236 = vpop.f32.mrf.mxu0
        %v4237 = vpop.f32.mrf.mxu0
        %v4238 = vadd.f32 0.0, %v4237
        %v4239 = vpop.f32.mrf.mxu0
        %v4240 = vadd.f32 0.0, %v4239
        %4241 = vmatprep.mubr.bf16.mxu0 0
        %4242 = vmatmul.mubr.bf16.gmra.mxu0 %v532
        %v4243 = vpop.f32.mrf.mxu0
        %v4244 = vadd.f32 0.0, %v4243
        %v4245 = vpop.f32.mrf.mxu0
        %v4246 = vpop.f32.mrf.mxu0
        %v4247 = vadd.f32 0.0, %v4246
        %v4248 = vpop.f32.mrf.mxu0
        %v4249 = vadd.f32 0.0, %v4248
        %4250 = vdwg.mxu0
        %s4251 = sadd.s32 %s406, 20
        %s4252 = smul.u32 %s4251, 16
        %s4253 = scalar_lea.vmem [#allocation2], %s4252
        %v4254 = vld [vmem:[%s4253 + $0x8] sm:$0xff]
        %v4255 = vld [vmem:[%s4253 + $0x18] sm:$0xff]
        %v4256 = vld [vmem:[%s4253 + $0x28] sm:$0xff]
        %v4257 = vld [vmem:[%s4253 + $0x38] sm:$0xff]
        %v4258 = vld [vmem:[%s4253 + $0x48] sm:$0xff]
        %v4259 = vld [vmem:[%s4253 + $0x58] sm:$0xff]
        %v4260 = vld [vmem:[%s4253 + $0x68] sm:$0xff]
        %v4261 = vld [vmem:[%s4253 + $0x78] sm:$0xff]
        %v4262 = vadd.f32 %v4254, %v3882
        %v4263 = vadd.f32 %v4255, %v3891
        %v4264 = vadd.f32 %v4256, %v3900
        %v4265 = vadd.f32 %v4257, %v3909
        %v4266 = vadd.f32 %v4258, %v3918
        %v4267 = vadd.f32 %v4259, %v3927
        %v4268 = vadd.f32 %v4260, %v3936
        %v4269 = vadd.f32 %v4261, %v3945
        %4270 = vst [vmem:[%s4253 + $0x8] sm:$0xff] %v4262
        %4271 = vst [vmem:[%s4253 + $0x18] sm:$0xff] %v4263
        %4272 = vst [vmem:[%s4253 + $0x28] sm:$0xff] %v4264
        %4273 = vst [vmem:[%s4253 + $0x38] sm:$0xff] %v4265
        %4274 = vst [vmem:[%s4253 + $0x48] sm:$0xff] %v4266
        %4275 = vst [vmem:[%s4253 + $0x58] sm:$0xff] %v4267
        %4276 = vst [vmem:[%s4253 + $0x68] sm:$0xff] %v4268
        %4277 = vst [vmem:[%s4253 + $0x78] sm:$0xff] %v4269
        %v4278 = vld [vmem:[%s4253] sm:$0xff]
        %v4279 = vld [vmem:[%s4253 + $0x8] sm:$0xff]
        %v4280 = vld [vmem:[%s4253 + $0x10] sm:$0xff]
        %v4281 = vld [vmem:[%s4253 + $0x18] sm:$0xff]
        %v4282 = vld [vmem:[%s4253 + $0x20] sm:$0xff]
        %v4283 = vld [vmem:[%s4253 + $0x28] sm:$0xff]
        %v4284 = vld [vmem:[%s4253 + $0x30] sm:$0xff]
        %v4285 = vld [vmem:[%s4253 + $0x38] sm:$0xff]
        %v4286 = vld [vmem:[%s4253 + $0x40] sm:$0xff]
        %v4287 = vld [vmem:[%s4253 + $0x48] sm:$0xff]
        %v4288 = vld [vmem:[%s4253 + $0x50] sm:$0xff]
        %v4289 = vld [vmem:[%s4253 + $0x58] sm:$0xff]
        %v4290 = vld [vmem:[%s4253 + $0x60] sm:$0xff]
        %v4291 = vld [vmem:[%s4253 + $0x68] sm:$0xff]
        %v4292 = vld [vmem:[%s4253 + $0x70] sm:$0xff]
        %v4293 = vld [vmem:[%s4253 + $0x78] sm:$0xff]
        %v4294 = vadd.f32 %v4278, %v3884
        %v4295 = vadd.f32 %v4279, %v3887
        %v4296 = vadd.f32 %v4280, %v3893
        %v4297 = vadd.f32 %v4281, %v3896
        %v4298 = vadd.f32 %v4282, %v3902
        %v4299 = vadd.f32 %v4283, %v3905
        %v4300 = vadd.f32 %v4284, %v3911
        %v4301 = vadd.f32 %v4285, %v3914
        %v4302 = vadd.f32 %v4286, %v3920
        %v4303 = vadd.f32 %v4287, %v3923
        %v4304 = vadd.f32 %v4288, %v3929
        %v4305 = vadd.f32 %v4289, %v3932
        %v4306 = vadd.f32 %v4290, %v3938
        %v4307 = vadd.f32 %v4291, %v3941
        %v4308 = vadd.f32 %v4292, %v3947
        %v4309 = vadd.f32 %v4293, %v3950
        %4310 = vst [vmem:[%s4253] sm:$0xff] %v4294
        %4311 = vst [vmem:[%s4253 + $0x8] sm:$0xff] %v4295
        %4312 = vst [vmem:[%s4253 + $0x10] sm:$0xff] %v4296
        %4313 = vst [vmem:[%s4253 + $0x18] sm:$0xff] %v4297
        %4314 = vst [vmem:[%s4253 + $0x20] sm:$0xff] %v4298
        %4315 = vst [vmem:[%s4253 + $0x28] sm:$0xff] %v4299
        %4316 = vst [vmem:[%s4253 + $0x30] sm:$0xff] %v4300
        %4317 = vst [vmem:[%s4253 + $0x38] sm:$0xff] %v4301
        %4318 = vst [vmem:[%s4253 + $0x40] sm:$0xff] %v4302
        %4319 = vst [vmem:[%s4253 + $0x48] sm:$0xff] %v4303
        %4320 = vst [vmem:[%s4253 + $0x50] sm:$0xff] %v4304
        %4321 = vst [vmem:[%s4253 + $0x58] sm:$0xff] %v4305
        %4322 = vst [vmem:[%s4253 + $0x60] sm:$0xff] %v4306
        %4323 = vst [vmem:[%s4253 + $0x68] sm:$0xff] %v4307
        %4324 = vst [vmem:[%s4253 + $0x70] sm:$0xff] %v4308
        %4325 = vst [vmem:[%s4253 + $0x78] sm:$0xff] %v4309
        %v4326 = vld [vmem:[%s4253] sm:$0xff]
        %v4327 = vld [vmem:[%s4253 + $0x10] sm:$0xff]
        %v4328 = vld [vmem:[%s4253 + $0x20] sm:$0xff]
        %v4329 = vld [vmem:[%s4253 + $0x30] sm:$0xff]
        %v4330 = vld [vmem:[%s4253 + $0x40] sm:$0xff]
        %v4331 = vld [vmem:[%s4253 + $0x50] sm:$0xff]
        %v4332 = vld [vmem:[%s4253 + $0x60] sm:$0xff]
        %v4333 = vld [vmem:[%s4253 + $0x70] sm:$0xff]
        %v4334 = vadd.f32 %v4326, %v3990
        %v4335 = vadd.f32 %v4327, %v3998
        %v4336 = vadd.f32 %v4328, %v4006
        %v4337 = vadd.f32 %v4329, %v4014
        %v4338 = vadd.f32 %v4330, %v4022
        %v4339 = vadd.f32 %v4331, %v4030
        %v4340 = vadd.f32 %v4332, %v4038
        %v4341 = vadd.f32 %v4333, %v4046
        %4342 = vst [vmem:[%s4253] sm:$0xff] %v4334
        %4343 = vst [vmem:[%s4253 + $0x10] sm:$0xff] %v4335
        %4344 = vst [vmem:[%s4253 + $0x20] sm:$0xff] %v4336
        %4345 = vst [vmem:[%s4253 + $0x30] sm:$0xff] %v4337
        %4346 = vst [vmem:[%s4253 + $0x40] sm:$0xff] %v4338
        %4347 = vst [vmem:[%s4253 + $0x50] sm:$0xff] %v4339
        %4348 = vst [vmem:[%s4253 + $0x60] sm:$0xff] %v4340
        %4349 = vst [vmem:[%s4253 + $0x70] sm:$0xff] %v4341
        %v4350 = vld [vmem:[%s1664 + $0x8] sm:$0xff]
        %v4351 = vld [vmem:[%s1664 + $0x18] sm:$0xff]
        %v4352 = vld [vmem:[%s1664 + $0x28] sm:$0xff]
        %v4353 = vld [vmem:[%s1664 + $0x38] sm:$0xff]
        %v4354 = vld [vmem:[%s1664 + $0x48] sm:$0xff]
        %v4355 = vld [vmem:[%s1664 + $0x58] sm:$0xff]
        %v4356 = vld [vmem:[%s1664 + $0x68] sm:$0xff]
        %v4357 = vld [vmem:[%s1664 + $0x78] sm:$0xff]
        %v4358 = vadd.f32 %v4350, %v3988
        %v4359 = vadd.f32 %v4351, %v3996
        %v4360 = vadd.f32 %v4352, %v4004
        %v4361 = vadd.f32 %v4353, %v4012
        %v4362 = vadd.f32 %v4354, %v4020
        %v4363 = vadd.f32 %v4355, %v4028
        %v4364 = vadd.f32 %v4356, %v4036
        %v4365 = vadd.f32 %v4357, %v4044
        %4366 = vst [vmem:[%s1664 + $0x8] sm:$0xff] %v4358
        %4367 = vst [vmem:[%s1664 + $0x18] sm:$0xff] %v4359
        %4368 = vst [vmem:[%s1664 + $0x28] sm:$0xff] %v4360
        %4369 = vst [vmem:[%s1664 + $0x38] sm:$0xff] %v4361
        %4370 = vst [vmem:[%s1664 + $0x48] sm:$0xff] %v4362
        %4371 = vst [vmem:[%s1664 + $0x58] sm:$0xff] %v4363
        %4372 = vst [vmem:[%s1664 + $0x68] sm:$0xff] %v4364
        %4373 = vst [vmem:[%s1664 + $0x78] sm:$0xff] %v4365
        %v4374 = vld [vmem:[%s1664] sm:$0xff]
        %v4375 = vld [vmem:[%s1664 + $0x10] sm:$0xff]
        %v4376 = vld [vmem:[%s1664 + $0x20] sm:$0xff]
        %v4377 = vld [vmem:[%s1664 + $0x30] sm:$0xff]
        %v4378 = vld [vmem:[%s1664 + $0x40] sm:$0xff]
        %v4379 = vld [vmem:[%s1664 + $0x50] sm:$0xff]
        %v4380 = vld [vmem:[%s1664 + $0x60] sm:$0xff]
        %v4381 = vld [vmem:[%s1664 + $0x70] sm:$0xff]
        %v4382 = vadd.f32 %v4374, %v4087
        %v4383 = vadd.f32 %v4375, %v4095
        %v4384 = vadd.f32 %v4376, %v4103
        %v4385 = vadd.f32 %v4377, %v4111
        %v4386 = vadd.f32 %v4378, %v4119
        %v4387 = vadd.f32 %v4379, %v4127
        %v4388 = vadd.f32 %v4380, %v4135
        %v4389 = vadd.f32 %v4381, %v4143
        %4390 = vst [vmem:[%s1664] sm:$0xff] %v4382
        %4391 = vst [vmem:[%s1664 + $0x10] sm:$0xff] %v4383
        %4392 = vst [vmem:[%s1664 + $0x20] sm:$0xff] %v4384
        %4393 = vst [vmem:[%s1664 + $0x30] sm:$0xff] %v4385
        %4394 = vst [vmem:[%s1664 + $0x40] sm:$0xff] %v4386
        %4395 = vst [vmem:[%s1664 + $0x50] sm:$0xff] %v4387
        %4396 = vst [vmem:[%s1664 + $0x60] sm:$0xff] %v4388
        %4397 = vst [vmem:[%s1664 + $0x70] sm:$0xff] %v4389
        %s4398 = sadd.s32 %s406, 4
        %s4399 = smul.u32 %s4398, 16
        %s4400 = scalar_lea.vmem [#allocation2], %s4399
        %v4401 = vld [vmem:[%s4400 + $0x8] sm:$0xff]
        %v4402 = vld [vmem:[%s4400 + $0x18] sm:$0xff]
        %v4403 = vld [vmem:[%s4400 + $0x28] sm:$0xff]
        %v4404 = vld [vmem:[%s4400 + $0x38] sm:$0xff]
        %v4405 = vld [vmem:[%s4400 + $0x48] sm:$0xff]
        %v4406 = vld [vmem:[%s4400 + $0x58] sm:$0xff]
        %v4407 = vld [vmem:[%s4400 + $0x68] sm:$0xff]
        %v4408 = vld [vmem:[%s4400 + $0x78] sm:$0xff]
        %v4409 = vadd.f32 %v4401, %v4085
        %v4410 = vadd.f32 %v4402, %v4093
        %v4411 = vadd.f32 %v4403, %v4101
        %v4412 = vadd.f32 %v4404, %v4109
        %v4413 = vadd.f32 %v4405, %v4117
        %v4414 = vadd.f32 %v4406, %v4125
        %v4415 = vadd.f32 %v4407, %v4133
        %v4416 = vadd.f32 %v4408, %v4141
        %4417 = vst [vmem:[%s4400 + $0x8] sm:$0xff] %v4409
        %4418 = vst [vmem:[%s4400 + $0x18] sm:$0xff] %v4410
        %4419 = vst [vmem:[%s4400 + $0x28] sm:$0xff] %v4411
        %4420 = vst [vmem:[%s4400 + $0x38] sm:$0xff] %v4412
        %4421 = vst [vmem:[%s4400 + $0x48] sm:$0xff] %v4413
        %4422 = vst [vmem:[%s4400 + $0x58] sm:$0xff] %v4414
        %4423 = vst [vmem:[%s4400 + $0x68] sm:$0xff] %v4415
        %4424 = vst [vmem:[%s4400 + $0x78] sm:$0xff] %v4416
        %v4425 = vld [vmem:[%s4400] sm:$0xff]
        %v4426 = vld [vmem:[%s4400 + $0x8] sm:$0xff]
        %v4427 = vld [vmem:[%s4400 + $0x10] sm:$0xff]
        %v4428 = vld [vmem:[%s4400 + $0x18] sm:$0xff]
        %v4429 = vld [vmem:[%s4400 + $0x20] sm:$0xff]
        %v4430 = vld [vmem:[%s4400 + $0x28] sm:$0xff]
        %v4431 = vld [vmem:[%s4400 + $0x30] sm:$0xff]
        %v4432 = vld [vmem:[%s4400 + $0x38] sm:$0xff]
        %v4433 = vld [vmem:[%s4400 + $0x40] sm:$0xff]
        %v4434 = vld [vmem:[%s4400 + $0x48] sm:$0xff]
        %v4435 = vld [vmem:[%s4400 + $0x50] sm:$0xff]
        %v4436 = vld [vmem:[%s4400 + $0x58] sm:$0xff]
        %v4437 = vld [vmem:[%s4400 + $0x60] sm:$0xff]
        %v4438 = vld [vmem:[%s4400 + $0x68] sm:$0xff]
        %v4439 = vld [vmem:[%s4400 + $0x70] sm:$0xff]
        %v4440 = vld [vmem:[%s4400 + $0x78] sm:$0xff]
        %v4441 = vadd.f32 %v4425, %v4181
        %v4442 = vadd.f32 %v4426, %v4184
        %v4443 = vadd.f32 %v4427, %v4190
        %v4444 = vadd.f32 %v4428, %v4193
        %v4445 = vadd.f32 %v4429, %v4199
        %v4446 = vadd.f32 %v4430, %v4202
        %v4447 = vadd.f32 %v4431, %v4208
        %v4448 = vadd.f32 %v4432, %v4211
        %v4449 = vadd.f32 %v4433, %v4217
        %v4450 = vadd.f32 %v4434, %v4220
        %v4451 = vadd.f32 %v4435, %v4226
        %v4452 = vadd.f32 %v4436, %v4229
        %v4453 = vadd.f32 %v4437, %v4235
        %v4454 = vadd.f32 %v4438, %v4238
        %v4455 = vadd.f32 %v4439, %v4244
        %v4456 = vadd.f32 %v4440, %v4247
        %4457 = vst [vmem:[%s4400] sm:$0xff] %v4441
        %4458 = vst [vmem:[%s4400 + $0x8] sm:$0xff] %v4442
        %4459 = vst [vmem:[%s4400 + $0x10] sm:$0xff] %v4443
        %4460 = vst [vmem:[%s4400 + $0x18] sm:$0xff] %v4444
        %4461 = vst [vmem:[%s4400 + $0x20] sm:$0xff] %v4445
        %4462 = vst [vmem:[%s4400 + $0x28] sm:$0xff] %v4446
        %4463 = vst [vmem:[%s4400 + $0x30] sm:$0xff] %v4447
        %4464 = vst [vmem:[%s4400 + $0x38] sm:$0xff] %v4448
        %4465 = vst [vmem:[%s4400 + $0x40] sm:$0xff] %v4449
        %4466 = vst [vmem:[%s4400 + $0x48] sm:$0xff] %v4450
        %4467 = vst [vmem:[%s4400 + $0x50] sm:$0xff] %v4451
        %4468 = vst [vmem:[%s4400 + $0x58] sm:$0xff] %v4452
        %4469 = vst [vmem:[%s4400 + $0x60] sm:$0xff] %v4453
        %4470 = vst [vmem:[%s4400 + $0x68] sm:$0xff] %v4454
        %4471 = vst [vmem:[%s4400 + $0x70] sm:$0xff] %v4455
        %4472 = vst [vmem:[%s4400 + $0x78] sm:$0xff] %v4456
        %v4473 = vld [vmem:[%s4400] sm:$0xff]
        %v4474 = vld [vmem:[%s4400 + $0x10] sm:$0xff]
        %v4475 = vld [vmem:[%s4400 + $0x20] sm:$0xff]
        %v4476 = vld [vmem:[%s4400 + $0x30] sm:$0xff]
        %v4477 = vld [vmem:[%s4400 + $0x40] sm:$0xff]
        %v4478 = vld [vmem:[%s4400 + $0x50] sm:$0xff]
        %v4479 = vld [vmem:[%s4400 + $0x60] sm:$0xff]
        %v4480 = vld [vmem:[%s4400 + $0x70] sm:$0xff]
        %v4481 = vadd.f32 %v4473, %v4186
        %v4482 = vadd.f32 %v4474, %v4195
        %v4483 = vadd.f32 %v4475, %v4204
        %v4484 = vadd.f32 %v4476, %v4213
        %v4485 = vadd.f32 %v4477, %v4222
        %v4486 = vadd.f32 %v4478, %v4231
        %v4487 = vadd.f32 %v4479, %v4240
        %v4488 = vadd.f32 %v4480, %v4249
        %4489 = vst [vmem:[%s4400] sm:$0xff] %v4481
        %4490 = vst [vmem:[%s4400 + $0x10] sm:$0xff] %v4482
        %4491 = vst [vmem:[%s4400 + $0x20] sm:$0xff] %v4483
        %4492 = vst [vmem:[%s4400 + $0x30] sm:$0xff] %v4484
        %4493 = vst [vmem:[%s4400 + $0x40] sm:$0xff] %v4485
        %4494 = vst [vmem:[%s4400 + $0x50] sm:$0xff] %v4486
        %4495 = vst [vmem:[%s4400 + $0x60] sm:$0xff] %v4487
        %4496 = vst [vmem:[%s4400 + $0x70] sm:$0xff] %v4488
        %v4497 = vld [vmem:[%s412 + $0x64] sm:$0xff]
        %v4498 = vld [vmem:[%s412 + $0x6c] sm:$0xff]
        %v4499 = vld [vmem:[%s412 + $0x74] sm:$0xff]
        %v4500 = vld [vmem:[%s412 + $0x7c] sm:$0xff]
        %v4501 = vld [vmem:[%s412 + $0xe8] sm:$0xff]
        %v4502 = vld [vmem:[%s412 + $0xf0] sm:$0xff]
        %v4503 = vld [vmem:[%s412 + $0xf8] sm:$0xff]
        %v4504 = vld [vmem:[%s412 + $0x100] sm:$0xff]
        %v4505 = vld [vmem:[%s412 + $0x16c] sm:$0xff]
        %v4506 = vld [vmem:[%s412 + $0x174] sm:$0xff]
        %v4507 = vld [vmem:[%s412 + $0x17c] sm:$0xff]
        %v4508 = vld [vmem:[%s412 + $0x184] sm:$0xff]
        %v4509 = vld [vmem:[%s412 + $0x1f0] sm:$0xff]
        %v4510 = vld [vmem:[%s412 + $0x1f8] sm:$0xff]
        %v4511 = vld [vmem:[%s412 + $0x200] sm:$0xff]
        %v4512 = vld [vmem:[%s412 + $0x208] sm:$0xff]
        %v4513 = vld [vmem:[%s412 + $0x274] sm:$0xff]
        %v4514 = vld [vmem:[%s412 + $0x27c] sm:$0xff]
        %v4515 = vld [vmem:[%s412 + $0x284] sm:$0xff]
        %v4516 = vld [vmem:[%s412 + $0x28c] sm:$0xff]
        %v4517 = vld [vmem:[%s412 + $0x2f8] sm:$0xff]
        %v4518 = vld [vmem:[%s412 + $0x300] sm:$0xff]
        %v4519 = vld [vmem:[%s412 + $0x308] sm:$0xff]
        %v4520 = vld [vmem:[%s412 + $0x310] sm:$0xff]
        %v4521 = vld [vmem:[%s412 + $0x37c] sm:$0xff]
        %v4522 = vld [vmem:[%s412 + $0x384] sm:$0xff]
        %v4523 = vld [vmem:[%s412 + $0x38c] sm:$0xff]
        %v4524 = vld [vmem:[%s412 + $0x394] sm:$0xff]
        %v4525 = vld [vmem:[%s412 + $0x400] sm:$0xff]
        %v4526 = vld [vmem:[%s412 + $0x408] sm:$0xff]
        %v4527 = vld [vmem:[%s412 + $0x410] sm:$0xff]
        %v4528 = vld [vmem:[%s412 + $0x418] sm:$0xff]
        %v4529 = vld [vmem:[%s412 + $0x484] sm:$0xff]
        %v4530 = vld [vmem:[%s412 + $0x48c] sm:$0xff]
        %v4531 = vld [vmem:[%s412 + $0x494] sm:$0xff]
        %v4532 = vld [vmem:[%s412 + $0x49c] sm:$0xff]
        %v4533 = vld [vmem:[%s412 + $0x508] sm:$0xff]
        %v4534 = vld [vmem:[%s412 + $0x510] sm:$0xff]
        %v4535 = vld [vmem:[%s412 + $0x518] sm:$0xff]
        %v4536 = vld [vmem:[%s412 + $0x520] sm:$0xff]
        %v4537 = vld [vmem:[%s412 + $0x58c] sm:$0xff]
        %v4538 = vld [vmem:[%s412 + $0x594] sm:$0xff]
        %v4539 = vld [vmem:[%s412 + $0x59c] sm:$0xff]
        %v4540 = vld [vmem:[%s412 + $0x5a4] sm:$0xff]
        %v4541 = vld [vmem:[%s412 + $0x610] sm:$0xff]
        %v4542 = vld [vmem:[%s412 + $0x618] sm:$0xff]
        %v4543 = vld [vmem:[%s412 + $0x620] sm:$0xff]
        %v4544 = vld [vmem:[%s412 + $0x628] sm:$0xff]
        %v4545 = vld [vmem:[%s412 + $0x694] sm:$0xff]
        %v4546 = vld [vmem:[%s412 + $0x69c] sm:$0xff]
        %v4547 = vld [vmem:[%s412 + $0x6a4] sm:$0xff]
        %v4548 = vld [vmem:[%s412 + $0x6ac] sm:$0xff]
        %v4549 = vld [vmem:[%s412 + $0x718] sm:$0xff]
        %v4550 = vld [vmem:[%s412 + $0x720] sm:$0xff]
        %v4551 = vld [vmem:[%s412 + $0x728] sm:$0xff]
        %v4552 = vld [vmem:[%s412 + $0x730] sm:$0xff]
        %v4553 = vld [vmem:[%s412 + $0x79c] sm:$0xff]
        %v4554 = vld [vmem:[%s412 + $0x7a4] sm:$0xff]
        %v4555 = vld [vmem:[%s412 + $0x7ac] sm:$0xff]
        %v4556 = vld [vmem:[%s412 + $0x7b4] sm:$0xff]
        %v4557 = vld [vmem:[%s412 + $0x820] sm:$0xff]
        %v4558 = vld [vmem:[%s412 + $0x828] sm:$0xff]
        %v4559 = vld [vmem:[%s412 + $0x830] sm:$0xff]
        %v4560 = vld [vmem:[%s412 + $0x838] sm:$0xff]
        %v4625 = vunpack.c.l.b16 %v4497
        %v4626 = vunpack.c.h.b16 %v4497
        %v4627 = vunpack.c.l.b16 %v4498
        %v4628 = vunpack.c.h.b16 %v4498
        %v4629 = vunpack.c.l.b16 %v4499
        %v4630 = vunpack.c.h.b16 %v4499
        %v4631 = vunpack.c.l.b16 %v4500
        %v4632 = vunpack.c.h.b16 %v4500
        %v4633 = vunpack.c.l.b16 %v4501
        %v4634 = vunpack.c.h.b16 %v4501
        %v4635 = vunpack.c.l.b16 %v4502
        %v4636 = vunpack.c.h.b16 %v4502
        %v4637 = vunpack.c.l.b16 %v4503
        %v4638 = vunpack.c.h.b16 %v4503
        %v4639 = vunpack.c.l.b16 %v4504
        %v4640 = vunpack.c.h.b16 %v4504
        %v4641 = vunpack.c.l.b16 %v4505
        %v4642 = vunpack.c.h.b16 %v4505
        %v4643 = vunpack.c.l.b16 %v4506
        %v4644 = vunpack.c.h.b16 %v4506
        %v4645 = vunpack.c.l.b16 %v4507
        %v4646 = vunpack.c.h.b16 %v4507
        %v4647 = vunpack.c.l.b16 %v4508
        %v4648 = vunpack.c.h.b16 %v4508
        %v4649 = vunpack.c.l.b16 %v4509
        %v4650 = vunpack.c.h.b16 %v4509
        %v4651 = vunpack.c.l.b16 %v4510
        %v4652 = vunpack.c.h.b16 %v4510
        %v4653 = vunpack.c.l.b16 %v4511
        %v4654 = vunpack.c.h.b16 %v4511
        %v4655 = vunpack.c.l.b16 %v4512
        %v4656 = vunpack.c.h.b16 %v4512
        %v4657 = vunpack.c.l.b16 %v4513
        %v4658 = vunpack.c.h.b16 %v4513
        %v4659 = vunpack.c.l.b16 %v4514
        %v4660 = vunpack.c.h.b16 %v4514
        %v4661 = vunpack.c.l.b16 %v4515
        %v4662 = vunpack.c.h.b16 %v4515
        %v4663 = vunpack.c.l.b16 %v4516
        %v4664 = vunpack.c.h.b16 %v4516
        %v4665 = vunpack.c.l.b16 %v4517
        %v4666 = vunpack.c.h.b16 %v4517
        %v4667 = vunpack.c.l.b16 %v4518
        %v4668 = vunpack.c.h.b16 %v4518
        %v4669 = vunpack.c.l.b16 %v4519
        %v4670 = vunpack.c.h.b16 %v4519
        %v4671 = vunpack.c.l.b16 %v4520
        %v4672 = vunpack.c.h.b16 %v4520
        %v4673 = vunpack.c.l.b16 %v4521
        %v4674 = vunpack.c.h.b16 %v4521
        %v4675 = vunpack.c.l.b16 %v4522
        %v4676 = vunpack.c.h.b16 %v4522
        %v4677 = vunpack.c.l.b16 %v4523
        %v4678 = vunpack.c.h.b16 %v4523
        %v4679 = vunpack.c.l.b16 %v4524
        %v4680 = vunpack.c.h.b16 %v4524
        %v4681 = vunpack.c.l.b16 %v4525
        %v4682 = vunpack.c.h.b16 %v4525
        %v4683 = vunpack.c.l.b16 %v4526
        %v4684 = vunpack.c.h.b16 %v4526
        %v4685 = vunpack.c.l.b16 %v4527
        %v4686 = vunpack.c.h.b16 %v4527
        %v4687 = vunpack.c.l.b16 %v4528
        %v4688 = vunpack.c.h.b16 %v4528
        %v4689 = vunpack.c.l.b16 %v4529
        %v4690 = vunpack.c.h.b16 %v4529
        %v4691 = vunpack.c.l.b16 %v4530
        %v4692 = vunpack.c.h.b16 %v4530
        %v4693 = vunpack.c.l.b16 %v4531
        %v4694 = vunpack.c.h.b16 %v4531
        %v4695 = vunpack.c.l.b16 %v4532
        %v4696 = vunpack.c.h.b16 %v4532
        %v4697 = vunpack.c.l.b16 %v4533
        %v4698 = vunpack.c.h.b16 %v4533
        %v4699 = vunpack.c.l.b16 %v4534
        %v4700 = vunpack.c.h.b16 %v4534
        %v4701 = vunpack.c.l.b16 %v4535
        %v4702 = vunpack.c.h.b16 %v4535
        %v4703 = vunpack.c.l.b16 %v4536
        %v4704 = vunpack.c.h.b16 %v4536
        %v4705 = vunpack.c.l.b16 %v4537
        %v4706 = vunpack.c.h.b16 %v4537
        %v4707 = vunpack.c.l.b16 %v4538
        %v4708 = vunpack.c.h.b16 %v4538
        %v4709 = vunpack.c.l.b16 %v4539
        %v4710 = vunpack.c.h.b16 %v4539
        %v4711 = vunpack.c.l.b16 %v4540
        %v4712 = vunpack.c.h.b16 %v4540
        %v4713 = vunpack.c.l.b16 %v4541
        %v4714 = vunpack.c.h.b16 %v4541
        %v4715 = vunpack.c.l.b16 %v4542
        %v4716 = vunpack.c.h.b16 %v4542
        %v4717 = vunpack.c.l.b16 %v4543
        %v4718 = vunpack.c.h.b16 %v4543
        %v4719 = vunpack.c.l.b16 %v4544
        %v4720 = vunpack.c.h.b16 %v4544
        %v4721 = vunpack.c.l.b16 %v4545
        %v4722 = vunpack.c.h.b16 %v4545
        %v4723 = vunpack.c.l.b16 %v4546
        %v4724 = vunpack.c.h.b16 %v4546
        %v4725 = vunpack.c.l.b16 %v4547
        %v4726 = vunpack.c.h.b16 %v4547
        %v4727 = vunpack.c.l.b16 %v4548
        %v4728 = vunpack.c.h.b16 %v4548
        %v4729 = vunpack.c.l.b16 %v4549
        %v4730 = vunpack.c.h.b16 %v4549
        %v4731 = vunpack.c.l.b16 %v4550
        %v4732 = vunpack.c.h.b16 %v4550
        %v4733 = vunpack.c.l.b16 %v4551
        %v4734 = vunpack.c.h.b16 %v4551
        %v4735 = vunpack.c.l.b16 %v4552
        %v4736 = vunpack.c.h.b16 %v4552
        %v4737 = vunpack.c.l.b16 %v4553
        %v4738 = vunpack.c.h.b16 %v4553
        %v4739 = vunpack.c.l.b16 %v4554
        %v4740 = vunpack.c.h.b16 %v4554
        %v4741 = vunpack.c.l.b16 %v4555
        %v4742 = vunpack.c.h.b16 %v4555
        %v4743 = vunpack.c.l.b16 %v4556
        %v4744 = vunpack.c.h.b16 %v4556
        %v4745 = vunpack.c.l.b16 %v4557
        %v4746 = vunpack.c.h.b16 %v4557
        %v4747 = vunpack.c.l.b16 %v4558
        %v4748 = vunpack.c.h.b16 %v4558
        %v4749 = vunpack.c.l.b16 %v4559
        %v4750 = vunpack.c.h.b16 %v4559
        %v4751 = vunpack.c.l.b16 %v4560
        %v4752 = vunpack.c.h.b16 %v4560
        %v4753 = vpack.c.b16 %v4633, %v4625
        %v4754 = vpack.c.b16 %v4634, %v4626
        %v4755 = vpack.c.b16 %v4635, %v4627
        %v4756 = vpack.c.b16 %v4636, %v4628
        %v4757 = vpack.c.b16 %v4637, %v4629
        %v4758 = vpack.c.b16 %v4638, %v4630
        %v4759 = vpack.c.b16 %v4639, %v4631
        %v4760 = vpack.c.b16 %v4640, %v4632
        %v4761 = vpack.c.b16 %v4649, %v4641
        %v4762 = vpack.c.b16 %v4650, %v4642
        %v4763 = vpack.c.b16 %v4651, %v4643
        %v4764 = vpack.c.b16 %v4652, %v4644
        %v4765 = vpack.c.b16 %v4653, %v4645
        %v4766 = vpack.c.b16 %v4654, %v4646
        %v4767 = vpack.c.b16 %v4655, %v4647
        %v4768 = vpack.c.b16 %v4656, %v4648
        %v4769 = vpack.c.b16 %v4665, %v4657
        %v4770 = vpack.c.b16 %v4666, %v4658
        %v4771 = vpack.c.b16 %v4667, %v4659
        %v4772 = vpack.c.b16 %v4668, %v4660
        %v4773 = vpack.c.b16 %v4669, %v4661
        %v4774 = vpack.c.b16 %v4670, %v4662
        %v4775 = vpack.c.b16 %v4671, %v4663
        %v4776 = vpack.c.b16 %v4672, %v4664
        %v4777 = vpack.c.b16 %v4681, %v4673
        %v4778 = vpack.c.b16 %v4682, %v4674
        %v4779 = vpack.c.b16 %v4683, %v4675
        %v4780 = vpack.c.b16 %v4684, %v4676
        %v4781 = vpack.c.b16 %v4685, %v4677
        %v4782 = vpack.c.b16 %v4686, %v4678
        %v4783 = vpack.c.b16 %v4687, %v4679
        %v4784 = vpack.c.b16 %v4688, %v4680
        %v4785 = vpack.c.b16 %v4697, %v4689
        %v4786 = vpack.c.b16 %v4698, %v4690
        %v4787 = vpack.c.b16 %v4699, %v4691
        %v4788 = vpack.c.b16 %v4700, %v4692
        %v4789 = vpack.c.b16 %v4701, %v4693
        %v4790 = vpack.c.b16 %v4702, %v4694
        %v4791 = vpack.c.b16 %v4703, %v4695
        %v4792 = vpack.c.b16 %v4704, %v4696
        %v4793 = vpack.c.b16 %v4713, %v4705
        %v4794 = vpack.c.b16 %v4714, %v4706
        %v4795 = vpack.c.b16 %v4715, %v4707
        %v4796 = vpack.c.b16 %v4716, %v4708
        %v4797 = vpack.c.b16 %v4717, %v4709
        %v4798 = vpack.c.b16 %v4718, %v4710
        %v4799 = vpack.c.b16 %v4719, %v4711
        %v4800 = vpack.c.b16 %v4720, %v4712
        %v4801 = vpack.c.b16 %v4729, %v4721
        %v4802 = vpack.c.b16 %v4730, %v4722
        %v4803 = vpack.c.b16 %v4731, %v4723
        %v4804 = vpack.c.b16 %v4732, %v4724
        %v4805 = vpack.c.b16 %v4733, %v4725
        %v4806 = vpack.c.b16 %v4734, %v4726
        %v4807 = vpack.c.b16 %v4735, %v4727
        %v4808 = vpack.c.b16 %v4736, %v4728
        %v4809 = vpack.c.b16 %v4745, %v4737
        %v4810 = vpack.c.b16 %v4746, %v4738
        %v4811 = vpack.c.b16 %v4747, %v4739
        %v4812 = vpack.c.b16 %v4748, %v4740
        %v4813 = vpack.c.b16 %v4749, %v4741
        %v4814 = vpack.c.b16 %v4750, %v4742
        %v4815 = vpack.c.b16 %v4751, %v4743
        %v4816 = vpack.c.b16 %v4752, %v4744
        %4881 = vmatprep.subr.bf16.mxu0 %v4810
        %4882 = vmatpush1.bf16.msra.mxu0 %v4809
        %4883 = vmatprep.subr.bf16.mxu0 %v4802
        %4884 = vmatpush1.bf16.msra.mxu0 %v4801
        %4885 = vmatprep.subr.bf16.mxu0 %v4794
        %4886 = vmatpush1.bf16.msra.mxu0 %v4793
        %4887 = vmatprep.subr.bf16.mxu0 %v4786
        %4888 = vmatpush1.bf16.msra.mxu0 %v4785
        %4889 = vmatprep.subr.bf16.mxu0 %v4778
        %4890 = vmatpush1.bf16.msra.mxu0 %v4777
        %4891 = vmatprep.subr.bf16.mxu0 %v4770
        %4892 = vmatpush1.bf16.msra.mxu0 %v4769
        %4893 = vmatprep.subr.bf16.mxu0 %v4762
        %4894 = vmatpush1.bf16.msra.mxu0 %v4761
        %4895 = vmatprep.subr.bf16.mxu0 %v4754
        %4896 = vmatpush1.bf16.msra.mxu0 %v4753
        %4897 = vmatprep.subr.bf16.mxu0 0
        %4898 = vmatpush2.bf16.msra.mxu0 0
        %4899 = vmatprep.subr.bf16.mxu0 0
        %4900 = vmatpush2.bf16.msra.mxu0 0
        %4901 = vmatprep.subr.bf16.mxu0 0
        %4902 = vmatpush2.bf16.msra.mxu0 0
        %4903 = vmatprep.subr.bf16.mxu0 0
        %4904 = vmatpush2.bf16.msra.mxu0 0
        %4905 = vmatprep.subr.bf16.mxu0 0
        %4906 = vmatpush2.bf16.msra.mxu0 0
        %4907 = vmatprep.subr.bf16.mxu0 0
        %4908 = vmatpush2.bf16.msra.mxu0 0
        %4909 = vmatprep.subr.bf16.mxu0 0
        %4910 = vmatpush2.bf16.msra.mxu0 0
        %4911 = vmatprep.subr.bf16.mxu0 0
        %4912 = vmatpush2.bf16.msra.mxu0 0
        %4913 = vmatprep.mubr.bf16.mxu0 0
        %4914 = vmatmul.mubr.bf16.gmra.mxu0 %v525
        %v4915 = vpop.f32.mrf.mxu0
        %v4916 = vadd.f32 0.0, %v4915
        %v4917 = vpop.f32.mrf.mxu0
        %v4918 = vadd.f32 0.0, %v4917
        %v4919 = vpop.f32.mrf.mxu0
        %v4920 = vpop.f32.mrf.mxu0
        %v4921 = vadd.f32 0.0, %v4920
        %4922 = vmatprep.mubr.bf16.mxu0 0
        %4923 = vmatmul.mubr.bf16.gmra.mxu0 %v526
        %v4924 = vpop.f32.mrf.mxu0
        %v4925 = vadd.f32 0.0, %v4924
        %v4926 = vpop.f32.mrf.mxu0
        %v4927 = vadd.f32 0.0, %v4926
        %v4928 = vpop.f32.mrf.mxu0
        %v4929 = vpop.f32.mrf.mxu0
        %v4930 = vadd.f32 0.0, %v4929
        %4931 = vmatprep.mubr.bf16.mxu0 0
        %4932 = vmatmul.mubr.bf16.gmra.mxu0 %v527
        %v4933 = vpop.f32.mrf.mxu0
        %v4934 = vadd.f32 0.0, %v4933
        %v4935 = vpop.f32.mrf.mxu0
        %v4936 = vadd.f32 0.0, %v4935
        %v4937 = vpop.f32.mrf.mxu0
        %v4938 = vpop.f32.mrf.mxu0
        %v4939 = vadd.f32 0.0, %v4938
        %4940 = vmatprep.mubr.bf16.mxu0 0
        %4941 = vmatmul.mubr.bf16.gmra.mxu0 %v528
        %v4942 = vpop.f32.mrf.mxu0
        %v4943 = vadd.f32 0.0, %v4942
        %v4944 = vpop.f32.mrf.mxu0
        %v4945 = vadd.f32 0.0, %v4944
        %v4946 = vpop.f32.mrf.mxu0
        %v4947 = vpop.f32.mrf.mxu0
        %v4948 = vadd.f32 0.0, %v4947
        %4949 = vmatprep.mubr.bf16.mxu0 0
        %4950 = vmatmul.mubr.bf16.gmra.mxu0 %v529
        %v4951 = vpop.f32.mrf.mxu0
        %v4952 = vadd.f32 0.0, %v4951
        %v4953 = vpop.f32.mrf.mxu0
        %v4954 = vadd.f32 0.0, %v4953
        %v4955 = vpop.f32.mrf.mxu0
        %v4956 = vpop.f32.mrf.mxu0
        %v4957 = vadd.f32 0.0, %v4956
        %4958 = vmatprep.mubr.bf16.mxu0 0
        %4959 = vmatmul.mubr.bf16.gmra.mxu0 %v530
        %v4960 = vpop.f32.mrf.mxu0
        %v4961 = vadd.f32 0.0, %v4960
        %v4962 = vpop.f32.mrf.mxu0
        %v4963 = vadd.f32 0.0, %v4962
        %v4964 = vpop.f32.mrf.mxu0
        %v4965 = vpop.f32.mrf.mxu0
        %v4966 = vadd.f32 0.0, %v4965
        %4967 = vmatprep.mubr.bf16.mxu0 0
        %4968 = vmatmul.mubr.bf16.gmra.mxu0 %v531
        %v4969 = vpop.f32.mrf.mxu0
        %v4970 = vadd.f32 0.0, %v4969
        %v4971 = vpop.f32.mrf.mxu0
        %v4972 = vadd.f32 0.0, %v4971
        %v4973 = vpop.f32.mrf.mxu0
        %v4974 = vpop.f32.mrf.mxu0
        %v4975 = vadd.f32 0.0, %v4974
        %4976 = vmatprep.mubr.bf16.mxu0 0
        %4977 = vmatmul.mubr.bf16.gmra.mxu0 %v532
        %v4978 = vpop.f32.mrf.mxu0
        %v4979 = vadd.f32 0.0, %v4978
        %v4980 = vpop.f32.mrf.mxu0
        %v4981 = vadd.f32 0.0, %v4980
        %v4982 = vpop.f32.mrf.mxu0
        %v4983 = vpop.f32.mrf.mxu0
        %v4984 = vadd.f32 0.0, %v4983
        %4985 = vdwg.mxu0
        %4986 = vmatprep.subr.bf16.mxu0 %v4812
        %4987 = vmatpush1.bf16.msra.mxu0 %v4811
        %4988 = vmatprep.subr.bf16.mxu0 %v4804
        %4989 = vmatpush1.bf16.msra.mxu0 %v4803
        %4990 = vmatprep.subr.bf16.mxu0 %v4796
        %4991 = vmatpush1.bf16.msra.mxu0 %v4795
        %4992 = vmatprep.subr.bf16.mxu0 %v4788
        %4993 = vmatpush1.bf16.msra.mxu0 %v4787
        %4994 = vmatprep.subr.bf16.mxu0 %v4780
        %4995 = vmatpush1.bf16.msra.mxu0 %v4779
        %4996 = vmatprep.subr.bf16.mxu0 %v4772
        %4997 = vmatpush1.bf16.msra.mxu0 %v4771
        %4998 = vmatprep.subr.bf16.mxu0 %v4764
        %4999 = vmatpush1.bf16.msra.mxu0 %v4763
        %5000 = vmatprep.subr.bf16.mxu0 %v4756
        %5001 = vmatpush1.bf16.msra.mxu0 %v4755
        %5002 = vmatprep.subr.bf16.mxu0 0
        %5003 = vmatpush2.bf16.msra.mxu0 0
        %5004 = vmatprep.subr.bf16.mxu0 0
        %5005 = vmatpush2.bf16.msra.mxu0 0
        %5006 = vmatprep.subr.bf16.mxu0 0
        %5007 = vmatpush2.bf16.msra.mxu0 0
        %5008 = vmatprep.subr.bf16.mxu0 0
        %5009 = vmatpush2.bf16.msra.mxu0 0
        %5010 = vmatprep.subr.bf16.mxu0 0
        %5011 = vmatpush2.bf16.msra.mxu0 0
        %5012 = vmatprep.subr.bf16.mxu0 0
        %5013 = vmatpush2.bf16.msra.mxu0 0
        %5014 = vmatprep.subr.bf16.mxu0 0
        %5015 = vmatpush2.bf16.msra.mxu0 0
        %5016 = vmatprep.subr.bf16.mxu0 0
        %5017 = vmatpush2.bf16.msra.mxu0 0
        %5018 = vmatprep.mubr.bf16.mxu0 0
        %5019 = vmatmul.mubr.bf16.gmra.mxu0 %v525
        %v5020 = vpop.f32.mrf.mxu0
        %v5021 = vpop.f32.mrf.mxu0
        %v5022 = vadd.f32 0.0, %v5021
        %v5023 = vpop.f32.mrf.mxu0
        %v5024 = vadd.f32 0.0, %v5023
        %v5025 = vpop.f32.mrf.mxu0
        %5026 = vmatprep.mubr.bf16.mxu0 0
        %5027 = vmatmul.mubr.bf16.gmra.mxu0 %v526
        %v5028 = vpop.f32.mrf.mxu0
        %v5029 = vpop.f32.mrf.mxu0
        %v5030 = vadd.f32 0.0, %v5029
        %v5031 = vpop.f32.mrf.mxu0
        %v5032 = vadd.f32 0.0, %v5031
        %v5033 = vpop.f32.mrf.mxu0
        %5034 = vmatprep.mubr.bf16.mxu0 0
        %5035 = vmatmul.mubr.bf16.gmra.mxu0 %v527
        %v5036 = vpop.f32.mrf.mxu0
        %v5037 = vpop.f32.mrf.mxu0
        %v5038 = vadd.f32 0.0, %v5037
        %v5039 = vpop.f32.mrf.mxu0
        %v5040 = vadd.f32 0.0, %v5039
        %v5041 = vpop.f32.mrf.mxu0
        %5042 = vmatprep.mubr.bf16.mxu0 0
        %5043 = vmatmul.mubr.bf16.gmra.mxu0 %v528
        %v5044 = vpop.f32.mrf.mxu0
        %v5045 = vpop.f32.mrf.mxu0
        %v5046 = vadd.f32 0.0, %v5045
        %v5047 = vpop.f32.mrf.mxu0
        %v5048 = vadd.f32 0.0, %v5047
        %v5049 = vpop.f32.mrf.mxu0
        %5050 = vmatprep.mubr.bf16.mxu0 0
        %5051 = vmatmul.mubr.bf16.gmra.mxu0 %v529
        %v5052 = vpop.f32.mrf.mxu0
        %v5053 = vpop.f32.mrf.mxu0
        %v5054 = vadd.f32 0.0, %v5053
        %v5055 = vpop.f32.mrf.mxu0
        %v5056 = vadd.f32 0.0, %v5055
        %v5057 = vpop.f32.mrf.mxu0
        %5058 = vmatprep.mubr.bf16.mxu0 0
        %5059 = vmatmul.mubr.bf16.gmra.mxu0 %v530
        %v5060 = vpop.f32.mrf.mxu0
        %v5061 = vpop.f32.mrf.mxu0
        %v5062 = vadd.f32 0.0, %v5061
        %v5063 = vpop.f32.mrf.mxu0
        %v5064 = vadd.f32 0.0, %v5063
        %v5065 = vpop.f32.mrf.mxu0
        %5066 = vmatprep.mubr.bf16.mxu0 0
        %5067 = vmatmul.mubr.bf16.gmra.mxu0 %v531
        %v5068 = vpop.f32.mrf.mxu0
        %v5069 = vpop.f32.mrf.mxu0
        %v5070 = vadd.f32 0.0, %v5069
        %v5071 = vpop.f32.mrf.mxu0
        %v5072 = vadd.f32 0.0, %v5071
        %v5073 = vpop.f32.mrf.mxu0
        %5074 = vmatprep.mubr.bf16.mxu0 0
        %5075 = vmatmul.mubr.bf16.gmra.mxu0 %v532
        %v5076 = vpop.f32.mrf.mxu0
        %v5077 = vpop.f32.mrf.mxu0
        %v5078 = vadd.f32 0.0, %v5077
        %v5079 = vpop.f32.mrf.mxu0
        %v5080 = vadd.f32 0.0, %v5079
        %v5081 = vpop.f32.mrf.mxu0
        %5082 = vdwg.mxu0
        %5083 = vmatprep.subr.bf16.mxu0 %v4814
        %5084 = vmatpush1.bf16.msra.mxu0 %v4813
        %5085 = vmatprep.subr.bf16.mxu0 %v4806
        %5086 = vmatpush1.bf16.msra.mxu0 %v4805
        %5087 = vmatprep.subr.bf16.mxu0 %v4798
        %5088 = vmatpush1.bf16.msra.mxu0 %v4797
        %5089 = vmatprep.subr.bf16.mxu0 %v4790
        %5090 = vmatpush1.bf16.msra.mxu0 %v4789
        %5091 = vmatprep.subr.bf16.mxu0 %v4782
        %5092 = vmatpush1.bf16.msra.mxu0 %v4781
        %5093 = vmatprep.subr.bf16.mxu0 %v4774
        %5094 = vmatpush1.bf16.msra.mxu0 %v4773
        %5095 = vmatprep.subr.bf16.mxu0 %v4766
        %5096 = vmatpush1.bf16.msra.mxu0 %v4765
        %5097 = vmatprep.subr.bf16.mxu0 %v4758
        %5098 = vmatpush1.bf16.msra.mxu0 %v4757
        %5099 = vmatprep.subr.bf16.mxu0 0
        %5100 = vmatpush2.bf16.msra.mxu0 0
        %5101 = vmatprep.subr.bf16.mxu0 0
        %5102 = vmatpush2.bf16.msra.mxu0 0
        %5103 = vmatprep.subr.bf16.mxu0 0
        %5104 = vmatpush2.bf16.msra.mxu0 0
        %5105 = vmatprep.subr.bf16.mxu0 0
        %5106 = vmatpush2.bf16.msra.mxu0 0
        %5107 = vmatprep.subr.bf16.mxu0 0
        %5108 = vmatpush2.bf16.msra.mxu0 0
        %5109 = vmatprep.subr.bf16.mxu0 0
        %5110 = vmatpush2.bf16.msra.mxu0 0
        %5111 = vmatprep.subr.bf16.mxu0 0
        %5112 = vmatpush2.bf16.msra.mxu0 0
        %5113 = vmatprep.subr.bf16.mxu0 0
        %5114 = vmatpush2.bf16.msra.mxu0 0
        %5115 = vmatprep.mubr.bf16.mxu0 0
        %5116 = vmatmul.mubr.bf16.gmra.mxu0 %v525
        %v5117 = vpop.f32.mrf.mxu0
        %v5118 = vpop.f32.mrf.mxu0
        %v5119 = vadd.f32 0.0, %v5118
        %v5120 = vpop.f32.mrf.mxu0
        %v5121 = vadd.f32 0.0, %v5120
        %v5122 = vpop.f32.mrf.mxu0
        %5123 = vmatprep.mubr.bf16.mxu0 0
        %5124 = vmatmul.mubr.bf16.gmra.mxu0 %v526
        %v5125 = vpop.f32.mrf.mxu0
        %v5126 = vpop.f32.mrf.mxu0
        %v5127 = vadd.f32 0.0, %v5126
        %v5128 = vpop.f32.mrf.mxu0
        %v5129 = vadd.f32 0.0, %v5128
        %v5130 = vpop.f32.mrf.mxu0
        %5131 = vmatprep.mubr.bf16.mxu0 0
        %5132 = vmatmul.mubr.bf16.gmra.mxu0 %v527
        %v5133 = vpop.f32.mrf.mxu0
        %v5134 = vpop.f32.mrf.mxu0
        %v5135 = vadd.f32 0.0, %v5134
        %v5136 = vpop.f32.mrf.mxu0
        %v5137 = vadd.f32 0.0, %v5136
        %v5138 = vpop.f32.mrf.mxu0
        %5139 = vmatprep.mubr.bf16.mxu0 0
        %5140 = vmatmul.mubr.bf16.gmra.mxu0 %v528
        %v5141 = vpop.f32.mrf.mxu0
        %v5142 = vpop.f32.mrf.mxu0
        %v5143 = vadd.f32 0.0, %v5142
        %v5144 = vpop.f32.mrf.mxu0
        %v5145 = vadd.f32 0.0, %v5144
        %v5146 = vpop.f32.mrf.mxu0
        %5147 = vmatprep.mubr.bf16.mxu0 0
        %5148 = vmatmul.mubr.bf16.gmra.mxu0 %v529
        %v5149 = vpop.f32.mrf.mxu0
        %v5150 = vpop.f32.mrf.mxu0
        %v5151 = vadd.f32 0.0, %v5150
        %v5152 = vpop.f32.mrf.mxu0
        %v5153 = vadd.f32 0.0, %v5152
        %v5154 = vpop.f32.mrf.mxu0
        %5155 = vmatprep.mubr.bf16.mxu0 0
        %5156 = vmatmul.mubr.bf16.gmra.mxu0 %v530
        %v5157 = vpop.f32.mrf.mxu0
        %v5158 = vpop.f32.mrf.mxu0
        %v5159 = vadd.f32 0.0, %v5158
        %v5160 = vpop.f32.mrf.mxu0
        %v5161 = vadd.f32 0.0, %v5160
        %v5162 = vpop.f32.mrf.mxu0
        %5163 = vmatprep.mubr.bf16.mxu0 0
        %5164 = vmatmul.mubr.bf16.gmra.mxu0 %v531
        %v5165 = vpop.f32.mrf.mxu0
        %v5166 = vpop.f32.mrf.mxu0
        %v5167 = vadd.f32 0.0, %v5166
        %v5168 = vpop.f32.mrf.mxu0
        %v5169 = vadd.f32 0.0, %v5168
        %v5170 = vpop.f32.mrf.mxu0
        %5171 = vmatprep.mubr.bf16.mxu0 0
        %5172 = vmatmul.mubr.bf16.gmra.mxu0 %v532
        %v5173 = vpop.f32.mrf.mxu0
        %v5174 = vpop.f32.mrf.mxu0
        %v5175 = vadd.f32 0.0, %v5174
        %v5176 = vpop.f32.mrf.mxu0
        %v5177 = vadd.f32 0.0, %v5176
        %v5178 = vpop.f32.mrf.mxu0
        %5179 = vdwg.mxu0
        %5180 = vmatprep.subr.bf16.mxu0 %v4816
        %5181 = vmatpush1.bf16.msra.mxu0 %v4815
        %5182 = vmatprep.subr.bf16.mxu0 %v4808
        %5183 = vmatpush1.bf16.msra.mxu0 %v4807
        %5184 = vmatprep.subr.bf16.mxu0 %v4800
        %5185 = vmatpush1.bf16.msra.mxu0 %v4799
        %5186 = vmatprep.subr.bf16.mxu0 %v4792
        %5187 = vmatpush1.bf16.msra.mxu0 %v4791
        %5188 = vmatprep.subr.bf16.mxu0 %v4784
        %5189 = vmatpush1.bf16.msra.mxu0 %v4783
        %5190 = vmatprep.subr.bf16.mxu0 %v4776
        %5191 = vmatpush1.bf16.msra.mxu0 %v4775
        %5192 = vmatprep.subr.bf16.mxu0 %v4768
        %5193 = vmatpush1.bf16.msra.mxu0 %v4767
        %5194 = vmatprep.subr.bf16.mxu0 %v4760
        %5195 = vmatpush1.bf16.msra.mxu0 %v4759
        %5196 = vmatprep.subr.bf16.mxu0 0
        %5197 = vmatpush2.bf16.msra.mxu0 0
        %5198 = vmatprep.subr.bf16.mxu0 0
        %5199 = vmatpush2.bf16.msra.mxu0 0
        %5200 = vmatprep.subr.bf16.mxu0 0
        %5201 = vmatpush2.bf16.msra.mxu0 0
        %5202 = vmatprep.subr.bf16.mxu0 0
        %5203 = vmatpush2.bf16.msra.mxu0 0
        %5204 = vmatprep.subr.bf16.mxu0 0
        %5205 = vmatpush2.bf16.msra.mxu0 0
        %5206 = vmatprep.subr.bf16.mxu0 0
        %5207 = vmatpush2.bf16.msra.mxu0 0
        %5208 = vmatprep.subr.bf16.mxu0 0
        %5209 = vmatpush2.bf16.msra.mxu0 0
        %5210 = vmatprep.subr.bf16.mxu0 0
        %5211 = vmatpush2.bf16.msra.mxu0 0
        %5212 = vmatprep.mubr.bf16.mxu0 0
        %5213 = vmatmul.mubr.bf16.gmra.mxu0 %v525
        %v5214 = vpop.f32.mrf.mxu0
        %v5215 = vadd.f32 0.0, %v5214
        %v5216 = vpop.f32.mrf.mxu0
        %v5217 = vpop.f32.mrf.mxu0
        %v5218 = vadd.f32 0.0, %v5217
        %v5219 = vpop.f32.mrf.mxu0
        %v5220 = vadd.f32 0.0, %v5219
        %5221 = vmatprep.mubr.bf16.mxu0 0
        %5222 = vmatmul.mubr.bf16.gmra.mxu0 %v526
        %v5223 = vpop.f32.mrf.mxu0
        %v5224 = vadd.f32 0.0, %v5223
        %v5225 = vpop.f32.mrf.mxu0
        %v5226 = vpop.f32.mrf.mxu0
        %v5227 = vadd.f32 0.0, %v5226
        %v5228 = vpop.f32.mrf.mxu0
        %v5229 = vadd.f32 0.0, %v5228
        %5230 = vmatprep.mubr.bf16.mxu0 0
        %5231 = vmatmul.mubr.bf16.gmra.mxu0 %v527
        %v5232 = vpop.f32.mrf.mxu0
        %v5233 = vadd.f32 0.0, %v5232
        %v5234 = vpop.f32.mrf.mxu0
        %v5235 = vpop.f32.mrf.mxu0
        %v5236 = vadd.f32 0.0, %v5235
        %v5237 = vpop.f32.mrf.mxu0
        %v5238 = vadd.f32 0.0, %v5237
        %5239 = vmatprep.mubr.bf16.mxu0 0
        %5240 = vmatmul.mubr.bf16.gmra.mxu0 %v528
        %v5241 = vpop.f32.mrf.mxu0
        %v5242 = vadd.f32 0.0, %v5241
        %v5243 = vpop.f32.mrf.mxu0
        %v5244 = vpop.f32.mrf.mxu0
        %v5245 = vadd.f32 0.0, %v5244
        %v5246 = vpop.f32.mrf.mxu0
        %v5247 = vadd.f32 0.0, %v5246
        %5248 = vmatprep.mubr.bf16.mxu0 0
        %5249 = vmatmul.mubr.bf16.gmra.mxu0 %v529
        %v5250 = vpop.f32.mrf.mxu0
        %v5251 = vadd.f32 0.0, %v5250
        %v5252 = vpop.f32.mrf.mxu0
        %v5253 = vpop.f32.mrf.mxu0
        %v5254 = vadd.f32 0.0, %v5253
        %v5255 = vpop.f32.mrf.mxu0
        %v5256 = vadd.f32 0.0, %v5255
        %5257 = vmatprep.mubr.bf16.mxu0 0
        %5258 = vmatmul.mubr.bf16.gmra.mxu0 %v530
        %v5259 = vpop.f32.mrf.mxu0
        %v5260 = vadd.f32 0.0, %v5259
        %v5261 = vpop.f32.mrf.mxu0
        %v5262 = vpop.f32.mrf.mxu0
        %v5263 = vadd.f32 0.0, %v5262
        %v5264 = vpop.f32.mrf.mxu0
        %v5265 = vadd.f32 0.0, %v5264
        %5266 = vmatprep.mubr.bf16.mxu0 0
        %5267 = vmatmul.mubr.bf16.gmra.mxu0 %v531
        %v5268 = vpop.f32.mrf.mxu0
        %v5269 = vadd.f32 0.0, %v5268
        %v5270 = vpop.f32.mrf.mxu0
        %v5271 = vpop.f32.mrf.mxu0
        %v5272 = vadd.f32 0.0, %v5271
        %v5273 = vpop.f32.mrf.mxu0
        %v5274 = vadd.f32 0.0, %v5273
        %5275 = vmatprep.mubr.bf16.mxu0 0
        %5276 = vmatmul.mubr.bf16.gmra.mxu0 %v532
        %v5277 = vpop.f32.mrf.mxu0
        %v5278 = vadd.f32 0.0, %v5277
        %v5279 = vpop.f32.mrf.mxu0
        %v5280 = vpop.f32.mrf.mxu0
        %v5281 = vadd.f32 0.0, %v5280
        %v5282 = vpop.f32.mrf.mxu0
        %v5283 = vadd.f32 0.0, %v5282
        %5284 = vdwg.mxu0
        %s5285 = sadd.s32 %s406, 24
        %s5286 = smul.u32 %s5285, 16
        %s5287 = scalar_lea.vmem [#allocation2], %s5286
        %v5288 = vld [vmem:[%s5287 + $0xc] sm:$0xf]
        %v5289 = vld [vmem:[%s5287 + $0x1c] sm:$0xf]
        %v5290 = vld [vmem:[%s5287 + $0x2c] sm:$0xf]
        %v5291 = vld [vmem:[%s5287 + $0x3c] sm:$0xf]
        %v5292 = vld [vmem:[%s5287 + $0x4c] sm:$0xf]
        %v5293 = vld [vmem:[%s5287 + $0x5c] sm:$0xf]
        %v5294 = vld [vmem:[%s5287 + $0x6c] sm:$0xf]
        %v5295 = vld [vmem:[%s5287 + $0x7c] sm:$0xf]
        %v5296 = vadd.f32 %v5288, %v4916
        %v5297 = vadd.f32 %v5289, %v4925
        %v5298 = vadd.f32 %v5290, %v4934
        %v5299 = vadd.f32 %v5291, %v4943
        %v5300 = vadd.f32 %v5292, %v4952
        %v5301 = vadd.f32 %v5293, %v4961
        %v5302 = vadd.f32 %v5294, %v4970
        %v5303 = vadd.f32 %v5295, %v4979
        %5304 = vst [vmem:[%s5287 + $0xc] sm:$0xf] %v5296
        %5305 = vst [vmem:[%s5287 + $0x1c] sm:$0xf] %v5297
        %5306 = vst [vmem:[%s5287 + $0x2c] sm:$0xf] %v5298
        %5307 = vst [vmem:[%s5287 + $0x3c] sm:$0xf] %v5299
        %5308 = vst [vmem:[%s5287 + $0x4c] sm:$0xf] %v5300
        %5309 = vst [vmem:[%s5287 + $0x5c] sm:$0xf] %v5301
        %5310 = vst [vmem:[%s5287 + $0x6c] sm:$0xf] %v5302
        %5311 = vst [vmem:[%s5287 + $0x7c] sm:$0xf] %v5303
        %v5312 = vld [vmem:[%s5287] sm:$0xff]
        %v5313 = vld [vmem:[%s5287 + $0x8] sm:$0xff]
        %v5314 = vld [vmem:[%s5287 + $0x10] sm:$0xff]
        %v5315 = vld [vmem:[%s5287 + $0x18] sm:$0xff]
        %v5316 = vld [vmem:[%s5287 + $0x20] sm:$0xff]
        %v5317 = vld [vmem:[%s5287 + $0x28] sm:$0xff]
        %v5318 = vld [vmem:[%s5287 + $0x30] sm:$0xff]
        %v5319 = vld [vmem:[%s5287 + $0x38] sm:$0xff]
        %v5320 = vld [vmem:[%s5287 + $0x40] sm:$0xff]
        %v5321 = vld [vmem:[%s5287 + $0x48] sm:$0xff]
        %v5322 = vld [vmem:[%s5287 + $0x50] sm:$0xff]
        %v5323 = vld [vmem:[%s5287 + $0x58] sm:$0xff]
        %v5324 = vld [vmem:[%s5287 + $0x60] sm:$0xff]
        %v5325 = vld [vmem:[%s5287 + $0x68] sm:$0xff]
        %v5326 = vld [vmem:[%s5287 + $0x70] sm:$0xff]
        %v5327 = vld [vmem:[%s5287 + $0x78] sm:$0xff]
        %v5328 = vadd.f32 %v5312, %v4918
        %v5329 = vadd.f32 %v5313, %v4921
        %v5330 = vadd.f32 %v5314, %v4927
        %v5331 = vadd.f32 %v5315, %v4930
        %v5332 = vadd.f32 %v5316, %v4936
        %v5333 = vadd.f32 %v5317, %v4939
        %v5334 = vadd.f32 %v5318, %v4945
        %v5335 = vadd.f32 %v5319, %v4948
        %v5336 = vadd.f32 %v5320, %v4954
        %v5337 = vadd.f32 %v5321, %v4957
        %v5338 = vadd.f32 %v5322, %v4963
        %v5339 = vadd.f32 %v5323, %v4966
        %v5340 = vadd.f32 %v5324, %v4972
        %v5341 = vadd.f32 %v5325, %v4975
        %v5342 = vadd.f32 %v5326, %v4981
        %v5343 = vadd.f32 %v5327, %v4984
        %5344 = vst [vmem:[%s5287] sm:$0xff] %v5328
        %5345 = vst [vmem:[%s5287 + $0x8] sm:$0xff] %v5329
        %5346 = vst [vmem:[%s5287 + $0x10] sm:$0xff] %v5330
        %5347 = vst [vmem:[%s5287 + $0x18] sm:$0xff] %v5331
        %5348 = vst [vmem:[%s5287 + $0x20] sm:$0xff] %v5332
        %5349 = vst [vmem:[%s5287 + $0x28] sm:$0xff] %v5333
        %5350 = vst [vmem:[%s5287 + $0x30] sm:$0xff] %v5334
        %5351 = vst [vmem:[%s5287 + $0x38] sm:$0xff] %v5335
        %5352 = vst [vmem:[%s5287 + $0x40] sm:$0xff] %v5336
        %5353 = vst [vmem:[%s5287 + $0x48] sm:$0xff] %v5337
        %5354 = vst [vmem:[%s5287 + $0x50] sm:$0xff] %v5338
        %5355 = vst [vmem:[%s5287 + $0x58] sm:$0xff] %v5339
        %5356 = vst [vmem:[%s5287 + $0x60] sm:$0xff] %v5340
        %5357 = vst [vmem:[%s5287 + $0x68] sm:$0xff] %v5341
        %5358 = vst [vmem:[%s5287 + $0x70] sm:$0xff] %v5342
        %5359 = vst [vmem:[%s5287 + $0x78] sm:$0xff] %v5343
        %v5360 = vld [vmem:[%s5287] sm:$0xf]
        %v5361 = vld [vmem:[%s5287 + $0x10] sm:$0xf]
        %v5362 = vld [vmem:[%s5287 + $0x20] sm:$0xf]
        %v5363 = vld [vmem:[%s5287 + $0x30] sm:$0xf]
        %v5364 = vld [vmem:[%s5287 + $0x40] sm:$0xf]
        %v5365 = vld [vmem:[%s5287 + $0x50] sm:$0xf]
        %v5366 = vld [vmem:[%s5287 + $0x60] sm:$0xf]
        %v5367 = vld [vmem:[%s5287 + $0x70] sm:$0xf]
        %v5376 = vrot.slane %v5024, 4
        %v5377 = vrot.slane %v5032, 4
        %v5378 = vrot.slane %v5040, 4
        %v5379 = vrot.slane %v5048, 4
        %v5380 = vrot.slane %v5056, 4
        %v5381 = vrot.slane %v5064, 4
        %v5382 = vrot.slane %v5072, 4
        %v5383 = vrot.slane %v5080, 4
        %v5392 = vadd.f32 %v5360, %v5376
        %v5393 = vadd.f32 %v5361, %v5377
        %v5394 = vadd.f32 %v5362, %v5378
        %v5395 = vadd.f32 %v5363, %v5379
        %v5396 = vadd.f32 %v5364, %v5380
        %v5397 = vadd.f32 %v5365, %v5381
        %v5398 = vadd.f32 %v5366, %v5382
        %v5399 = vadd.f32 %v5367, %v5383
        %5400 = vst [vmem:[%s5287] sm:$0xf] %v5392
        %5401 = vst [vmem:[%s5287 + $0x10] sm:$0xf] %v5393
        %5402 = vst [vmem:[%s5287 + $0x20] sm:$0xf] %v5394
        %5403 = vst [vmem:[%s5287 + $0x30] sm:$0xf] %v5395
        %5404 = vst [vmem:[%s5287 + $0x40] sm:$0xf] %v5396
        %5405 = vst [vmem:[%s5287 + $0x50] sm:$0xf] %v5397
        %5406 = vst [vmem:[%s5287 + $0x60] sm:$0xf] %v5398
        %5407 = vst [vmem:[%s5287 + $0x70] sm:$0xf] %v5399
        %v5408 = vld [vmem:[%s1664 + $0xc] sm:$0xf]
        %v5409 = vld [vmem:[%s1664 + $0x1c] sm:$0xf]
        %v5410 = vld [vmem:[%s1664 + $0x2c] sm:$0xf]
        %v5411 = vld [vmem:[%s1664 + $0x3c] sm:$0xf]
        %v5412 = vld [vmem:[%s1664 + $0x4c] sm:$0xf]
        %v5413 = vld [vmem:[%s1664 + $0x5c] sm:$0xf]
        %v5414 = vld [vmem:[%s1664 + $0x6c] sm:$0xf]
        %v5415 = vld [vmem:[%s1664 + $0x7c] sm:$0xf]
        %v5416 = vadd.f32 %v5408, %v5022
        %v5417 = vadd.f32 %v5409, %v5030
        %v5418 = vadd.f32 %v5410, %v5038
        %v5419 = vadd.f32 %v5411, %v5046
        %v5420 = vadd.f32 %v5412, %v5054
        %v5421 = vadd.f32 %v5413, %v5062
        %v5422 = vadd.f32 %v5414, %v5070
        %v5423 = vadd.f32 %v5415, %v5078
        %5424 = vst [vmem:[%s1664 + $0xc] sm:$0xf] %v5416
        %5425 = vst [vmem:[%s1664 + $0x1c] sm:$0xf] %v5417
        %5426 = vst [vmem:[%s1664 + $0x2c] sm:$0xf] %v5418
        %5427 = vst [vmem:[%s1664 + $0x3c] sm:$0xf] %v5419
        %5428 = vst [vmem:[%s1664 + $0x4c] sm:$0xf] %v5420
        %5429 = vst [vmem:[%s1664 + $0x5c] sm:$0xf] %v5421
        %5430 = vst [vmem:[%s1664 + $0x6c] sm:$0xf] %v5422
        %5431 = vst [vmem:[%s1664 + $0x7c] sm:$0xf] %v5423
        %v5432 = vld [vmem:[%s1664] sm:$0xf]
        %v5433 = vld [vmem:[%s1664 + $0x10] sm:$0xf]
        %v5434 = vld [vmem:[%s1664 + $0x20] sm:$0xf]
        %v5435 = vld [vmem:[%s1664 + $0x30] sm:$0xf]
        %v5436 = vld [vmem:[%s1664 + $0x40] sm:$0xf]
        %v5437 = vld [vmem:[%s1664 + $0x50] sm:$0xf]
        %v5438 = vld [vmem:[%s1664 + $0x60] sm:$0xf]
        %v5439 = vld [vmem:[%s1664 + $0x70] sm:$0xf]
        %v5448 = vrot.slane %v5121, 4
        %v5449 = vrot.slane %v5129, 4
        %v5450 = vrot.slane %v5137, 4
        %v5451 = vrot.slane %v5145, 4
        %v5452 = vrot.slane %v5153, 4
        %v5453 = vrot.slane %v5161, 4
        %v5454 = vrot.slane %v5169, 4
        %v5455 = vrot.slane %v5177, 4
        %v5464 = vadd.f32 %v5432, %v5448
        %v5465 = vadd.f32 %v5433, %v5449
        %v5466 = vadd.f32 %v5434, %v5450
        %v5467 = vadd.f32 %v5435, %v5451
        %v5468 = vadd.f32 %v5436, %v5452
        %v5469 = vadd.f32 %v5437, %v5453
        %v5470 = vadd.f32 %v5438, %v5454
        %v5471 = vadd.f32 %v5439, %v5455
        %5472 = vst [vmem:[%s1664] sm:$0xf] %v5464
        %5473 = vst [vmem:[%s1664 + $0x10] sm:$0xf] %v5465
        %5474 = vst [vmem:[%s1664 + $0x20] sm:$0xf] %v5466
        %5475 = vst [vmem:[%s1664 + $0x30] sm:$0xf] %v5467
        %5476 = vst [vmem:[%s1664 + $0x40] sm:$0xf] %v5468
        %5477 = vst [vmem:[%s1664 + $0x50] sm:$0xf] %v5469
        %5478 = vst [vmem:[%s1664 + $0x60] sm:$0xf] %v5470
        %5479 = vst [vmem:[%s1664 + $0x70] sm:$0xf] %v5471
        %s5480 = smul.u32 %s406, 16
        %s5481 = scalar_lea.vmem [#allocation2], %s5480
        %v5482 = vld [vmem:[%s5481 + $0xc] sm:$0xf]
        %v5483 = vld [vmem:[%s5481 + $0x1c] sm:$0xf]
        %v5484 = vld [vmem:[%s5481 + $0x2c] sm:$0xf]
        %v5485 = vld [vmem:[%s5481 + $0x3c] sm:$0xf]
        %v5486 = vld [vmem:[%s5481 + $0x4c] sm:$0xf]
        %v5487 = vld [vmem:[%s5481 + $0x5c] sm:$0xf]
        %v5488 = vld [vmem:[%s5481 + $0x6c] sm:$0xf]
        %v5489 = vld [vmem:[%s5481 + $0x7c] sm:$0xf]
        %v5490 = vadd.f32 %v5482, %v5119
        %v5491 = vadd.f32 %v5483, %v5127
        %v5492 = vadd.f32 %v5484, %v5135
        %v5493 = vadd.f32 %v5485, %v5143
        %v5494 = vadd.f32 %v5486, %v5151
        %v5495 = vadd.f32 %v5487, %v5159
        %v5496 = vadd.f32 %v5488, %v5167
        %v5497 = vadd.f32 %v5489, %v5175
        %5498 = vst [vmem:[%s5481 + $0xc] sm:$0xf] %v5490
        %5499 = vst [vmem:[%s5481 + $0x1c] sm:$0xf] %v5491
        %5500 = vst [vmem:[%s5481 + $0x2c] sm:$0xf] %v5492
        %5501 = vst [vmem:[%s5481 + $0x3c] sm:$0xf] %v5493
        %5502 = vst [vmem:[%s5481 + $0x4c] sm:$0xf] %v5494
        %5503 = vst [vmem:[%s5481 + $0x5c] sm:$0xf] %v5495
        %5504 = vst [vmem:[%s5481 + $0x6c] sm:$0xf] %v5496
        %5505 = vst [vmem:[%s5481 + $0x7c] sm:$0xf] %v5497
        %v5506 = vld [vmem:[%s5481] sm:$0xff]
        %v5507 = vld [vmem:[%s5481 + $0x8] sm:$0xff]
        %v5508 = vld [vmem:[%s5481 + $0x10] sm:$0xff]
        %v5509 = vld [vmem:[%s5481 + $0x18] sm:$0xff]
        %v5510 = vld [vmem:[%s5481 + $0x20] sm:$0xff]
        %v5511 = vld [vmem:[%s5481 + $0x28] sm:$0xff]
        %v5512 = vld [vmem:[%s5481 + $0x30] sm:$0xff]
        %v5513 = vld [vmem:[%s5481 + $0x38] sm:$0xff]
        %v5514 = vld [vmem:[%s5481 + $0x40] sm:$0xff]
        %v5515 = vld [vmem:[%s5481 + $0x48] sm:$0xff]
        %v5516 = vld [vmem:[%s5481 + $0x50] sm:$0xff]
        %v5517 = vld [vmem:[%s5481 + $0x58] sm:$0xff]
        %v5518 = vld [vmem:[%s5481 + $0x60] sm:$0xff]
        %v5519 = vld [vmem:[%s5481 + $0x68] sm:$0xff]
        %v5520 = vld [vmem:[%s5481 + $0x70] sm:$0xff]
        %v5521 = vld [vmem:[%s5481 + $0x78] sm:$0xff]
        %v5522 = vadd.f32 %v5506, %v5215
        %v5523 = vadd.f32 %v5507, %v5218
        %v5524 = vadd.f32 %v5508, %v5224
        %v5525 = vadd.f32 %v5509, %v5227
        %v5526 = vadd.f32 %v5510, %v5233
        %v5527 = vadd.f32 %v5511, %v5236
        %v5528 = vadd.f32 %v5512, %v5242
        %v5529 = vadd.f32 %v5513, %v5245
        %v5530 = vadd.f32 %v5514, %v5251
        %v5531 = vadd.f32 %v5515, %v5254
        %v5532 = vadd.f32 %v5516, %v5260
        %v5533 = vadd.f32 %v5517, %v5263
        %v5534 = vadd.f32 %v5518, %v5269
        %v5535 = vadd.f32 %v5519, %v5272
        %v5536 = vadd.f32 %v5520, %v5278
        %v5537 = vadd.f32 %v5521, %v5281
        %5538 = vst [vmem:[%s5481] sm:$0xff] %v5522
        %5539 = vst [vmem:[%s5481 + $0x8] sm:$0xff] %v5523
        %5540 = vst [vmem:[%s5481 + $0x10] sm:$0xff] %v5524
        %5541 = vst [vmem:[%s5481 + $0x18] sm:$0xff] %v5525
        %5542 = vst [vmem:[%s5481 + $0x20] sm:$0xff] %v5526
        %5543 = vst [vmem:[%s5481 + $0x28] sm:$0xff] %v5527
        %5544 = vst [vmem:[%s5481 + $0x30] sm:$0xff] %v5528
        %5545 = vst [vmem:[%s5481 + $0x38] sm:$0xff] %v5529
        %5546 = vst [vmem:[%s5481 + $0x40] sm:$0xff] %v5530
        %5547 = vst [vmem:[%s5481 + $0x48] sm:$0xff] %v5531
        %5548 = vst [vmem:[%s5481 + $0x50] sm:$0xff] %v5532
        %5549 = vst [vmem:[%s5481 + $0x58] sm:$0xff] %v5533
        %5550 = vst [vmem:[%s5481 + $0x60] sm:$0xff] %v5534
        %5551 = vst [vmem:[%s5481 + $0x68] sm:$0xff] %v5535
        %5552 = vst [vmem:[%s5481 + $0x70] sm:$0xff] %v5536
        %5553 = vst [vmem:[%s5481 + $0x78] sm:$0xff] %v5537
        %v5554 = vld [vmem:[%s5481] sm:$0xf]
        %v5555 = vld [vmem:[%s5481 + $0x10] sm:$0xf]
        %v5556 = vld [vmem:[%s5481 + $0x20] sm:$0xf]
        %v5557 = vld [vmem:[%s5481 + $0x30] sm:$0xf]
        %v5558 = vld [vmem:[%s5481 + $0x40] sm:$0xf]
        %v5559 = vld [vmem:[%s5481 + $0x50] sm:$0xf]
        %v5560 = vld [vmem:[%s5481 + $0x60] sm:$0xf]
        %v5561 = vld [vmem:[%s5481 + $0x70] sm:$0xf]
        %v5570 = vrot.slane %v5220, 4
        %v5571 = vrot.slane %v5229, 4
        %v5572 = vrot.slane %v5238, 4
        %v5573 = vrot.slane %v5247, 4
        %v5574 = vrot.slane %v5256, 4
        %v5575 = vrot.slane %v5265, 4
        %v5576 = vrot.slane %v5274, 4
        %v5577 = vrot.slane %v5283, 4
        %v5586 = vadd.f32 %v5554, %v5570
        %v5587 = vadd.f32 %v5555, %v5571
        %v5588 = vadd.f32 %v5556, %v5572
        %v5589 = vadd.f32 %v5557, %v5573
        %v5590 = vadd.f32 %v5558, %v5574
        %v5591 = vadd.f32 %v5559, %v5575
        %v5592 = vadd.f32 %v5560, %v5576
        %v5593 = vadd.f32 %v5561, %v5577
        %5594 = vst [vmem:[%s5481] sm:$0xf] %v5586
        %5595 = vst [vmem:[%s5481 + $0x10] sm:$0xf] %v5587
        %5596 = vst [vmem:[%s5481 + $0x20] sm:$0xf] %v5588
        %5597 = vst [vmem:[%s5481 + $0x30] sm:$0xf] %v5589
        %5598 = vst [vmem:[%s5481 + $0x40] sm:$0xf] %v5590
        %5599 = vst [vmem:[%s5481 + $0x50] sm:$0xf] %v5591
        %5600 = vst [vmem:[%s5481 + $0x60] sm:$0xf] %v5592
        %5601 = vst [vmem:[%s5481 + $0x70] sm:$0xf] %v5593
        %p5602 = scmp.eq.s32.totalorder %s20, 1
        %p5603 = scmp.eq.s32.totalorder %s21, 1
        %p5604 = pnand %p5602, %p5603
        %p5605 = pneg %p5604
        // Predicated region
        $region78: #{classifier_module_forward.1} parent=68 // pred_check
          _
        $region79: #{classifier_module_forward.1} parent=68 // pred_check_branch
          %5607 = sbr.rel (%p5604) target = $region81
        $region80: #{classifier_module_forward.1} parent=68 // pred_region
          %s5608 = scalar_lea.vmem [#allocation2], 192
          %v5609 = vld [vmem:[%s5608] sm:$0xff]
          %v5610 = vld [vmem:[%s5608 + $0x8] sm:$0xff]
          %v5611 = vld [vmem:[%s5608 + $0x10] sm:$0xff]
          %v5612 = vld [vmem:[%s5608 + $0x18] sm:$0xff]
          %v5613 = vld [vmem:[%s5608 + $0x20] sm:$0xff]
          %v5614 = vld [vmem:[%s5608 + $0x28] sm:$0xff]
          %v5615 = vld [vmem:[%s5608 + $0x30] sm:$0xff]
          %v5616 = vld [vmem:[%s5608 + $0x38] sm:$0xff]
          %v5617 = vld [vmem:[%s5608 + $0x40] sm:$0xff]
          %v5618 = vld [vmem:[%s5608 + $0x48] sm:$0xff]
          %v5619 = vld [vmem:[%s5608 + $0x50] sm:$0xff]
          %v5620 = vld [vmem:[%s5608 + $0x58] sm:$0xff]
          %v5621 = vld [vmem:[%s5608 + $0x60] sm:$0xff]
          %v5622 = vld [vmem:[%s5608 + $0x68] sm:$0xff]
          %v5623 = vld [vmem:[%s5608 + $0x70] sm:$0xff]
          %v5624 = vld [vmem:[%s5608 + $0x78] sm:$0xff]
          %v5625 = vld [vmem:[%s5608 + $0x80] sm:$0xff]
          %v5626 = vld [vmem:[%s5608 + $0x88] sm:$0xff]
          %v5627 = vld [vmem:[%s5608 + $0x90] sm:$0xff]
          %v5628 = vld [vmem:[%s5608 + $0x98] sm:$0xff]
          %v5629 = vld [vmem:[%s5608 + $0xa0] sm:$0xff]
          %v5630 = vld [vmem:[%s5608 + $0xa8] sm:$0xff]
          %v5631 = vld [vmem:[%s5608 + $0xb0] sm:$0xff]
          %v5632 = vld [vmem:[%s5608 + $0xb8] sm:$0xff]
          %v5633 = vld [vmem:[%s5608 + $0xc0] sm:$0xff]
          %v5634 = vld [vmem:[%s5608 + $0xc8] sm:$0xff]
          %v5635 = vld [vmem:[%s5608 + $0xd0] sm:$0xff]
          %v5636 = vld [vmem:[%s5608 + $0xd8] sm:$0xff]
          %v5637 = vld [vmem:[%s5608 + $0xe0] sm:$0xff]
          %v5638 = vld [vmem:[%s5608 + $0xe8] sm:$0xff]
          %v5639 = vld [vmem:[%s5608 + $0xf0] sm:$0xff]
          %v5640 = vld [vmem:[%s5608 + $0xf8] sm:$0xff]
          %v5641 = vld [vmem:[%s2] sm:$0x1]
          %v5643 = vlaneseq
          %v5644 = vshrl.u32 %v5643, 7
          %v5645 = vsub.s32 0, %v5644
          %v5646 = vrot.slane %v5641, %v5645
          %v5648 = vadd.f32 %v5609, %v5646
          %v5649 = vadd.f32 %v5610, %v5646
          %v5650 = vadd.f32 %v5611, %v5646
          %v5651 = vadd.f32 %v5612, %v5646
          %v5652 = vadd.f32 %v5613, %v5646
          %v5653 = vadd.f32 %v5614, %v5646
          %v5654 = vadd.f32 %v5615, %v5646
          %v5655 = vadd.f32 %v5616, %v5646
          %v5656 = vadd.f32 %v5617, %v5646
          %v5657 = vadd.f32 %v5618, %v5646
          %v5658 = vadd.f32 %v5619, %v5646
          %v5659 = vadd.f32 %v5620, %v5646
          %v5660 = vadd.f32 %v5621, %v5646
          %v5661 = vadd.f32 %v5622, %v5646
          %v5662 = vadd.f32 %v5623, %v5646
          %v5663 = vadd.f32 %v5624, %v5646
          %v5664 = vadd.f32 %v5625, %v5646
          %v5665 = vadd.f32 %v5626, %v5646
          %v5666 = vadd.f32 %v5627, %v5646
          %v5667 = vadd.f32 %v5628, %v5646
          %v5668 = vadd.f32 %v5629, %v5646
          %v5669 = vadd.f32 %v5630, %v5646
          %v5670 = vadd.f32 %v5631, %v5646
          %v5671 = vadd.f32 %v5632, %v5646
          %v5672 = vadd.f32 %v5633, %v5646
          %v5673 = vadd.f32 %v5634, %v5646
          %v5674 = vadd.f32 %v5635, %v5646
          %v5675 = vadd.f32 %v5636, %v5646
          %v5676 = vadd.f32 %v5637, %v5646
          %v5677 = vadd.f32 %v5638, %v5646
          %v5678 = vadd.f32 %v5639, %v5646
          %v5679 = vadd.f32 %v5640, %v5646
          %v5680 = vpack.c.bf16 %v5649, %v5648
          %v5681 = vpack.c.bf16 %v5651, %v5650
          %v5682 = vpack.c.bf16 %v5653, %v5652
          %v5683 = vpack.c.bf16 %v5655, %v5654
          %v5684 = vpack.c.bf16 %v5657, %v5656
          %v5685 = vpack.c.bf16 %v5659, %v5658
          %v5686 = vpack.c.bf16 %v5661, %v5660
          %v5687 = vpack.c.bf16 %v5663, %v5662
          %v5688 = vpack.c.bf16 %v5665, %v5664
          %v5689 = vpack.c.bf16 %v5667, %v5666
          %v5690 = vpack.c.bf16 %v5669, %v5668
          %v5691 = vpack.c.bf16 %v5671, %v5670
          %v5692 = vpack.c.bf16 %v5673, %v5672
          %v5693 = vpack.c.bf16 %v5675, %v5674
          %v5694 = vpack.c.bf16 %v5677, %v5676
          %v5695 = vpack.c.bf16 %v5679, %v5678
          %v5712 = vunpack.c.l.b16 %v5680
          %v5713 = vunpack.c.h.b16 %v5680
          %v5714 = vunpack.c.l.b16 %v5681
          %v5715 = vunpack.c.h.b16 %v5681
          %v5716 = vunpack.c.l.b16 %v5682
          %v5717 = vunpack.c.h.b16 %v5682
          %v5718 = vunpack.c.l.b16 %v5683
          %v5719 = vunpack.c.h.b16 %v5683
          %v5720 = vunpack.c.l.b16 %v5684
          %v5721 = vunpack.c.h.b16 %v5684
          %v5722 = vunpack.c.l.b16 %v5685
          %v5723 = vunpack.c.h.b16 %v5685
          %v5724 = vunpack.c.l.b16 %v5686
          %v5725 = vunpack.c.h.b16 %v5686
          %v5726 = vunpack.c.l.b16 %v5687
          %v5727 = vunpack.c.h.b16 %v5687
          %v5728 = vunpack.c.l.b16 %v5688
          %v5729 = vunpack.c.h.b16 %v5688
          %v5730 = vunpack.c.l.b16 %v5689
          %v5731 = vunpack.c.h.b16 %v5689
          %v5732 = vunpack.c.l.b16 %v5690
          %v5733 = vunpack.c.h.b16 %v5690
          %v5734 = vunpack.c.l.b16 %v5691
          %v5735 = vunpack.c.h.b16 %v5691
          %v5736 = vunpack.c.l.b16 %v5692
          %v5737 = vunpack.c.h.b16 %v5692
          %v5738 = vunpack.c.l.b16 %v5693
          %v5739 = vunpack.c.h.b16 %v5693
          %v5740 = vunpack.c.l.b16 %v5694
          %v5741 = vunpack.c.h.b16 %v5694
          %v5742 = vunpack.c.l.b16 %v5695
          %v5743 = vunpack.c.h.b16 %v5695
          %v5744 = vpack.c.b16 %v5712, %v5712
          %v5745 = vpack.c.b16 %v5713, %v5713
          %v5746 = vpack.c.b16 %v5714, %v5714
          %v5747 = vpack.c.b16 %v5715, %v5715
          %v5748 = vpack.c.b16 %v5716, %v5716
          %v5749 = vpack.c.b16 %v5717, %v5717
          %v5750 = vpack.c.b16 %v5718, %v5718
          %v5751 = vpack.c.b16 %v5719, %v5719
          %v5752 = vpack.c.b16 %v5720, %v5720
          %v5753 = vpack.c.b16 %v5721, %v5721
          %v5754 = vpack.c.b16 %v5722, %v5722
          %v5755 = vpack.c.b16 %v5723, %v5723
          %v5756 = vpack.c.b16 %v5724, %v5724
          %v5757 = vpack.c.b16 %v5725, %v5725
          %v5758 = vpack.c.b16 %v5726, %v5726
          %v5759 = vpack.c.b16 %v5727, %v5727
          %v5760 = vpack.c.b16 %v5728, %v5728
          %v5761 = vpack.c.b16 %v5729, %v5729
          %v5762 = vpack.c.b16 %v5730, %v5730
          %v5763 = vpack.c.b16 %v5731, %v5731
          %v5764 = vpack.c.b16 %v5732, %v5732
          %v5765 = vpack.c.b16 %v5733, %v5733
          %v5766 = vpack.c.b16 %v5734, %v5734
          %v5767 = vpack.c.b16 %v5735, %v5735
          %v5768 = vpack.c.b16 %v5736, %v5736
          %v5769 = vpack.c.b16 %v5737, %v5737
          %v5770 = vpack.c.b16 %v5738, %v5738
          %v5771 = vpack.c.b16 %v5739, %v5739
          %v5772 = vpack.c.b16 %v5740, %v5740
          %v5773 = vpack.c.b16 %v5741, %v5741
          %v5774 = vpack.c.b16 %v5742, %v5742
          %v5775 = vpack.c.b16 %v5743, %v5743
          %5808 = vst [vmem:[%s302] sm:$0xf] %v5744
          %5809 = vst [vmem:[%s302 + $0x4] sm:$0xf] %v5745
          %5810 = vst [vmem:[%s302 + $0x8] sm:$0xf] %v5746
          %5811 = vst [vmem:[%s302 + $0xc] sm:$0xf] %v5747
          %5812 = vst [vmem:[%s302 + $0x10] sm:$0xf] %v5748
          %5813 = vst [vmem:[%s302 + $0x14] sm:$0xf] %v5749
          %5814 = vst [vmem:[%s302 + $0x18] sm:$0xf] %v5750
          %5815 = vst [vmem:[%s302 + $0x1c] sm:$0xf] %v5751
          %5816 = vst [vmem:[%s302 + $0x20] sm:$0xf] %v5752
          %5817 = vst [vmem:[%s302 + $0x24] sm:$0xf] %v5753
          %5818 = vst [vmem:[%s302 + $0x28] sm:$0xf] %v5754
          %5819 = vst [vmem:[%s302 + $0x2c] sm:$0xf] %v5755
          %5820 = vst [vmem:[%s302 + $0x30] sm:$0xf] %v5756
          %5821 = vst [vmem:[%s302 + $0x34] sm:$0xf] %v5757
          %5822 = vst [vmem:[%s302 + $0x38] sm:$0xf] %v5758
          %5823 = vst [vmem:[%s302 + $0x3c] sm:$0xf] %v5759
          %5824 = vst [vmem:[%s302 + $0x40] sm:$0xf] %v5760
          %5825 = vst [vmem:[%s302 + $0x44] sm:$0xf] %v5761
          %5826 = vst [vmem:[%s302 + $0x48] sm:$0xf] %v5762
          %5827 = vst [vmem:[%s302 + $0x4c] sm:$0xf] %v5763
          %5828 = vst [vmem:[%s302 + $0x50] sm:$0xf] %v5764
          %5829 = vst [vmem:[%s302 + $0x54] sm:$0xf] %v5765
          %5830 = vst [vmem:[%s302 + $0x58] sm:$0xf] %v5766
          %5831 = vst [vmem:[%s302 + $0x5c] sm:$0xf] %v5767
          %5832 = vst [vmem:[%s302 + $0x60] sm:$0xf] %v5768
          %5833 = vst [vmem:[%s302 + $0x64] sm:$0xf] %v5769
          %5834 = vst [vmem:[%s302 + $0x68] sm:$0xf] %v5770
          %5835 = vst [vmem:[%s302 + $0x6c] sm:$0xf] %v5771
          %5836 = vst [vmem:[%s302 + $0x70] sm:$0xf] %v5772
          %5837 = vst [vmem:[%s302 + $0x74] sm:$0xf] %v5773
          %5838 = vst [vmem:[%s302 + $0x78] sm:$0xf] %v5774
          %5839 = vst [vmem:[%s302 + $0x7c] sm:$0xf] %v5775
        $region81: #{classifier_module_forward.1} parent=68 // pred_fallthru
          _
        %p5840 = scmp.lt.s32.totalorder %s19, 1
        %s5841 = scalar_select %p5840, %s19, 1
        %s5842 = smul.addr %s5841, 32
        %s5843 = smul.addr %s5842, 4
        %s5844 = scalar_lea.vmem %s3, %s5843
        // Predicated region
        $region82: #{classifier_module_forward.1} parent=68 // pred_check
          %p5845 = pneg %p123
        $region83: #{classifier_module_forward.1} parent=68 // pred_check_branch
          %5847 = sbr.rel (%p5845) target = $region85
        $region84: #{classifier_module_forward.1} parent=68 // pred_region
          _
        $region85: #{classifier_module_forward.1} parent=68 // pred_fallthru
          _
      $region69: #{classifier_module_forward.1} parent=5 // pred_fallthru
        _
      %p5848 = scmp.le.s32.totalorder 2, %s9
      // Predicated region
      $region86: #{classifier_module_forward.1} parent=5 // pred_check
        %p5849 = pneg %p5848
      $region87: #{classifier_module_forward.1} parent=5 // pred_check_branch
        %5851 = sbr.rel (%p5849) target = $region89
      $region88: #{classifier_module_forward.1} parent=5 // pred_region
        %s5852 = ssub.s32 %s9, 2
        // Predicated region
        $region90: #{classifier_module_forward.1} parent=88 // pred_check
          %p5853 = pneg %p129
        $region91: #{classifier_module_forward.1} parent=88 // pred_check_branch
          %5855 = sbr.rel (%p5853) target = $region93
        $region92: #{classifier_module_forward.1} parent=88 // pred_region
          %p5856 = scmp.lt.s32.totalorder %s22, 1
          %s5857 = scalar_select %p5856, %s22, 1
          %s5858 = smul.addr %s5857, 32
          %s5859 = smul.addr %s5858, 4
          %s5860 = scalar_lea.vmem %s3, %s5859
        $region93: #{classifier_module_forward.1} parent=88 // pred_fallthru
          _
      $region89: #{classifier_module_forward.1} parent=5 // pred_fallthru
        _
    $region6: #{classifier_module_forward.1} parent=1 // loop_footer
      %s13 = sadd.s32 1, %s9
    $region7: #{classifier_module_forward.1} parent=1 // loop_footer_branch
      %8 = sbr.rel target = $region3
    $region8: #{classifier_module_forward.1} parent=1 // loop_exit
      _

</llo_original>
